<compile_context>
chip_gen: v5e
topology: v5e:2x2
jax: 0.10.0
libtpu: 0.0.40
codegen_flags: <defaults>
</compile_context>

<pallas_src>
import functools

import jax
import jax.numpy as jnp
from jax import lax
from jax.experimental import pallas as pl
from jax.experimental.pallas import tpu as pltpu


_SQRT_2 = 1.4142135623730951
_SQRT_2_OVER_PI = 0.7978845608028654


def _gelu(x, approximate):
    if approximate:
        # tanh form -> transcendental on the EUP (otherwise-idle bundle slot),
        # only ~6-8 VPU ops per element remain.
        return 0.5 * x * (1.0 + jnp.tanh(_SQRT_2_OVER_PI * (x + 0.044715 * x * x * x)))
    # exact erf formulation (torch.nn.GELU() default) -- opt-in precision mode.
    return 0.5 * x * (1.0 + lax.erf(x * (1.0 / _SQRT_2)))


def _mlp_kernel(num_layers, mxu_dtype, elementwise_dtype, approximate_gelu, *refs):
    # refs = (x_ref, w0, b0, w1, b1, ..., w_{L-1}, b_{L-1}, out_ref)
    # x_ref is the natural (batch_tile, in_feat) tile; everything downstream is
    # (features, batch_tile) so batch lives on lanes.
    x_ref = refs[0]
    out_ref = refs[-1]
    param_refs = refs[1:-1]

    # --- Layer 0: fold the input transpose into the kernel (XLU slot). ------
    x_bf = x_ref[...].astype(mxu_dtype)          # no-op cast if x is already bf16
    w0 = param_refs[0][...]                      # (out0, in_feat) mxu_dtype
    b0 = param_refs[1][...]                      # (out0, 1)       f32
    h = jnp.dot(w0, x_bf.T, preferred_element_type=jnp.float32) + b0   # (out0, tile_b)
    if num_layers > 1:
        h = _gelu(h.astype(elementwise_dtype), approximate_gelu)
        # nn.Dropout -> identity at inference.

    # --- Remaining layers. ---------------------------------------------------
    for l in range(1, num_layers):
        w = param_refs[2 * l][...]               # (out_l, in_l) mxu_dtype
        b = param_refs[2 * l + 1][...]           # (out_l, 1)    f32
        if w.shape[0] == 1:
            # 1-wide head: VPU multiply + sublane (XLU) reduce instead of an
            # M=1 MXU matmul.  Quantize h to bf16 first so numerics match the
            # MXU bf16 x bf16 -> f32 path of the reference.
            h_q = h.astype(mxu_dtype).astype(jnp.float32)
            h = jnp.sum(w.astype(jnp.float32).T * h_q, axis=0, keepdims=True) + b
        else:
            h = jnp.dot(w, h.astype(mxu_dtype),
                        preferred_element_type=jnp.float32) + b
        if l < num_layers - 1:
            h = _gelu(h.astype(elementwise_dtype), approximate_gelu)
            # nn.Dropout -> identity at inference.

    # Output activation: Sigmoid.  (1, tile_b) block => lane-dense store.
    out_ref[...] = jax.nn.sigmoid(h.astype(jnp.float32)).astype(out_ref.dtype)


def _round_up(n, m):
    return ((n + m - 1) // m) * m


def general_nn_forward(x, weights, biases, *, batch_tile=2048,
                       mxu_dtype=jnp.bfloat16,
                       elementwise_dtype=jnp.float32,
                       approximate_gelu=True):
    """Fused forward pass of GeneralNN.

    x:        (B, input_features) float32 (bf16 also accepted, no extra cast pass)
    weights:  list of (out_l, in_l) float32 (PyTorch nn.Linear orientation)
    biases:   list of (out_l, 1)   float32
    Returns:  (B, out_feat) float32

    On v6e/v7x, pass elementwise_dtype=jnp.bfloat16 to halve VALU work in the
    GELU path (keep f32 on v5e: no bf16 VPU/EUP there).
    """
    num_layers = len(weights)
    B, in_feat = x.shape
    out_feat = weights[-1].shape[0]

    # Clamp the tile so tiny batches don't pad to a full 2048-row tile; keep it
    # a multiple of 128 (lane-dense output, aligned batch sublane dim).
    batch_tile = max(128, min(batch_tile, _round_up(B, 128)))
    B_pad = _round_up(B, batch_tile)
    if B_pad != B:                              # pad only when actually ragged
        x = jnp.pad(x, ((0, B_pad - B), (0, 0)))

    grid = (B_pad // batch_tile,)

    # x in its natural (batch, features) layout; no wrapper transpose pass.
    in_specs = [pl.BlockSpec((batch_tile, in_feat), lambda i: (i, 0))]
    params = []
    for w, b in zip(weights, biases):
        w_c = w.astype(mxu_dtype)   # halve weight HBM traffic / VMEM footprint
        in_specs.append(pl.BlockSpec(w_c.shape, lambda i: (0, 0)))  # resident weight
        in_specs.append(pl.BlockSpec(b.shape, lambda i: (0, 0)))    # resident bias
        params += [w_c, b]

    out_spec = pl.BlockSpec((out_feat, batch_tile), lambda i: (0, i))

    kernel = functools.partial(_mlp_kernel, num_layers, mxu_dtype,
                               elementwise_dtype, approximate_gelu)

    # Advisory cost estimate so XLA schedules the custom call sensibly.
    flops = 2 * B_pad * sum(int(w.shape[0]) * int(w.shape[1]) for w in weights)
    transcendentals = B_pad * (sum(int(w.shape[0]) for w in weights[:-1]) + out_feat)
    w_itemsize = jnp.dtype(mxu_dtype).itemsize
    bytes_accessed = (B_pad * in_feat * jnp.dtype(x.dtype).itemsize
                      + sum(w.size * w_itemsize for w in weights)
                      + sum(b.size * 4 for b in biases)
                      + B_pad * out_feat * 4)

    out_t = pl.pallas_call(
        kernel,
        out_shape=jax.ShapeDtypeStruct((out_feat, B_pad), jnp.float32),
        grid_spec=pl.GridSpec(grid=grid, in_specs=in_specs, out_specs=out_spec),
        compiler_params=pltpu.CompilerParams(
            dimension_semantics=("parallel",)),
        cost_estimate=pl.CostEstimate(
            flops=int(flops),
            transcendentals=int(transcendentals),
            bytes_accessed=int(bytes_accessed)),
    )(x, *params)

    # out_feat == 1 for the classifier head, so this transpose is effectively a
    # reshape (no real data movement).
    return out_t[:, :B].T


def init_general_nn_params(key, input_features, layer_inputs):
    """Deterministic init mimicking torch.nn.Linear default (uniform +/- 1/sqrt(fan_in)).

    Weights are stored PyTorch-style (out_features, in_features); biases (out, 1).
    """
    dims = [input_features] + list(layer_inputs)
    weights, biases = [], []
    for fan_in, fan_out in zip(dims[:-1], dims[1:]):
        key, kw, kb = jax.random.split(key, 3)
        bound = 1.0 / (float(fan_in) ** 0.5)
        w = jax.random.uniform(kw, (fan_out, fan_in), jnp.float32, -bound, bound)
        b = jax.random.uniform(kb, (fan_out, 1), jnp.float32, -bound, bound)
        weights.append(w)
        biases.append(b)
    return weights, biases


def reference_forward(x, weights, biases, *, mxu_dtype=jnp.float32,
                      elementwise_dtype=jnp.float32, approximate_gelu=True):
    """Pure-JAX reference.  mxu_dtype=bf16 mirrors the kernel's MXU precision."""
    h = x
    for l, (w, b) in enumerate(zip(weights, biases)):
        h = jnp.dot(h.astype(mxu_dtype), w.T.astype(mxu_dtype),
                    preferred_element_type=jnp.float32) + b[:, 0]
        if l < len(weights) - 1:
            h = _gelu(h.astype(elementwise_dtype), approximate_gelu)
    return jax.nn.sigmoid(h.astype(jnp.float32))


if __name__ == "__main__":
    # GeneralNN(inputFeatures=32, layerInputs=[64, 32, 1], dropOutRate=0.1)
    input_features = 32
    layer_inputs = [64, 32, 1]
    batch = 4096        # 2 grid steps of 2048 -> both v7x TensorCores get work
    batch_tile = 2048

    key = jax.random.PRNGKey(0)
    key, kx = jax.random.split(key)
    x = jax.random.normal(kx, (batch, input_features), jnp.float32)

    weights, biases = init_general_nn_params(key, input_features, layer_inputs)

    out = general_nn_forward(x, weights, biases, batch_tile=batch_tile)
    out = jax.block_until_ready(out)
    assert out.shape == (batch, layer_inputs[-1])

    # Check against a precision-matched (bf16-MXU, tanh-GELU) reference ...
    ref_bf16 = reference_forward(x, weights, biases, mxu_dtype=jnp.bfloat16,
                                 approximate_gelu=True)
    assert jnp.allclose(out, ref_bf16, atol=1e-3, rtol=1e-3), "mismatch vs bf16 reference"

    # ... and loosely against the full-f32 / exact-erf torch semantics
    # (intentional bf16 + tanh-GELU tradeoffs).
    ref_f32 = reference_forward(x, weights, biases, mxu_dtype=jnp.float32,
                                approximate_gelu=False)
    assert jnp.allclose(out, ref_f32, atol=2e-2, rtol=2e-2), "mismatch vs f32 reference"

    # Ragged batch (not a multiple of batch_tile): tile clamps to 128 and only
    # the tail is padded — no 2048-row pad for tiny batches.
    out_small = general_nn_forward(x[:100], weights, biases, batch_tile=batch_tile)
    out_small = jax.block_until_ready(out_small)
    assert out_small.shape == (100, layer_inputs[-1])
    assert jnp.allclose(out_small, out[:100], atol=1e-5), "ragged-batch mismatch"

    print("KERNEL_OK")
</pallas_src>

<mosaic_0001>
module attributes {stable_mosaic.version = 11 : i64} {
  func.func @_mlp_kernel(%arg0: i32, %arg1: memref<2048x32xf32, #tpu.memory_space<vmem>>, %arg2: memref<64x32xbf16, #tpu.memory_space<vmem>>, %arg3: memref<64x1xf32, #tpu.memory_space<vmem>>, %arg4: memref<32x64xbf16, #tpu.memory_space<vmem>>, %arg5: memref<32x1xf32, #tpu.memory_space<vmem>>, %arg6: memref<1x32xbf16, #tpu.memory_space<vmem>>, %arg7: memref<1x1xf32, #tpu.memory_space<vmem>>, %arg8: memref<1x2048xf32, #tpu.memory_space<vmem>>) attributes {dimension_semantics = [#tpu.dimension_semantics<parallel>], iteration_bounds = array<i64: 2>, scalar_prefetch = 0 : i64, scratch_operands = 0 : i64, tpu.core_type = #tpu.core_type<tc>, window_params = [{transform_indices = @transform_0, window_bounds = array<i64: 2048, 32>}, {pipeline_mode = #tpu.pipeline_mode<synchronous>, transform_indices = @transform_1, window_bounds = array<i64: 64, 32>}, {pipeline_mode = #tpu.pipeline_mode<synchronous>, transform_indices = @transform_2, window_bounds = array<i64: 64, 1>}, {pipeline_mode = #tpu.pipeline_mode<synchronous>, transform_indices = @transform_3, window_bounds = array<i64: 32, 64>}, {pipeline_mode = #tpu.pipeline_mode<synchronous>, transform_indices = @transform_4, window_bounds = array<i64: 32, 1>}, {pipeline_mode = #tpu.pipeline_mode<synchronous>, transform_indices = @transform_5, window_bounds = array<i64: 1, 32>}, {pipeline_mode = #tpu.pipeline_mode<synchronous>, transform_indices = @transform_6, window_bounds = array<i64: 1, 1>}, {transform_indices = @transform_7, window_bounds = array<i64: 1, 2048>}]} {
    %c0 = arith.constant 0 : index
    %c0_0 = arith.constant 0 : index
    %0 = vector.load %arg1[%c0, %c0_0] : memref<2048x32xf32, #tpu.memory_space<vmem>>, vector<2048x32xf32>
    %1 = arith.truncf %0 : vector<2048x32xf32> to vector<2048x32xbf16>
    %c0_1 = arith.constant 0 : index
    %c0_2 = arith.constant 0 : index
    %2 = vector.load %arg2[%c0_1, %c0_2] : memref<64x32xbf16, #tpu.memory_space<vmem>>, vector<64x32xbf16>
    %c0_3 = arith.constant 0 : index
    %c0_4 = arith.constant 0 : index
    %3 = vector.load %arg3[%c0_3, %c0_4] : memref<64x1xf32, #tpu.memory_space<vmem>>, vector<64x1xf32>
    %4 = tpu.transpose %1, [1, 0] : vector<2048x32xbf16> -> vector<32x2048xbf16>
    %cst = arith.constant dense<0.000000e+00> : vector<64x2048xf32>
    %5 = tpu.matmul %2, %4, %cst {dimension_numbers = #tpu.dot_dimension_numbers<[1], [0], [0], [1], [0, 0, 1, 1], [], []>} : vector<64x32xbf16>, vector<32x2048xbf16>, vector<64x2048xf32> -> vector<64x2048xf32>
    %6 = vector.broadcast %3 : vector<64x1xf32> to vector<64x2048xf32>
    %7 = arith.addf %5, %6 : vector<64x2048xf32>
    %cst_5 = arith.constant 5.000000e-01 : f32
    %8 = vector.broadcast %cst_5 : f32 to vector<64x2048xf32>
    %9 = arith.mulf %8, %7 : vector<64x2048xf32>
    %cst_6 = arith.constant 4.471500e-02 : f32
    %10 = vector.broadcast %cst_6 : f32 to vector<64x2048xf32>
    %11 = arith.mulf %10, %7 : vector<64x2048xf32>
    %12 = arith.mulf %11, %7 : vector<64x2048xf32>
    %13 = arith.mulf %12, %7 : vector<64x2048xf32>
    %14 = arith.addf %7, %13 : vector<64x2048xf32>
    %cst_7 = arith.constant 0.797884583 : f32
    %15 = vector.broadcast %cst_7 : f32 to vector<64x2048xf32>
    %16 = arith.mulf %15, %14 : vector<64x2048xf32>
    %17 = math.tanh %16 : vector<64x2048xf32>
    %cst_8 = arith.constant 1.000000e+00 : f32
    %18 = vector.broadcast %cst_8 : f32 to vector<64x2048xf32>
    %19 = arith.addf %18, %17 : vector<64x2048xf32>
    %20 = arith.mulf %9, %19 : vector<64x2048xf32>
    %c0_9 = arith.constant 0 : index
    %c0_10 = arith.constant 0 : index
    %21 = vector.load %arg4[%c0_9, %c0_10] : memref<32x64xbf16, #tpu.memory_space<vmem>>, vector<32x64xbf16>
    %c0_11 = arith.constant 0 : index
    %c0_12 = arith.constant 0 : index
    %22 = vector.load %arg5[%c0_11, %c0_12] : memref<32x1xf32, #tpu.memory_space<vmem>>, vector<32x1xf32>
    %23 = arith.truncf %20 : vector<64x2048xf32> to vector<64x2048xbf16>
    %cst_13 = arith.constant dense<0.000000e+00> : vector<32x2048xf32>
    %24 = tpu.matmul %21, %23, %cst_13 {dimension_numbers = #tpu.dot_dimension_numbers<[1], [0], [0], [1], [0, 0, 1, 1], [], []>} : vector<32x64xbf16>, vector<64x2048xbf16>, vector<32x2048xf32> -> vector<32x2048xf32>
    %25 = vector.broadcast %22 : vector<32x1xf32> to vector<32x2048xf32>
    %26 = arith.addf %24, %25 : vector<32x2048xf32>
    %cst_14 = arith.constant 5.000000e-01 : f32
    %27 = vector.broadcast %cst_14 : f32 to vector<32x2048xf32>
    %28 = arith.mulf %27, %26 : vector<32x2048xf32>
    %cst_15 = arith.constant 4.471500e-02 : f32
    %29 = vector.broadcast %cst_15 : f32 to vector<32x2048xf32>
    %30 = arith.mulf %29, %26 : vector<32x2048xf32>
    %31 = arith.mulf %30, %26 : vector<32x2048xf32>
    %32 = arith.mulf %31, %26 : vector<32x2048xf32>
    %33 = arith.addf %26, %32 : vector<32x2048xf32>
    %cst_16 = arith.constant 0.797884583 : f32
    %34 = vector.broadcast %cst_16 : f32 to vector<32x2048xf32>
    %35 = arith.mulf %34, %33 : vector<32x2048xf32>
    %36 = math.tanh %35 : vector<32x2048xf32>
    %cst_17 = arith.constant 1.000000e+00 : f32
    %37 = vector.broadcast %cst_17 : f32 to vector<32x2048xf32>
    %38 = arith.addf %37, %36 : vector<32x2048xf32>
    %39 = arith.mulf %28, %38 : vector<32x2048xf32>
    %c0_18 = arith.constant 0 : index
    %c0_19 = arith.constant 0 : index
    %40 = vector.load %arg6[%c0_18, %c0_19] : memref<1x32xbf16, #tpu.memory_space<vmem>>, vector<1x32xbf16>
    %c0_20 = arith.constant 0 : index
    %c0_21 = arith.constant 0 : index
    %41 = vector.load %arg7[%c0_20, %c0_21] : memref<1x1xf32, #tpu.memory_space<vmem>>, vector<1x1xf32>
    %42 = arith.truncf %39 : vector<32x2048xf32> to vector<32x2048xbf16>
    %43 = arith.extf %42 : vector<32x2048xbf16> to vector<32x2048xf32>
    %44 = arith.extf %40 : vector<1x32xbf16> to vector<1x32xf32>
    %45 = tpu.transpose %44, [1, 0] : vector<1x32xf32> -> vector<32x1xf32>
    %46 = vector.broadcast %45 : vector<32x1xf32> to vector<32x2048xf32>
    %47 = arith.mulf %46, %43 : vector<32x2048xf32>
    %cst_22 = arith.constant dense<0.000000e+00> : vector<2048xf32>
    %48 = vector.multi_reduction <add>, %47, %cst_22 [0] : vector<32x2048xf32> to vector<2048xf32>
    %49 = vector.shape_cast %48 : vector<2048xf32> to vector<1x2048xf32>
    %50 = vector.broadcast %41 : vector<1x1xf32> to vector<1x2048xf32>
    %51 = arith.addf %49, %50 : vector<1x2048xf32>
    %52 = arith.negf %51 : vector<1x2048xf32>
    %53 = math.exp %52 : vector<1x2048xf32>
    %cst_23 = arith.constant 1.000000e+00 : f32
    %54 = vector.broadcast %cst_23 : f32 to vector<1x2048xf32>
    %55 = arith.addf %54, %53 : vector<1x2048xf32>
    %56 = arith.divf %54, %55 : vector<1x2048xf32>
    %c0_24 = arith.constant 0 : index
    %c0_25 = arith.constant 0 : index
    %57 = vector.load %arg8[%c0_24, %c0_25] : memref<1x2048xf32, #tpu.memory_space<vmem>>, vector<1x2048xf32>
    tpu.vector_store %arg8[%c0_24, %c0_25], %56 {strides = array<i32>} : memref<1x2048xf32, #tpu.memory_space<vmem>>, vector<1x2048xf32>,
    return
  }
  func.func @transform_0(%arg0: i32) -> (i32, i32) {
    %c0_i32 = arith.constant 0 : i32
    %c0_i32_0 = arith.constant 0 : i32
    return %arg0, %c0_i32 : i32, i32
  }
  func.func @transform_1(%arg0: i32) -> (i32, i32) {
    %c0_i32 = arith.constant 0 : i32
    %c0_i32_0 = arith.constant 0 : i32
    %c0_i32_1 = arith.constant 0 : i32
    return %c0_i32, %c0_i32_0 : i32, i32
  }
  func.func @transform_2(%arg0: i32) -> (i32, i32) {
    %c0_i32 = arith.constant 0 : i32
    %c0_i32_0 = arith.constant 0 : i32
    %c0_i32_1 = arith.constant 0 : i32
    return %c0_i32, %c0_i32_0 : i32, i32
  }
  func.func @transform_3(%arg0: i32) -> (i32, i32) {
    %c0_i32 = arith.constant 0 : i32
    %c0_i32_0 = arith.constant 0 : i32
    %c0_i32_1 = arith.constant 0 : i32
    return %c0_i32, %c0_i32_0 : i32, i32
  }
  func.func @transform_4(%arg0: i32) -> (i32, i32) {
    %c0_i32 = arith.constant 0 : i32
    %c0_i32_0 = arith.constant 0 : i32
    %c0_i32_1 = arith.constant 0 : i32
    return %c0_i32, %c0_i32_0 : i32, i32
  }
  func.func @transform_5(%arg0: i32) -> (i32, i32) {
    %c0_i32 = arith.constant 0 : i32
    %c0_i32_0 = arith.constant 0 : i32
    %c0_i32_1 = arith.constant 0 : i32
    return %c0_i32, %c0_i32_0 : i32, i32
  }
  func.func @transform_6(%arg0: i32) -> (i32, i32) {
    %c0_i32 = arith.constant 0 : i32
    %c0_i32_0 = arith.constant 0 : i32
    %c0_i32_1 = arith.constant 0 : i32
    return %c0_i32, %c0_i32_0 : i32, i32
  }
  func.func @transform_7(%arg0: i32) -> (i32, i32) {
    %c0_i32 = arith.constant 0 : i32
    %c0_i32_0 = arith.constant 0 : i32
    return %c0_i32, %arg0 : i32, i32
  }
}

</mosaic_0001>

<llo_original>
// kernel: tpu_custom_call.1
$region0: #{tpu_custom_call.1}
  #allocation0 [shape = 'u32[]', space=smem, size = 0x4, offset = 0x4, fixed_abs, tag = 'smem constant byte address 0x4 - core index']
  #allocation1 [shape = 'u32[72,128]{1,0:T(1,128)}', space=vmem, size = 0x9000, scoped, tag = 'internal scratch']
  #allocation2 [shape = 'f32[1,1]{1,0:T(1,128)S(1)}', space=vmem, size = 0x200, scoped, tag = 'scoped memory for tpu_custom_call.1']
  %s0 = inlined_call_operand.vmem [shape: f32[4096,32], index: 0, kind: input, shape index: {}]
  %s1 = inlined_call_operand.vmem [shape: bf16[64,32], index: 1, kind: input, shape index: {}]
  %s2 = inlined_call_operand.vmem [shape: f32[64,1], index: 2, kind: input, shape index: {}]
  %s3 = inlined_call_operand.vmem [shape: bf16[32,64], index: 3, kind: input, shape index: {}]
  %s4 = inlined_call_operand.vmem [shape: f32[32,1], index: 4, kind: input, shape index: {}]
  %s5 = inlined_call_operand.vmem [shape: bf16[1,32], index: 5, kind: input, shape index: {}]
  %s6 = inlined_call_operand.<no memory space> [shape: f32[1,1], index: 6, kind: input, shape index: {}]
  %s7 = inlined_call_operand.hbm [shape: f32[1,4096], index: 7, kind: output, shape index: {}]
  %s8 = sld [smem:[#allocation0]]
  $region61: #{tpu_custom_call.1} parent=0
    _
  %s10 = ssub.s32 1, %s8
  %s11 = scalar_select 0, %s10, %s8
  %v12 = vstv %s6
  %13 = vst [vmem:[#allocation2] sm:$0x1] %v12
  $region1: #{tpu_custom_call.1} parent=0
    #allocation3 [shape = 'u8[16384]{0}', space=vmem, size = 0x4000, scoped, tag = 'output window, operand 0']
    #allocation4 [shape = 's32[2]{0}', space=sflag, size = 0x8, scoped, tag = 'scoped memory for tpu_custom_call.1']
    %14 = vsyncpa [#allocation4], 0
    %s15 = scalar_lea.sflag [#allocation4], 1
    %16 = vsyncpa %s15, 0
    loop: start=0, step=1, limit=4
    $region2: #{tpu_custom_call.1} parent=1 // loop_pre_header
      _
    $region3: #{tpu_custom_call.1} parent=1 // loop_header
      %s18 = sphi 0, %s22
      %p19 = scmp.ge.s32.totalorder %s18, 4
      %s28 = sphi 0, %s30
      %s31 = sphi 0, %s28
      %s32 = sphi 0, %s31
      %s48 = sphi 0, %s32
      %s52 = sphi 0, %s52
      %s54 = sphi 0, %s52
      %s55 = sphi 0, %s54
      %s69 = sphi 0, %s55
      %s73 = sphi 0, %s73
      %s75 = sphi 0, %s73
      %s76 = sphi 0, %s75
      %s90 = sphi 0, %s76
      %s94 = sphi 0, %s94
      %s96 = sphi 0, %s94
      %s97 = sphi 0, %s96
      %s111 = sphi 0, %s97
      %s115 = sphi 0, %s115
      %s117 = sphi 0, %s115
      %s118 = sphi 0, %s117
      %s132 = sphi 0, %s118
      %s136 = sphi 0, %s136
      %s138 = sphi 0, %s136
      %s139 = sphi 0, %s138
      %s153 = sphi 0, %s139
      %s157 = sphi 0, %s157
      %s159 = sphi 0, %s157
      %s160 = sphi 0, %s159
      %s174 = sphi 0, %s160
      %s180 = sphi 0, %s182
      %s183 = sphi 0, %s180
      %s184 = sphi 0, %s183
      %s200 = sphi 0, %s184
    $region4: #{tpu_custom_call.1} parent=1 // loop_header_branch
      %21 = sbr.rel (%p19) target = $region8
    $region5: #{tpu_custom_call.1} parent=1 // loop_body
      %s23 = ssub.s32 %s18, 1
      %s24 = ssub.s32 %s18, 2
      %s25 = sadd.s32 %s18, 1
      %s26 = ssub.s32 %s18, %s25
      %p27 = scmp.eq.s32.totalorder %s26, 0
      %s29 = sadd.s32 %s28, 1
      %s30 = scalar_select %p27, %s28, %s29
      %p33 = pneg %p27
      %p34 = scmp.eq.s32.totalorder %s18, 1
      %p35 = por %p33, %p34
      %p36 = scmp.ne.s32.totalorder %s28, %s31
      %p37 = scmp.eq.s32.totalorder %s18, 0
      %p38 = por %p36, %p37
      %p39 = scmp.ne.s32.totalorder %s28, %s31
      %p40 = scmp.eq.s32.totalorder %s23, 1
      %p41 = por %p39, %p40
      %p42 = scmp.ne.s32.totalorder %s31, %s32
      %p43 = scmp.eq.s32.totalorder %s23, 0
      %p44 = por %p42, %p43
      %p45 = scmp.ne.s32.totalorder %s31, %s32
      %p46 = scmp.eq.s32.totalorder %s24, 1
      %p47 = por %p45, %p46
      %p49 = scmp.ne.s32.totalorder %s32, %s48
      %p50 = scmp.eq.s32.totalorder %s24, 0
      %p51 = por %p49, %p50
      %s53 = sadd.s32 %s52, 1
      %p56 = scmp.eq.s32.totalorder %s18, 1
      %p57 = scmp.ne.s32.totalorder %s52, %s54
      %p58 = scmp.eq.s32.totalorder %s18, 0
      %p59 = por %p57, %p58
      %p60 = scmp.ne.s32.totalorder %s52, %s54
      %p61 = scmp.eq.s32.totalorder %s23, 1
      %p62 = por %p60, %p61
      %p63 = scmp.ne.s32.totalorder %s54, %s55
      %p64 = scmp.eq.s32.totalorder %s23, 0
      %p65 = por %p63, %p64
      %p66 = scmp.ne.s32.totalorder %s54, %s55
      %p67 = scmp.eq.s32.totalorder %s24, 1
      %p68 = por %p66, %p67
      %p70 = scmp.ne.s32.totalorder %s55, %s69
      %p71 = scmp.eq.s32.totalorder %s24, 0
      %p72 = por %p70, %p71
      %s74 = sadd.s32 %s73, 1
      %p77 = scmp.eq.s32.totalorder %s18, 1
      %p78 = scmp.ne.s32.totalorder %s73, %s75
      %p79 = scmp.eq.s32.totalorder %s18, 0
      %p80 = por %p78, %p79
      %p81 = scmp.ne.s32.totalorder %s73, %s75
      %p82 = scmp.eq.s32.totalorder %s23, 1
      %p83 = por %p81, %p82
      %p84 = scmp.ne.s32.totalorder %s75, %s76
      %p85 = scmp.eq.s32.totalorder %s23, 0
      %p86 = por %p84, %p85
      %p87 = scmp.ne.s32.totalorder %s75, %s76
      %p88 = scmp.eq.s32.totalorder %s24, 1
      %p89 = por %p87, %p88
      %p91 = scmp.ne.s32.totalorder %s76, %s90
      %p92 = scmp.eq.s32.totalorder %s24, 0
      %p93 = por %p91, %p92
      %s95 = sadd.s32 %s94, 1
      %p98 = scmp.eq.s32.totalorder %s18, 1
      %p99 = scmp.ne.s32.totalorder %s94, %s96
      %p100 = scmp.eq.s32.totalorder %s18, 0
      %p101 = por %p99, %p100
      %p102 = scmp.ne.s32.totalorder %s94, %s96
      %p103 = scmp.eq.s32.totalorder %s23, 1
      %p104 = por %p102, %p103
      %p105 = scmp.ne.s32.totalorder %s96, %s97
      %p106 = scmp.eq.s32.totalorder %s23, 0
      %p107 = por %p105, %p106
      %p108 = scmp.ne.s32.totalorder %s96, %s97
      %p109 = scmp.eq.s32.totalorder %s24, 1
      %p110 = por %p108, %p109
      %p112 = scmp.ne.s32.totalorder %s97, %s111
      %p113 = scmp.eq.s32.totalorder %s24, 0
      %p114 = por %p112, %p113
      %s116 = sadd.s32 %s115, 1
      %p119 = scmp.eq.s32.totalorder %s18, 1
      %p120 = scmp.ne.s32.totalorder %s115, %s117
      %p121 = scmp.eq.s32.totalorder %s18, 0
      %p122 = por %p120, %p121
      %p123 = scmp.ne.s32.totalorder %s115, %s117
      %p124 = scmp.eq.s32.totalorder %s23, 1
      %p125 = por %p123, %p124
      %p126 = scmp.ne.s32.totalorder %s117, %s118
      %p127 = scmp.eq.s32.totalorder %s23, 0
      %p128 = por %p126, %p127
      %p129 = scmp.ne.s32.totalorder %s117, %s118
      %p130 = scmp.eq.s32.totalorder %s24, 1
      %p131 = por %p129, %p130
      %p133 = scmp.ne.s32.totalorder %s118, %s132
      %p134 = scmp.eq.s32.totalorder %s24, 0
      %p135 = por %p133, %p134
      %s137 = sadd.s32 %s136, 1
      %p140 = scmp.eq.s32.totalorder %s18, 1
      %p141 = scmp.ne.s32.totalorder %s136, %s138
      %p142 = scmp.eq.s32.totalorder %s18, 0
      %p143 = por %p141, %p142
      %p144 = scmp.ne.s32.totalorder %s136, %s138
      %p145 = scmp.eq.s32.totalorder %s23, 1
      %p146 = por %p144, %p145
      %p147 = scmp.ne.s32.totalorder %s138, %s139
      %p148 = scmp.eq.s32.totalorder %s23, 0
      %p149 = por %p147, %p148
      %p150 = scmp.ne.s32.totalorder %s138, %s139
      %p151 = scmp.eq.s32.totalorder %s24, 1
      %p152 = por %p150, %p151
      %p154 = scmp.ne.s32.totalorder %s139, %s153
      %p155 = scmp.eq.s32.totalorder %s24, 0
      %p156 = por %p154, %p155
      %s158 = sadd.s32 %s157, 1
      %p161 = scmp.eq.s32.totalorder %s18, 1
      %p162 = scmp.ne.s32.totalorder %s157, %s159
      %p163 = scmp.eq.s32.totalorder %s18, 0
      %p164 = por %p162, %p163
      %p165 = scmp.ne.s32.totalorder %s157, %s159
      %p166 = scmp.eq.s32.totalorder %s23, 1
      %p167 = por %p165, %p166
      %p168 = scmp.ne.s32.totalorder %s159, %s160
      %p169 = scmp.eq.s32.totalorder %s23, 0
      %p170 = por %p168, %p169
      %p171 = scmp.ne.s32.totalorder %s159, %s160
      %p172 = scmp.eq.s32.totalorder %s24, 1
      %p173 = por %p171, %p172
      %p175 = scmp.ne.s32.totalorder %s160, %s174
      %p176 = scmp.eq.s32.totalorder %s24, 0
      %p177 = por %p175, %p176
      %s178 = ssub.s32 %s18, %s25
      %p179 = scmp.eq.s32.totalorder %s178, 0
      %s181 = sadd.s32 %s180, 1
      %s182 = scalar_select %p179, %s180, %s181
      %p185 = pneg %p179
      %p186 = scmp.eq.s32.totalorder %s18, 1
      %p187 = por %p185, %p186
      %p188 = scmp.ne.s32.totalorder %s180, %s183
      %p189 = scmp.eq.s32.totalorder %s18, 0
      %p190 = por %p188, %p189
      %p191 = scmp.ne.s32.totalorder %s180, %s183
      %p192 = scmp.eq.s32.totalorder %s23, 1
      %p193 = por %p191, %p192
      %p194 = scmp.ne.s32.totalorder %s183, %s184
      %p195 = scmp.eq.s32.totalorder %s23, 0
      %p196 = por %p194, %p195
      %p197 = scmp.ne.s32.totalorder %s183, %s184
      %p198 = scmp.eq.s32.totalorder %s24, 1
      %p199 = por %p197, %p198
      %p201 = scmp.ne.s32.totalorder %s184, %s200
      %p202 = scmp.eq.s32.totalorder %s24, 0
      %p203 = por %p201, %p202
      %p204 = scmp.le.s32.totalorder 1, %s18
      %p205 = scmp.lt.s32.totalorder %s18, 3
      %p206 = pnand %p204, %p205
      %p207 = pneg %p206
      // Predicated region
      $region9: #{tpu_custom_call.1} parent=5 // pred_check
        _
      $region10: #{tpu_custom_call.1} parent=5 // pred_check_branch
        %209 = sbr.rel (%p206) target = $region12
      $region11: #{tpu_custom_call.1} parent=5 // pred_region
        %s210 = ssub.s32 %s18, 1
        // Predicated region
        $region13: #{tpu_custom_call.1} parent=11 // pred_check
          %p211 = pneg %p65
        $region14: #{tpu_custom_call.1} parent=11 // pred_check_branch
          %213 = sbr.rel (%p211) target = $region16
        $region15: #{tpu_custom_call.1} parent=11 // pred_region
          _
        $region16: #{tpu_custom_call.1} parent=11 // pred_fallthru
          _
        // Predicated region
        $region17: #{tpu_custom_call.1} parent=11 // pred_check
          %p214 = pneg %p86
        $region18: #{tpu_custom_call.1} parent=11 // pred_check_branch
          %216 = sbr.rel (%p214) target = $region20
        $region19: #{tpu_custom_call.1} parent=11 // pred_region
          _
        $region20: #{tpu_custom_call.1} parent=11 // pred_fallthru
          _
        // Predicated region
        $region21: #{tpu_custom_call.1} parent=11 // pred_check
          %p217 = pneg %p107
        $region22: #{tpu_custom_call.1} parent=11 // pred_check_branch
          %219 = sbr.rel (%p217) target = $region24
        $region23: #{tpu_custom_call.1} parent=11 // pred_region
          _
        $region24: #{tpu_custom_call.1} parent=11 // pred_fallthru
          _
        // Predicated region
        $region25: #{tpu_custom_call.1} parent=11 // pred_check
          %p220 = pneg %p128
        $region26: #{tpu_custom_call.1} parent=11 // pred_check_branch
          %222 = sbr.rel (%p220) target = $region28
        $region27: #{tpu_custom_call.1} parent=11 // pred_region
          _
        $region28: #{tpu_custom_call.1} parent=11 // pred_fallthru
          _
        // Predicated region
        $region29: #{tpu_custom_call.1} parent=11 // pred_check
          %p223 = pneg %p149
        $region30: #{tpu_custom_call.1} parent=11 // pred_check_branch
          %225 = sbr.rel (%p223) target = $region32
        $region31: #{tpu_custom_call.1} parent=11 // pred_region
          _
        $region32: #{tpu_custom_call.1} parent=11 // pred_fallthru
          _
        // Predicated region
        $region33: #{tpu_custom_call.1} parent=11 // pred_check
          %p226 = pneg %p170
        $region34: #{tpu_custom_call.1} parent=11 // pred_check_branch
          %228 = sbr.rel (%p226) target = $region36
        $region35: #{tpu_custom_call.1} parent=11 // pred_region
          _
        $region36: #{tpu_custom_call.1} parent=11 // pred_fallthru
          _
      $region12: #{tpu_custom_call.1} parent=5 // pred_fallthru
        _
      %p229 = scmp.lt.s32.totalorder %s18, 2
      // Predicated region
      $region37: #{tpu_custom_call.1} parent=5 // pred_check
        %p230 = pneg %p229
      $region38: #{tpu_custom_call.1} parent=5 // pred_check_branch
        %232 = sbr.rel (%p230) target = $region40
      $region39: #{tpu_custom_call.1} parent=5 // pred_region
        // Predicated region
        $region41: #{tpu_custom_call.1} parent=39 // pred_check
          %p233 = pneg %p38
        $region42: #{tpu_custom_call.1} parent=39 // pred_check_branch
          %235 = sbr.rel (%p233) target = $region44
        $region43: #{tpu_custom_call.1} parent=39 // pred_region
          %s236 = smul.u32 256, %s18
          %p237 = scmp.lt.s32.totalorder %s236, 511
          %s238 = scalar_select %p237, %s236, 511
          %s239 = smul.addr %s238, 8
          %s240 = scalar_lea.vmem %s0, %s239
          %s241 = smul.u32 256, %s18
        $region44: #{tpu_custom_call.1} parent=39 // pred_fallthru
          _
      $region40: #{tpu_custom_call.1} parent=5 // pred_fallthru
        _
      %p242 = scmp.le.s32.totalorder 1, %s18
      %p243 = scmp.lt.s32.totalorder %s18, 3
      %p244 = pnand %p242, %p243
      %p245 = pneg %p244
      // Predicated region
      $region45: #{tpu_custom_call.1} parent=5 // pred_check
        _
      $region46: #{tpu_custom_call.1} parent=5 // pred_check_branch
        %247 = sbr.rel (%p244) target = $region48
      $region47: #{tpu_custom_call.1} parent=5 // pred_region
        %s248 = ssub.s32 %s18, 1
        %s249 = smul.u32 256, %s23
        %p250 = scmp.lt.s32.totalorder %s249, 511
        %s251 = scalar_select %p250, %s249, 511
        %s252 = smul.addr %s251, 8
        %s253 = scalar_lea.vmem %s0, %s252
        %p254 = pneg %p44
        %p255 = pneg %p41
        %p256 = pneg %p65
        %p257 = pneg %p62
        %p258 = pneg %p86
        %p259 = pneg %p83
        %p260 = pneg %p107
        %p261 = pneg %p104
        %p262 = pneg %p128
        %p263 = pneg %p125
        %p264 = pneg %p149
        %p265 = pneg %p146
        %p266 = pneg %p170
        %p267 = pneg %p167
        %p268 = pneg %p196
        %p269 = pneg %p193
        %s270 = sand.u32 %s183, 1
        %s271 = scalar_lea.sflag [#allocation4], %s270
        %s272 = sand.u32 %s183, 1
        %s273 = smul.addr %s272, 16
        %s274 = scalar_lea.vmem [#allocation3], %s273
        %s275 = smul.u32 256, %s23
        %p276 = scmp.lt.s32.totalorder %s275, 511
        %s277 = scalar_select %p276, %s275, 511
        %s278 = smul.addr %s277, 8
        %s279 = scalar_lea.vmem %s0, %s278
        %s280 = smul.u32 256, %s23
        %s281 = smul.u32 16, %s23
        %v283 = vld [vmem:[%s279] sm:$0xff]
        %v284 = vld [vmem:[%s279 + $0x8] sm:$0xff]
        %v285 = vld [vmem:[%s279 + $0x10] sm:$0xff]
        %v286 = vld [vmem:[%s279 + $0x18] sm:$0xff]
        %v287 = vld [vmem:[%s279 + $0x20] sm:$0xff]
        %v288 = vld [vmem:[%s279 + $0x28] sm:$0xff]
        %v289 = vld [vmem:[%s279 + $0x30] sm:$0xff]
        %v290 = vld [vmem:[%s279 + $0x38] sm:$0xff]
        %v291 = vld [vmem:[%s279 + $0x40] sm:$0xff]
        %v292 = vld [vmem:[%s279 + $0x48] sm:$0xff]
        %v293 = vld [vmem:[%s279 + $0x50] sm:$0xff]
        %v294 = vld [vmem:[%s279 + $0x58] sm:$0xff]
        %v295 = vld [vmem:[%s279 + $0x60] sm:$0xff]
        %v296 = vld [vmem:[%s279 + $0x68] sm:$0xff]
        %v297 = vld [vmem:[%s279 + $0x70] sm:$0xff]
        %v298 = vld [vmem:[%s279 + $0x78] sm:$0xff]
        %v299 = vld [vmem:[%s279 + $0x80] sm:$0xff]
        %v300 = vld [vmem:[%s279 + $0x88] sm:$0xff]
        %v301 = vld [vmem:[%s279 + $0x90] sm:$0xff]
        %v302 = vld [vmem:[%s279 + $0x98] sm:$0xff]
        %v303 = vld [vmem:[%s279 + $0xa0] sm:$0xff]
        %v304 = vld [vmem:[%s279 + $0xa8] sm:$0xff]
        %v305 = vld [vmem:[%s279 + $0xb0] sm:$0xff]
        %v306 = vld [vmem:[%s279 + $0xb8] sm:$0xff]
        %v307 = vld [vmem:[%s279 + $0xc0] sm:$0xff]
        %v308 = vld [vmem:[%s279 + $0xc8] sm:$0xff]
        %v309 = vld [vmem:[%s279 + $0xd0] sm:$0xff]
        %v310 = vld [vmem:[%s279 + $0xd8] sm:$0xff]
        %v311 = vld [vmem:[%s279 + $0xe0] sm:$0xff]
        %v312 = vld [vmem:[%s279 + $0xe8] sm:$0xff]
        %v313 = vld [vmem:[%s279 + $0xf0] sm:$0xff]
        %v314 = vld [vmem:[%s279 + $0xf8] sm:$0xff]
        %v315 = vld [vmem:[%s279 + $0x100] sm:$0xff]
        %v316 = vld [vmem:[%s279 + $0x108] sm:$0xff]
        %v317 = vld [vmem:[%s279 + $0x110] sm:$0xff]
        %v318 = vld [vmem:[%s279 + $0x118] sm:$0xff]
        %v319 = vld [vmem:[%s279 + $0x120] sm:$0xff]
        %v320 = vld [vmem:[%s279 + $0x128] sm:$0xff]
        %v321 = vld [vmem:[%s279 + $0x130] sm:$0xff]
        %v322 = vld [vmem:[%s279 + $0x138] sm:$0xff]
        %v323 = vld [vmem:[%s279 + $0x140] sm:$0xff]
        %v324 = vld [vmem:[%s279 + $0x148] sm:$0xff]
        %v325 = vld [vmem:[%s279 + $0x150] sm:$0xff]
        %v326 = vld [vmem:[%s279 + $0x158] sm:$0xff]
        %v327 = vld [vmem:[%s279 + $0x160] sm:$0xff]
        %v328 = vld [vmem:[%s279 + $0x168] sm:$0xff]
        %v329 = vld [vmem:[%s279 + $0x170] sm:$0xff]
        %v330 = vld [vmem:[%s279 + $0x178] sm:$0xff]
        %v331 = vld [vmem:[%s279 + $0x180] sm:$0xff]
        %v332 = vld [vmem:[%s279 + $0x188] sm:$0xff]
        %v333 = vld [vmem:[%s279 + $0x190] sm:$0xff]
        %v334 = vld [vmem:[%s279 + $0x198] sm:$0xff]
        %v335 = vld [vmem:[%s279 + $0x1a0] sm:$0xff]
        %v336 = vld [vmem:[%s279 + $0x1a8] sm:$0xff]
        %v337 = vld [vmem:[%s279 + $0x1b0] sm:$0xff]
        %v338 = vld [vmem:[%s279 + $0x1b8] sm:$0xff]
        %v339 = vld [vmem:[%s279 + $0x1c0] sm:$0xff]
        %v340 = vld [vmem:[%s279 + $0x1c8] sm:$0xff]
        %v341 = vld [vmem:[%s279 + $0x1d0] sm:$0xff]
        %v342 = vld [vmem:[%s279 + $0x1d8] sm:$0xff]
        %v343 = vld [vmem:[%s279 + $0x1e0] sm:$0xff]
        %v344 = vld [vmem:[%s279 + $0x1e8] sm:$0xff]
        %v345 = vld [vmem:[%s279 + $0x1f0] sm:$0xff]
        %v346 = vld [vmem:[%s279 + $0x1f8] sm:$0xff]
        %v347 = vld [vmem:[%s279 + $0x200] sm:$0xff]
        %v348 = vld [vmem:[%s279 + $0x208] sm:$0xff]
        %v349 = vld [vmem:[%s279 + $0x210] sm:$0xff]
        %v350 = vld [vmem:[%s279 + $0x218] sm:$0xff]
        %v351 = vld [vmem:[%s279 + $0x220] sm:$0xff]
        %v352 = vld [vmem:[%s279 + $0x228] sm:$0xff]
        %v353 = vld [vmem:[%s279 + $0x230] sm:$0xff]
        %v354 = vld [vmem:[%s279 + $0x238] sm:$0xff]
        %v355 = vld [vmem:[%s279 + $0x240] sm:$0xff]
        %v356 = vld [vmem:[%s279 + $0x248] sm:$0xff]
        %v357 = vld [vmem:[%s279 + $0x250] sm:$0xff]
        %v358 = vld [vmem:[%s279 + $0x258] sm:$0xff]
        %v359 = vld [vmem:[%s279 + $0x260] sm:$0xff]
        %v360 = vld [vmem:[%s279 + $0x268] sm:$0xff]
        %v361 = vld [vmem:[%s279 + $0x270] sm:$0xff]
        %v362 = vld [vmem:[%s279 + $0x278] sm:$0xff]
        %v363 = vld [vmem:[%s279 + $0x280] sm:$0xff]
        %v364 = vld [vmem:[%s279 + $0x288] sm:$0xff]
        %v365 = vld [vmem:[%s279 + $0x290] sm:$0xff]
        %v366 = vld [vmem:[%s279 + $0x298] sm:$0xff]
        %v367 = vld [vmem:[%s279 + $0x2a0] sm:$0xff]
        %v368 = vld [vmem:[%s279 + $0x2a8] sm:$0xff]
        %v369 = vld [vmem:[%s279 + $0x2b0] sm:$0xff]
        %v370 = vld [vmem:[%s279 + $0x2b8] sm:$0xff]
        %v371 = vld [vmem:[%s279 + $0x2c0] sm:$0xff]
        %v372 = vld [vmem:[%s279 + $0x2c8] sm:$0xff]
        %v373 = vld [vmem:[%s279 + $0x2d0] sm:$0xff]
        %v374 = vld [vmem:[%s279 + $0x2d8] sm:$0xff]
        %v375 = vld [vmem:[%s279 + $0x2e0] sm:$0xff]
        %v376 = vld [vmem:[%s279 + $0x2e8] sm:$0xff]
        %v377 = vld [vmem:[%s279 + $0x2f0] sm:$0xff]
        %v378 = vld [vmem:[%s279 + $0x2f8] sm:$0xff]
        %v379 = vld [vmem:[%s279 + $0x300] sm:$0xff]
        %v380 = vld [vmem:[%s279 + $0x308] sm:$0xff]
        %v381 = vld [vmem:[%s279 + $0x310] sm:$0xff]
        %v382 = vld [vmem:[%s279 + $0x318] sm:$0xff]
        %v383 = vld [vmem:[%s279 + $0x320] sm:$0xff]
        %v384 = vld [vmem:[%s279 + $0x328] sm:$0xff]
        %v385 = vld [vmem:[%s279 + $0x330] sm:$0xff]
        %v386 = vld [vmem:[%s279 + $0x338] sm:$0xff]
        %v387 = vld [vmem:[%s279 + $0x340] sm:$0xff]
        %v388 = vld [vmem:[%s279 + $0x348] sm:$0xff]
        %v389 = vld [vmem:[%s279 + $0x350] sm:$0xff]
        %v390 = vld [vmem:[%s279 + $0x358] sm:$0xff]
        %v391 = vld [vmem:[%s279 + $0x360] sm:$0xff]
        %v392 = vld [vmem:[%s279 + $0x368] sm:$0xff]
        %v393 = vld [vmem:[%s279 + $0x370] sm:$0xff]
        %v394 = vld [vmem:[%s279 + $0x378] sm:$0xff]
        %v395 = vld [vmem:[%s279 + $0x380] sm:$0xff]
        %v396 = vld [vmem:[%s279 + $0x388] sm:$0xff]
        %v397 = vld [vmem:[%s279 + $0x390] sm:$0xff]
        %v398 = vld [vmem:[%s279 + $0x398] sm:$0xff]
        %v399 = vld [vmem:[%s279 + $0x3a0] sm:$0xff]
        %v400 = vld [vmem:[%s279 + $0x3a8] sm:$0xff]
        %v401 = vld [vmem:[%s279 + $0x3b0] sm:$0xff]
        %v402 = vld [vmem:[%s279 + $0x3b8] sm:$0xff]
        %v403 = vld [vmem:[%s279 + $0x3c0] sm:$0xff]
        %v404 = vld [vmem:[%s279 + $0x3c8] sm:$0xff]
        %v405 = vld [vmem:[%s279 + $0x3d0] sm:$0xff]
        %v406 = vld [vmem:[%s279 + $0x3d8] sm:$0xff]
        %v407 = vld [vmem:[%s279 + $0x3e0] sm:$0xff]
        %v408 = vld [vmem:[%s279 + $0x3e8] sm:$0xff]
        %v409 = vld [vmem:[%s279 + $0x3f0] sm:$0xff]
        %v410 = vld [vmem:[%s279 + $0x3f8] sm:$0xff]
        %v411 = vld [vmem:[%s279 + $0x400] sm:$0xff]
        %v412 = vld [vmem:[%s279 + $0x408] sm:$0xff]
        %v413 = vld [vmem:[%s279 + $0x410] sm:$0xff]
        %v414 = vld [vmem:[%s279 + $0x418] sm:$0xff]
        %v415 = vld [vmem:[%s279 + $0x420] sm:$0xff]
        %v416 = vld [vmem:[%s279 + $0x428] sm:$0xff]
        %v417 = vld [vmem:[%s279 + $0x430] sm:$0xff]
        %v418 = vld [vmem:[%s279 + $0x438] sm:$0xff]
        %v419 = vld [vmem:[%s279 + $0x440] sm:$0xff]
        %v420 = vld [vmem:[%s279 + $0x448] sm:$0xff]
        %v421 = vld [vmem:[%s279 + $0x450] sm:$0xff]
        %v422 = vld [vmem:[%s279 + $0x458] sm:$0xff]
        %v423 = vld [vmem:[%s279 + $0x460] sm:$0xff]
        %v424 = vld [vmem:[%s279 + $0x468] sm:$0xff]
        %v425 = vld [vmem:[%s279 + $0x470] sm:$0xff]
        %v426 = vld [vmem:[%s279 + $0x478] sm:$0xff]
        %v427 = vld [vmem:[%s279 + $0x480] sm:$0xff]
        %v428 = vld [vmem:[%s279 + $0x488] sm:$0xff]
        %v429 = vld [vmem:[%s279 + $0x490] sm:$0xff]
        %v430 = vld [vmem:[%s279 + $0x498] sm:$0xff]
        %v431 = vld [vmem:[%s279 + $0x4a0] sm:$0xff]
        %v432 = vld [vmem:[%s279 + $0x4a8] sm:$0xff]
        %v433 = vld [vmem:[%s279 + $0x4b0] sm:$0xff]
        %v434 = vld [vmem:[%s279 + $0x4b8] sm:$0xff]
        %v435 = vld [vmem:[%s279 + $0x4c0] sm:$0xff]
        %v436 = vld [vmem:[%s279 + $0x4c8] sm:$0xff]
        %v437 = vld [vmem:[%s279 + $0x4d0] sm:$0xff]
        %v438 = vld [vmem:[%s279 + $0x4d8] sm:$0xff]
        %v439 = vld [vmem:[%s279 + $0x4e0] sm:$0xff]
        %v440 = vld [vmem:[%s279 + $0x4e8] sm:$0xff]
        %v441 = vld [vmem:[%s279 + $0x4f0] sm:$0xff]
        %v442 = vld [vmem:[%s279 + $0x4f8] sm:$0xff]
        %v443 = vld [vmem:[%s279 + $0x500] sm:$0xff]
        %v444 = vld [vmem:[%s279 + $0x508] sm:$0xff]
        %v445 = vld [vmem:[%s279 + $0x510] sm:$0xff]
        %v446 = vld [vmem:[%s279 + $0x518] sm:$0xff]
        %v447 = vld [vmem:[%s279 + $0x520] sm:$0xff]
        %v448 = vld [vmem:[%s279 + $0x528] sm:$0xff]
        %v449 = vld [vmem:[%s279 + $0x530] sm:$0xff]
        %v450 = vld [vmem:[%s279 + $0x538] sm:$0xff]
        %v451 = vld [vmem:[%s279 + $0x540] sm:$0xff]
        %v452 = vld [vmem:[%s279 + $0x548] sm:$0xff]
        %v453 = vld [vmem:[%s279 + $0x550] sm:$0xff]
        %v454 = vld [vmem:[%s279 + $0x558] sm:$0xff]
        %v455 = vld [vmem:[%s279 + $0x560] sm:$0xff]
        %v456 = vld [vmem:[%s279 + $0x568] sm:$0xff]
        %v457 = vld [vmem:[%s279 + $0x570] sm:$0xff]
        %v458 = vld [vmem:[%s279 + $0x578] sm:$0xff]
        %v459 = vld [vmem:[%s279 + $0x580] sm:$0xff]
        %v460 = vld [vmem:[%s279 + $0x588] sm:$0xff]
        %v461 = vld [vmem:[%s279 + $0x590] sm:$0xff]
        %v462 = vld [vmem:[%s279 + $0x598] sm:$0xff]
        %v463 = vld [vmem:[%s279 + $0x5a0] sm:$0xff]
        %v464 = vld [vmem:[%s279 + $0x5a8] sm:$0xff]
        %v465 = vld [vmem:[%s279 + $0x5b0] sm:$0xff]
        %v466 = vld [vmem:[%s279 + $0x5b8] sm:$0xff]
        %v467 = vld [vmem:[%s279 + $0x5c0] sm:$0xff]
        %v468 = vld [vmem:[%s279 + $0x5c8] sm:$0xff]
        %v469 = vld [vmem:[%s279 + $0x5d0] sm:$0xff]
        %v470 = vld [vmem:[%s279 + $0x5d8] sm:$0xff]
        %v471 = vld [vmem:[%s279 + $0x5e0] sm:$0xff]
        %v472 = vld [vmem:[%s279 + $0x5e8] sm:$0xff]
        %v473 = vld [vmem:[%s279 + $0x5f0] sm:$0xff]
        %v474 = vld [vmem:[%s279 + $0x5f8] sm:$0xff]
        %v475 = vld [vmem:[%s279 + $0x600] sm:$0xff]
        %v476 = vld [vmem:[%s279 + $0x608] sm:$0xff]
        %v477 = vld [vmem:[%s279 + $0x610] sm:$0xff]
        %v478 = vld [vmem:[%s279 + $0x618] sm:$0xff]
        %v479 = vld [vmem:[%s279 + $0x620] sm:$0xff]
        %v480 = vld [vmem:[%s279 + $0x628] sm:$0xff]
        %v481 = vld [vmem:[%s279 + $0x630] sm:$0xff]
        %v482 = vld [vmem:[%s279 + $0x638] sm:$0xff]
        %v483 = vld [vmem:[%s279 + $0x640] sm:$0xff]
        %v484 = vld [vmem:[%s279 + $0x648] sm:$0xff]
        %v485 = vld [vmem:[%s279 + $0x650] sm:$0xff]
        %v486 = vld [vmem:[%s279 + $0x658] sm:$0xff]
        %v487 = vld [vmem:[%s279 + $0x660] sm:$0xff]
        %v488 = vld [vmem:[%s279 + $0x668] sm:$0xff]
        %v489 = vld [vmem:[%s279 + $0x670] sm:$0xff]
        %v490 = vld [vmem:[%s279 + $0x678] sm:$0xff]
        %v491 = vld [vmem:[%s279 + $0x680] sm:$0xff]
        %v492 = vld [vmem:[%s279 + $0x688] sm:$0xff]
        %v493 = vld [vmem:[%s279 + $0x690] sm:$0xff]
        %v494 = vld [vmem:[%s279 + $0x698] sm:$0xff]
        %v495 = vld [vmem:[%s279 + $0x6a0] sm:$0xff]
        %v496 = vld [vmem:[%s279 + $0x6a8] sm:$0xff]
        %v497 = vld [vmem:[%s279 + $0x6b0] sm:$0xff]
        %v498 = vld [vmem:[%s279 + $0x6b8] sm:$0xff]
        %v499 = vld [vmem:[%s279 + $0x6c0] sm:$0xff]
        %v500 = vld [vmem:[%s279 + $0x6c8] sm:$0xff]
        %v501 = vld [vmem:[%s279 + $0x6d0] sm:$0xff]
        %v502 = vld [vmem:[%s279 + $0x6d8] sm:$0xff]
        %v503 = vld [vmem:[%s279 + $0x6e0] sm:$0xff]
        %v504 = vld [vmem:[%s279 + $0x6e8] sm:$0xff]
        %v505 = vld [vmem:[%s279 + $0x6f0] sm:$0xff]
        %v506 = vld [vmem:[%s279 + $0x6f8] sm:$0xff]
        %v507 = vld [vmem:[%s279 + $0x700] sm:$0xff]
        %v508 = vld [vmem:[%s279 + $0x708] sm:$0xff]
        %v509 = vld [vmem:[%s279 + $0x710] sm:$0xff]
        %v510 = vld [vmem:[%s279 + $0x718] sm:$0xff]
        %v511 = vld [vmem:[%s279 + $0x720] sm:$0xff]
        %v512 = vld [vmem:[%s279 + $0x728] sm:$0xff]
        %v513 = vld [vmem:[%s279 + $0x730] sm:$0xff]
        %v514 = vld [vmem:[%s279 + $0x738] sm:$0xff]
        %v515 = vld [vmem:[%s279 + $0x740] sm:$0xff]
        %v516 = vld [vmem:[%s279 + $0x748] sm:$0xff]
        %v517 = vld [vmem:[%s279 + $0x750] sm:$0xff]
        %v518 = vld [vmem:[%s279 + $0x758] sm:$0xff]
        %v519 = vld [vmem:[%s279 + $0x760] sm:$0xff]
        %v520 = vld [vmem:[%s279 + $0x768] sm:$0xff]
        %v521 = vld [vmem:[%s279 + $0x770] sm:$0xff]
        %v522 = vld [vmem:[%s279 + $0x778] sm:$0xff]
        %v523 = vld [vmem:[%s279 + $0x780] sm:$0xff]
        %v524 = vld [vmem:[%s279 + $0x788] sm:$0xff]
        %v525 = vld [vmem:[%s279 + $0x790] sm:$0xff]
        %v526 = vld [vmem:[%s279 + $0x798] sm:$0xff]
        %v527 = vld [vmem:[%s279 + $0x7a0] sm:$0xff]
        %v528 = vld [vmem:[%s279 + $0x7a8] sm:$0xff]
        %v529 = vld [vmem:[%s279 + $0x7b0] sm:$0xff]
        %v530 = vld [vmem:[%s279 + $0x7b8] sm:$0xff]
        %v531 = vld [vmem:[%s279 + $0x7c0] sm:$0xff]
        %v532 = vld [vmem:[%s279 + $0x7c8] sm:$0xff]
        %v533 = vld [vmem:[%s279 + $0x7d0] sm:$0xff]
        %v534 = vld [vmem:[%s279 + $0x7d8] sm:$0xff]
        %v535 = vld [vmem:[%s279 + $0x7e0] sm:$0xff]
        %v536 = vld [vmem:[%s279 + $0x7e8] sm:$0xff]
        %v537 = vld [vmem:[%s279 + $0x7f0] sm:$0xff]
        %v538 = vld [vmem:[%s279 + $0x7f8] sm:$0xff]
        %v539 = vpack.c.bf16 %v284, %v283
        %v540 = vpack.c.bf16 %v286, %v285
        %v541 = vpack.c.bf16 %v288, %v287
        %v542 = vpack.c.bf16 %v290, %v289
        %v543 = vpack.c.bf16 %v292, %v291
        %v544 = vpack.c.bf16 %v294, %v293
        %v545 = vpack.c.bf16 %v296, %v295
        %v546 = vpack.c.bf16 %v298, %v297
        %v547 = vpack.c.bf16 %v300, %v299
        %v548 = vpack.c.bf16 %v302, %v301
        %v549 = vpack.c.bf16 %v304, %v303
        %v550 = vpack.c.bf16 %v306, %v305
        %v551 = vpack.c.bf16 %v308, %v307
        %v552 = vpack.c.bf16 %v310, %v309
        %v553 = vpack.c.bf16 %v312, %v311
        %v554 = vpack.c.bf16 %v314, %v313
        %v555 = vpack.c.bf16 %v316, %v315
        %v556 = vpack.c.bf16 %v318, %v317
        %v557 = vpack.c.bf16 %v320, %v319
        %v558 = vpack.c.bf16 %v322, %v321
        %v559 = vpack.c.bf16 %v324, %v323
        %v560 = vpack.c.bf16 %v326, %v325
        %v561 = vpack.c.bf16 %v328, %v327
        %v562 = vpack.c.bf16 %v330, %v329
        %v563 = vpack.c.bf16 %v332, %v331
        %v564 = vpack.c.bf16 %v334, %v333
        %v565 = vpack.c.bf16 %v336, %v335
        %v566 = vpack.c.bf16 %v338, %v337
        %v567 = vpack.c.bf16 %v340, %v339
        %v568 = vpack.c.bf16 %v342, %v341
        %v569 = vpack.c.bf16 %v344, %v343
        %v570 = vpack.c.bf16 %v346, %v345
        %v571 = vpack.c.bf16 %v348, %v347
        %v572 = vpack.c.bf16 %v350, %v349
        %v573 = vpack.c.bf16 %v352, %v351
        %v574 = vpack.c.bf16 %v354, %v353
        %v575 = vpack.c.bf16 %v356, %v355
        %v576 = vpack.c.bf16 %v358, %v357
        %v577 = vpack.c.bf16 %v360, %v359
        %v578 = vpack.c.bf16 %v362, %v361
        %v579 = vpack.c.bf16 %v364, %v363
        %v580 = vpack.c.bf16 %v366, %v365
        %v581 = vpack.c.bf16 %v368, %v367
        %v582 = vpack.c.bf16 %v370, %v369
        %v583 = vpack.c.bf16 %v372, %v371
        %v584 = vpack.c.bf16 %v374, %v373
        %v585 = vpack.c.bf16 %v376, %v375
        %v586 = vpack.c.bf16 %v378, %v377
        %v587 = vpack.c.bf16 %v380, %v379
        %v588 = vpack.c.bf16 %v382, %v381
        %v589 = vpack.c.bf16 %v384, %v383
        %v590 = vpack.c.bf16 %v386, %v385
        %v591 = vpack.c.bf16 %v388, %v387
        %v592 = vpack.c.bf16 %v390, %v389
        %v593 = vpack.c.bf16 %v392, %v391
        %v594 = vpack.c.bf16 %v394, %v393
        %v595 = vpack.c.bf16 %v396, %v395
        %v596 = vpack.c.bf16 %v398, %v397
        %v597 = vpack.c.bf16 %v400, %v399
        %v598 = vpack.c.bf16 %v402, %v401
        %v599 = vpack.c.bf16 %v404, %v403
        %v600 = vpack.c.bf16 %v406, %v405
        %v601 = vpack.c.bf16 %v408, %v407
        %v602 = vpack.c.bf16 %v410, %v409
        %v603 = vpack.c.bf16 %v412, %v411
        %v604 = vpack.c.bf16 %v414, %v413
        %v605 = vpack.c.bf16 %v416, %v415
        %v606 = vpack.c.bf16 %v418, %v417
        %v607 = vpack.c.bf16 %v420, %v419
        %v608 = vpack.c.bf16 %v422, %v421
        %v609 = vpack.c.bf16 %v424, %v423
        %v610 = vpack.c.bf16 %v426, %v425
        %v611 = vpack.c.bf16 %v428, %v427
        %v612 = vpack.c.bf16 %v430, %v429
        %v613 = vpack.c.bf16 %v432, %v431
        %v614 = vpack.c.bf16 %v434, %v433
        %v615 = vpack.c.bf16 %v436, %v435
        %v616 = vpack.c.bf16 %v438, %v437
        %v617 = vpack.c.bf16 %v440, %v439
        %v618 = vpack.c.bf16 %v442, %v441
        %v619 = vpack.c.bf16 %v444, %v443
        %v620 = vpack.c.bf16 %v446, %v445
        %v621 = vpack.c.bf16 %v448, %v447
        %v622 = vpack.c.bf16 %v450, %v449
        %v623 = vpack.c.bf16 %v452, %v451
        %v624 = vpack.c.bf16 %v454, %v453
        %v625 = vpack.c.bf16 %v456, %v455
        %v626 = vpack.c.bf16 %v458, %v457
        %v627 = vpack.c.bf16 %v460, %v459
        %v628 = vpack.c.bf16 %v462, %v461
        %v629 = vpack.c.bf16 %v464, %v463
        %v630 = vpack.c.bf16 %v466, %v465
        %v631 = vpack.c.bf16 %v468, %v467
        %v632 = vpack.c.bf16 %v470, %v469
        %v633 = vpack.c.bf16 %v472, %v471
        %v634 = vpack.c.bf16 %v474, %v473
        %v635 = vpack.c.bf16 %v476, %v475
        %v636 = vpack.c.bf16 %v478, %v477
        %v637 = vpack.c.bf16 %v480, %v479
        %v638 = vpack.c.bf16 %v482, %v481
        %v639 = vpack.c.bf16 %v484, %v483
        %v640 = vpack.c.bf16 %v486, %v485
        %v641 = vpack.c.bf16 %v488, %v487
        %v642 = vpack.c.bf16 %v490, %v489
        %v643 = vpack.c.bf16 %v492, %v491
        %v644 = vpack.c.bf16 %v494, %v493
        %v645 = vpack.c.bf16 %v496, %v495
        %v646 = vpack.c.bf16 %v498, %v497
        %v647 = vpack.c.bf16 %v500, %v499
        %v648 = vpack.c.bf16 %v502, %v501
        %v649 = vpack.c.bf16 %v504, %v503
        %v650 = vpack.c.bf16 %v506, %v505
        %v651 = vpack.c.bf16 %v508, %v507
        %v652 = vpack.c.bf16 %v510, %v509
        %v653 = vpack.c.bf16 %v512, %v511
        %v654 = vpack.c.bf16 %v514, %v513
        %v655 = vpack.c.bf16 %v516, %v515
        %v656 = vpack.c.bf16 %v518, %v517
        %v657 = vpack.c.bf16 %v520, %v519
        %v658 = vpack.c.bf16 %v522, %v521
        %v659 = vpack.c.bf16 %v524, %v523
        %v660 = vpack.c.bf16 %v526, %v525
        %v661 = vpack.c.bf16 %v528, %v527
        %v662 = vpack.c.bf16 %v530, %v529
        %v663 = vpack.c.bf16 %v532, %v531
        %v664 = vpack.c.bf16 %v534, %v533
        %v665 = vpack.c.bf16 %v536, %v535
        %v666 = vpack.c.bf16 %v538, %v537
        %v667 = vld [vmem:[%s1] sm:$0xf]
        %v668 = vld [vmem:[%s1 + $0x4] sm:$0xf]
        %v669 = vld [vmem:[%s1 + $0x8] sm:$0xf]
        %v670 = vld [vmem:[%s1 + $0xc] sm:$0xf]
        %v671 = vld [vmem:[%s1 + $0x10] sm:$0xf]
        %v672 = vld [vmem:[%s1 + $0x14] sm:$0xf]
        %v673 = vld [vmem:[%s1 + $0x18] sm:$0xf]
        %v674 = vld [vmem:[%s1 + $0x1c] sm:$0xf]
        %v675 = vld [vmem:[%s2] sm:$0xff]
        %v676 = vld [vmem:[%s2 + $0x8] sm:$0xff]
        %v677 = vld [vmem:[%s2 + $0x10] sm:$0xff]
        %v678 = vld [vmem:[%s2 + $0x18] sm:$0xff]
        %v679 = vld [vmem:[%s2 + $0x20] sm:$0xff]
        %v680 = vld [vmem:[%s2 + $0x28] sm:$0xff]
        %v681 = vld [vmem:[%s2 + $0x30] sm:$0xff]
        %v682 = vld [vmem:[%s2 + $0x38] sm:$0xff]
        %684 = vset.pattern.permute.xlu0 0
        %685 = vperm.xlu0 %684, %v675
        %v686 = vpop.permute.xlu0 %685
        %689 = vset.pattern.permute.xlu0 0
        %690 = vperm.xlu0 %689, %v676
        %v691 = vpop.permute.xlu0 %690
        %694 = vset.pattern.permute.xlu0 0
        %695 = vperm.xlu0 %694, %v677
        %v696 = vpop.permute.xlu0 %695
        %699 = vset.pattern.permute.xlu0 0
        %700 = vperm.xlu0 %699, %v678
        %v701 = vpop.permute.xlu0 %700
        %704 = vset.pattern.permute.xlu0 0
        %705 = vperm.xlu0 %704, %v679
        %v706 = vpop.permute.xlu0 %705
        %709 = vset.pattern.permute.xlu0 0
        %710 = vperm.xlu0 %709, %v680
        %v711 = vpop.permute.xlu0 %710
        %714 = vset.pattern.permute.xlu0 0
        %715 = vperm.xlu0 %714, %v681
        %v716 = vpop.permute.xlu0 %715
        %719 = vset.pattern.permute.xlu0 0
        %720 = vperm.xlu0 %719, %v682
        %v721 = vpop.permute.xlu0 %720
        %v731 = vunpack.c.l.b16 %v667
        %v732 = vunpack.c.l.b16 %v668
        %v733 = vunpack.c.l.b16 %v669
        %v734 = vunpack.c.l.b16 %v670
        %v735 = vunpack.c.l.b16 %v671
        %v736 = vunpack.c.l.b16 %v672
        %v737 = vunpack.c.l.b16 %v673
        %v738 = vunpack.c.l.b16 %v674
        %v739 = vpack.c.b16 %v732, %v731
        %v740 = vpack.c.b16 %v734, %v733
        %v741 = vpack.c.b16 %v736, %v735
        %v742 = vpack.c.b16 %v738, %v737
        %vm743 = vcmask 261120
        %v745 = vsel %vm743, %v739, 0
        %v748 = vsel %vm743, %v740, 0
        %v751 = vsel %vm743, %v741, 0
        %v754 = vsel %vm743, %v742, 0
        %v757 = vsel %vm743, %v539, 0
        %v760 = vsel %vm743, %v540, 0
        %v763 = vsel %vm743, %v541, 0
        %v766 = vsel %vm743, %v542, 0
        %v769 = vsel %vm743, %v543, 0
        %v772 = vsel %vm743, %v544, 0
        %v775 = vsel %vm743, %v545, 0
        %v778 = vsel %vm743, %v546, 0
        %v781 = vsel %vm743, %v547, 0
        %v784 = vsel %vm743, %v548, 0
        %v787 = vsel %vm743, %v549, 0
        %v790 = vsel %vm743, %v550, 0
        %v793 = vsel %vm743, %v551, 0
        %v796 = vsel %vm743, %v552, 0
        %v799 = vsel %vm743, %v553, 0
        %v802 = vsel %vm743, %v554, 0
        %v805 = vsel %vm743, %v555, 0
        %v808 = vsel %vm743, %v556, 0
        %v811 = vsel %vm743, %v557, 0
        %v814 = vsel %vm743, %v558, 0
        %v817 = vsel %vm743, %v559, 0
        %v820 = vsel %vm743, %v560, 0
        %v823 = vsel %vm743, %v561, 0
        %v826 = vsel %vm743, %v562, 0
        %v829 = vsel %vm743, %v563, 0
        %v832 = vsel %vm743, %v564, 0
        %v835 = vsel %vm743, %v565, 0
        %v838 = vsel %vm743, %v566, 0
        %v841 = vsel %vm743, %v567, 0
        %v844 = vsel %vm743, %v568, 0
        %v847 = vsel %vm743, %v569, 0
        %v850 = vsel %vm743, %v570, 0
        %v853 = vsel %vm743, %v571, 0
        %v856 = vsel %vm743, %v572, 0
        %v859 = vsel %vm743, %v573, 0
        %v862 = vsel %vm743, %v574, 0
        %v865 = vsel %vm743, %v575, 0
        %v868 = vsel %vm743, %v576, 0
        %v871 = vsel %vm743, %v577, 0
        %v874 = vsel %vm743, %v578, 0
        %v877 = vsel %vm743, %v579, 0
        %v880 = vsel %vm743, %v580, 0
        %v883 = vsel %vm743, %v581, 0
        %v886 = vsel %vm743, %v582, 0
        %v889 = vsel %vm743, %v583, 0
        %v892 = vsel %vm743, %v584, 0
        %v895 = vsel %vm743, %v585, 0
        %v898 = vsel %vm743, %v586, 0
        %v901 = vsel %vm743, %v587, 0
        %v904 = vsel %vm743, %v588, 0
        %v907 = vsel %vm743, %v589, 0
        %v910 = vsel %vm743, %v590, 0
        %v913 = vsel %vm743, %v591, 0
        %v916 = vsel %vm743, %v592, 0
        %v919 = vsel %vm743, %v593, 0
        %v922 = vsel %vm743, %v594, 0
        %v925 = vsel %vm743, %v595, 0
        %v928 = vsel %vm743, %v596, 0
        %v931 = vsel %vm743, %v597, 0
        %v934 = vsel %vm743, %v598, 0
        %v937 = vsel %vm743, %v599, 0
        %v940 = vsel %vm743, %v600, 0
        %v943 = vsel %vm743, %v601, 0
        %v946 = vsel %vm743, %v602, 0
        %v949 = vsel %vm743, %v603, 0
        %v952 = vsel %vm743, %v604, 0
        %v955 = vsel %vm743, %v605, 0
        %v958 = vsel %vm743, %v606, 0
        %v961 = vsel %vm743, %v607, 0
        %v964 = vsel %vm743, %v608, 0
        %v967 = vsel %vm743, %v609, 0
        %v970 = vsel %vm743, %v610, 0
        %v973 = vsel %vm743, %v611, 0
        %v976 = vsel %vm743, %v612, 0
        %v979 = vsel %vm743, %v613, 0
        %v982 = vsel %vm743, %v614, 0
        %v985 = vsel %vm743, %v615, 0
        %v988 = vsel %vm743, %v616, 0
        %v991 = vsel %vm743, %v617, 0
        %v994 = vsel %vm743, %v618, 0
        %v997 = vsel %vm743, %v619, 0
        %v1000 = vsel %vm743, %v620, 0
        %v1003 = vsel %vm743, %v621, 0
        %v1006 = vsel %vm743, %v622, 0
        %v1009 = vsel %vm743, %v623, 0
        %v1012 = vsel %vm743, %v624, 0
        %v1015 = vsel %vm743, %v625, 0
        %v1018 = vsel %vm743, %v626, 0
        %v1021 = vsel %vm743, %v627, 0
        %v1024 = vsel %vm743, %v628, 0
        %v1027 = vsel %vm743, %v629, 0
        %v1030 = vsel %vm743, %v630, 0
        %v1033 = vsel %vm743, %v631, 0
        %v1036 = vsel %vm743, %v632, 0
        %v1039 = vsel %vm743, %v633, 0
        %v1042 = vsel %vm743, %v634, 0
        %v1045 = vsel %vm743, %v635, 0
        %v1048 = vsel %vm743, %v636, 0
        %v1051 = vsel %vm743, %v637, 0
        %v1054 = vsel %vm743, %v638, 0
        %v1057 = vsel %vm743, %v639, 0
        %v1060 = vsel %vm743, %v640, 0
        %v1063 = vsel %vm743, %v641, 0
        %v1066 = vsel %vm743, %v642, 0
        %v1069 = vsel %vm743, %v643, 0
        %v1072 = vsel %vm743, %v644, 0
        %v1075 = vsel %vm743, %v645, 0
        %v1078 = vsel %vm743, %v646, 0
        %v1081 = vsel %vm743, %v647, 0
        %v1084 = vsel %vm743, %v648, 0
        %v1087 = vsel %vm743, %v649, 0
        %v1090 = vsel %vm743, %v650, 0
        %v1093 = vsel %vm743, %v651, 0
        %v1096 = vsel %vm743, %v652, 0
        %v1099 = vsel %vm743, %v653, 0
        %v1102 = vsel %vm743, %v654, 0
        %v1105 = vsel %vm743, %v655, 0
        %v1108 = vsel %vm743, %v656, 0
        %v1111 = vsel %vm743, %v657, 0
        %v1114 = vsel %vm743, %v658, 0
        %v1117 = vsel %vm743, %v659, 0
        %v1120 = vsel %vm743, %v660, 0
        %v1123 = vsel %vm743, %v661, 0
        %v1126 = vsel %vm743, %v662, 0
        %v1129 = vsel %vm743, %v663, 0
        %v1132 = vsel %vm743, %v664, 0
        %v1135 = vsel %vm743, %v665, 0
        %v1138 = vsel %vm743, %v666, 0
        %1140 = vmatpush.bf16.xpose.msra.mxu0 %v778
        %1141 = vmatpush.bf16.xpose.msra.mxu0 %v775
        %1142 = vmatpush.bf16.xpose.msra.mxu0 %v772
        %1143 = vmatpush.bf16.xpose.msra.mxu0 %v769
        %1144 = vmatpush.bf16.xpose.msra.mxu0 %v766
        %1145 = vmatpush.bf16.xpose.msra.mxu0 %v763
        %1146 = vmatpush.bf16.xpose.msra.mxu0 %v760
        %1147 = vmatpush.bf16.xpose.msra.mxu0 %v757
        %1148 = vmatmul.bf16.gmra.mxu0 %v745
        %v1149 = vpop.f32.mrf.mxu0
        %v1150 = vadd.f32 %v686, %v1149
        %v1151 = vpop.f32.mrf.mxu0
        %v1152 = vadd.f32 %v691, %v1151
        %1153 = vmatmul.bf16.gmra.mxu0 %v748
        %v1154 = vpop.f32.mrf.mxu0
        %v1155 = vadd.f32 %v696, %v1154
        %v1156 = vpop.f32.mrf.mxu0
        %v1157 = vadd.f32 %v701, %v1156
        %1158 = vmatmul.bf16.gmra.mxu0 %v751
        %v1159 = vpop.f32.mrf.mxu0
        %v1160 = vadd.f32 %v706, %v1159
        %v1161 = vpop.f32.mrf.mxu0
        %v1162 = vadd.f32 %v711, %v1161
        %1163 = vmatmul.bf16.gmra.mxu0 %v754
        %v1164 = vpop.f32.mrf.mxu0
        %v1165 = vadd.f32 %v716, %v1164
        %v1166 = vpop.f32.mrf.mxu0
        %v1167 = vadd.f32 %v721, %v1166
        %1168 = vdwg.mxu0
        %1169 = vmatpush.bf16.xpose.msra.mxu0 %v802
        %1170 = vmatpush.bf16.xpose.msra.mxu0 %v799
        %1171 = vmatpush.bf16.xpose.msra.mxu0 %v796
        %1172 = vmatpush.bf16.xpose.msra.mxu0 %v793
        %1173 = vmatpush.bf16.xpose.msra.mxu0 %v790
        %1174 = vmatpush.bf16.xpose.msra.mxu0 %v787
        %1175 = vmatpush.bf16.xpose.msra.mxu0 %v784
        %1176 = vmatpush.bf16.xpose.msra.mxu0 %v781
        %1177 = vmatmul.bf16.gmra.mxu0 %v745
        %v1178 = vpop.f32.mrf.mxu0
        %v1179 = vadd.f32 %v686, %v1178
        %v1180 = vpop.f32.mrf.mxu0
        %v1181 = vadd.f32 %v691, %v1180
        %1182 = vmatmul.bf16.gmra.mxu0 %v748
        %v1183 = vpop.f32.mrf.mxu0
        %v1184 = vadd.f32 %v696, %v1183
        %v1185 = vpop.f32.mrf.mxu0
        %v1186 = vadd.f32 %v701, %v1185
        %1187 = vmatmul.bf16.gmra.mxu0 %v751
        %v1188 = vpop.f32.mrf.mxu0
        %v1189 = vadd.f32 %v706, %v1188
        %v1190 = vpop.f32.mrf.mxu0
        %v1191 = vadd.f32 %v711, %v1190
        %1192 = vmatmul.bf16.gmra.mxu0 %v754
        %v1193 = vpop.f32.mrf.mxu0
        %v1194 = vadd.f32 %v716, %v1193
        %v1195 = vpop.f32.mrf.mxu0
        %v1196 = vadd.f32 %v721, %v1195
        %1197 = vdwg.mxu0
        %1198 = vmatpush.bf16.xpose.msra.mxu0 %v826
        %1199 = vmatpush.bf16.xpose.msra.mxu0 %v823
        %1200 = vmatpush.bf16.xpose.msra.mxu0 %v820
        %1201 = vmatpush.bf16.xpose.msra.mxu0 %v817
        %1202 = vmatpush.bf16.xpose.msra.mxu0 %v814
        %1203 = vmatpush.bf16.xpose.msra.mxu0 %v811
        %1204 = vmatpush.bf16.xpose.msra.mxu0 %v808
        %1205 = vmatpush.bf16.xpose.msra.mxu0 %v805
        %1206 = vmatmul.bf16.gmra.mxu0 %v745
        %v1207 = vpop.f32.mrf.mxu0
        %v1208 = vadd.f32 %v686, %v1207
        %v1209 = vpop.f32.mrf.mxu0
        %v1210 = vadd.f32 %v691, %v1209
        %1211 = vmatmul.bf16.gmra.mxu0 %v748
        %v1212 = vpop.f32.mrf.mxu0
        %v1213 = vadd.f32 %v696, %v1212
        %v1214 = vpop.f32.mrf.mxu0
        %v1215 = vadd.f32 %v701, %v1214
        %1216 = vmatmul.bf16.gmra.mxu0 %v751
        %v1217 = vpop.f32.mrf.mxu0
        %v1218 = vadd.f32 %v706, %v1217
        %v1219 = vpop.f32.mrf.mxu0
        %v1220 = vadd.f32 %v711, %v1219
        %1221 = vmatmul.bf16.gmra.mxu0 %v754
        %v1222 = vpop.f32.mrf.mxu0
        %v1223 = vadd.f32 %v716, %v1222
        %v1224 = vpop.f32.mrf.mxu0
        %v1225 = vadd.f32 %v721, %v1224
        %1226 = vdwg.mxu0
        %1227 = vmatpush.bf16.xpose.msra.mxu0 %v850
        %1228 = vmatpush.bf16.xpose.msra.mxu0 %v847
        %1229 = vmatpush.bf16.xpose.msra.mxu0 %v844
        %1230 = vmatpush.bf16.xpose.msra.mxu0 %v841
        %1231 = vmatpush.bf16.xpose.msra.mxu0 %v838
        %1232 = vmatpush.bf16.xpose.msra.mxu0 %v835
        %1233 = vmatpush.bf16.xpose.msra.mxu0 %v832
        %1234 = vmatpush.bf16.xpose.msra.mxu0 %v829
        %1235 = vmatmul.bf16.gmra.mxu0 %v745
        %v1236 = vpop.f32.mrf.mxu0
        %v1237 = vadd.f32 %v686, %v1236
        %v1238 = vpop.f32.mrf.mxu0
        %v1239 = vadd.f32 %v691, %v1238
        %1240 = vmatmul.bf16.gmra.mxu0 %v748
        %v1241 = vpop.f32.mrf.mxu0
        %v1242 = vadd.f32 %v696, %v1241
        %v1243 = vpop.f32.mrf.mxu0
        %v1244 = vadd.f32 %v701, %v1243
        %1245 = vmatmul.bf16.gmra.mxu0 %v751
        %v1246 = vpop.f32.mrf.mxu0
        %v1247 = vadd.f32 %v706, %v1246
        %v1248 = vpop.f32.mrf.mxu0
        %v1249 = vadd.f32 %v711, %v1248
        %1250 = vmatmul.bf16.gmra.mxu0 %v754
        %v1251 = vpop.f32.mrf.mxu0
        %v1252 = vadd.f32 %v716, %v1251
        %v1253 = vpop.f32.mrf.mxu0
        %v1254 = vadd.f32 %v721, %v1253
        %1255 = vdwg.mxu0
        %1256 = vmatpush.bf16.xpose.msra.mxu0 %v874
        %1257 = vmatpush.bf16.xpose.msra.mxu0 %v871
        %1258 = vmatpush.bf16.xpose.msra.mxu0 %v868
        %1259 = vmatpush.bf16.xpose.msra.mxu0 %v865
        %1260 = vmatpush.bf16.xpose.msra.mxu0 %v862
        %1261 = vmatpush.bf16.xpose.msra.mxu0 %v859
        %1262 = vmatpush.bf16.xpose.msra.mxu0 %v856
        %1263 = vmatpush.bf16.xpose.msra.mxu0 %v853
        %1264 = vmatmul.bf16.gmra.mxu0 %v745
        %v1265 = vpop.f32.mrf.mxu0
        %v1266 = vadd.f32 %v686, %v1265
        %v1267 = vpop.f32.mrf.mxu0
        %v1268 = vadd.f32 %v691, %v1267
        %1269 = vmatmul.bf16.gmra.mxu0 %v748
        %v1270 = vpop.f32.mrf.mxu0
        %v1271 = vadd.f32 %v696, %v1270
        %v1272 = vpop.f32.mrf.mxu0
        %v1273 = vadd.f32 %v701, %v1272
        %1274 = vmatmul.bf16.gmra.mxu0 %v751
        %v1275 = vpop.f32.mrf.mxu0
        %v1276 = vadd.f32 %v706, %v1275
        %v1277 = vpop.f32.mrf.mxu0
        %v1278 = vadd.f32 %v711, %v1277
        %1279 = vmatmul.bf16.gmra.mxu0 %v754
        %v1280 = vpop.f32.mrf.mxu0
        %v1281 = vadd.f32 %v716, %v1280
        %v1282 = vpop.f32.mrf.mxu0
        %v1283 = vadd.f32 %v721, %v1282
        %1284 = vdwg.mxu0
        %1285 = vmatpush.bf16.xpose.msra.mxu0 %v898
        %1286 = vmatpush.bf16.xpose.msra.mxu0 %v895
        %1287 = vmatpush.bf16.xpose.msra.mxu0 %v892
        %1288 = vmatpush.bf16.xpose.msra.mxu0 %v889
        %1289 = vmatpush.bf16.xpose.msra.mxu0 %v886
        %1290 = vmatpush.bf16.xpose.msra.mxu0 %v883
        %1291 = vmatpush.bf16.xpose.msra.mxu0 %v880
        %1292 = vmatpush.bf16.xpose.msra.mxu0 %v877
        %1293 = vmatmul.bf16.gmra.mxu0 %v745
        %v1294 = vpop.f32.mrf.mxu0
        %v1295 = vadd.f32 %v686, %v1294
        %v1296 = vpop.f32.mrf.mxu0
        %v1297 = vadd.f32 %v691, %v1296
        %1298 = vmatmul.bf16.gmra.mxu0 %v748
        %v1299 = vpop.f32.mrf.mxu0
        %v1300 = vadd.f32 %v696, %v1299
        %v1301 = vpop.f32.mrf.mxu0
        %v1302 = vadd.f32 %v701, %v1301
        %1303 = vmatmul.bf16.gmra.mxu0 %v751
        %v1304 = vpop.f32.mrf.mxu0
        %v1305 = vadd.f32 %v706, %v1304
        %v1306 = vpop.f32.mrf.mxu0
        %v1307 = vadd.f32 %v711, %v1306
        %1308 = vmatmul.bf16.gmra.mxu0 %v754
        %v1309 = vpop.f32.mrf.mxu0
        %v1310 = vadd.f32 %v716, %v1309
        %v1311 = vpop.f32.mrf.mxu0
        %v1312 = vadd.f32 %v721, %v1311
        %1313 = vdwg.mxu0
        %1314 = vmatpush.bf16.xpose.msra.mxu0 %v922
        %1315 = vmatpush.bf16.xpose.msra.mxu0 %v919
        %1316 = vmatpush.bf16.xpose.msra.mxu0 %v916
        %1317 = vmatpush.bf16.xpose.msra.mxu0 %v913
        %1318 = vmatpush.bf16.xpose.msra.mxu0 %v910
        %1319 = vmatpush.bf16.xpose.msra.mxu0 %v907
        %1320 = vmatpush.bf16.xpose.msra.mxu0 %v904
        %1321 = vmatpush.bf16.xpose.msra.mxu0 %v901
        %1322 = vmatmul.bf16.gmra.mxu0 %v745
        %v1323 = vpop.f32.mrf.mxu0
        %v1324 = vadd.f32 %v686, %v1323
        %v1325 = vpop.f32.mrf.mxu0
        %v1326 = vadd.f32 %v691, %v1325
        %1327 = vmatmul.bf16.gmra.mxu0 %v748
        %v1328 = vpop.f32.mrf.mxu0
        %v1329 = vadd.f32 %v696, %v1328
        %v1330 = vpop.f32.mrf.mxu0
        %v1331 = vadd.f32 %v701, %v1330
        %1332 = vmatmul.bf16.gmra.mxu0 %v751
        %v1333 = vpop.f32.mrf.mxu0
        %v1334 = vadd.f32 %v706, %v1333
        %v1335 = vpop.f32.mrf.mxu0
        %v1336 = vadd.f32 %v711, %v1335
        %1337 = vmatmul.bf16.gmra.mxu0 %v754
        %v1338 = vpop.f32.mrf.mxu0
        %v1339 = vadd.f32 %v716, %v1338
        %v1340 = vpop.f32.mrf.mxu0
        %v1341 = vadd.f32 %v721, %v1340
        %1342 = vdwg.mxu0
        %1343 = vmatpush.bf16.xpose.msra.mxu0 %v946
        %1344 = vmatpush.bf16.xpose.msra.mxu0 %v943
        %1345 = vmatpush.bf16.xpose.msra.mxu0 %v940
        %1346 = vmatpush.bf16.xpose.msra.mxu0 %v937
        %1347 = vmatpush.bf16.xpose.msra.mxu0 %v934
        %1348 = vmatpush.bf16.xpose.msra.mxu0 %v931
        %1349 = vmatpush.bf16.xpose.msra.mxu0 %v928
        %1350 = vmatpush.bf16.xpose.msra.mxu0 %v925
        %1351 = vmatmul.bf16.gmra.mxu0 %v745
        %v1352 = vpop.f32.mrf.mxu0
        %v1353 = vadd.f32 %v686, %v1352
        %v1354 = vpop.f32.mrf.mxu0
        %v1355 = vadd.f32 %v691, %v1354
        %1356 = vmatmul.bf16.gmra.mxu0 %v748
        %v1357 = vpop.f32.mrf.mxu0
        %v1358 = vadd.f32 %v696, %v1357
        %v1359 = vpop.f32.mrf.mxu0
        %v1360 = vadd.f32 %v701, %v1359
        %1361 = vmatmul.bf16.gmra.mxu0 %v751
        %v1362 = vpop.f32.mrf.mxu0
        %v1363 = vadd.f32 %v706, %v1362
        %v1364 = vpop.f32.mrf.mxu0
        %v1365 = vadd.f32 %v711, %v1364
        %1366 = vmatmul.bf16.gmra.mxu0 %v754
        %v1367 = vpop.f32.mrf.mxu0
        %v1368 = vadd.f32 %v716, %v1367
        %v1369 = vpop.f32.mrf.mxu0
        %v1370 = vadd.f32 %v721, %v1369
        %1371 = vdwg.mxu0
        %1372 = vmatpush.bf16.xpose.msra.mxu0 %v970
        %1373 = vmatpush.bf16.xpose.msra.mxu0 %v967
        %1374 = vmatpush.bf16.xpose.msra.mxu0 %v964
        %1375 = vmatpush.bf16.xpose.msra.mxu0 %v961
        %1376 = vmatpush.bf16.xpose.msra.mxu0 %v958
        %1377 = vmatpush.bf16.xpose.msra.mxu0 %v955
        %1378 = vmatpush.bf16.xpose.msra.mxu0 %v952
        %1379 = vmatpush.bf16.xpose.msra.mxu0 %v949
        %1380 = vmatmul.bf16.gmra.mxu0 %v745
        %v1381 = vpop.f32.mrf.mxu0
        %v1382 = vadd.f32 %v686, %v1381
        %v1383 = vpop.f32.mrf.mxu0
        %v1384 = vadd.f32 %v691, %v1383
        %1385 = vmatmul.bf16.gmra.mxu0 %v748
        %v1386 = vpop.f32.mrf.mxu0
        %v1387 = vadd.f32 %v696, %v1386
        %v1388 = vpop.f32.mrf.mxu0
        %v1389 = vadd.f32 %v701, %v1388
        %1390 = vmatmul.bf16.gmra.mxu0 %v751
        %v1391 = vpop.f32.mrf.mxu0
        %v1392 = vadd.f32 %v706, %v1391
        %v1393 = vpop.f32.mrf.mxu0
        %v1394 = vadd.f32 %v711, %v1393
        %1395 = vmatmul.bf16.gmra.mxu0 %v754
        %v1396 = vpop.f32.mrf.mxu0
        %v1397 = vadd.f32 %v716, %v1396
        %v1398 = vpop.f32.mrf.mxu0
        %v1399 = vadd.f32 %v721, %v1398
        %1400 = vdwg.mxu0
        %1401 = vmatpush.bf16.xpose.msra.mxu0 %v994
        %1402 = vmatpush.bf16.xpose.msra.mxu0 %v991
        %1403 = vmatpush.bf16.xpose.msra.mxu0 %v988
        %1404 = vmatpush.bf16.xpose.msra.mxu0 %v985
        %1405 = vmatpush.bf16.xpose.msra.mxu0 %v982
        %1406 = vmatpush.bf16.xpose.msra.mxu0 %v979
        %1407 = vmatpush.bf16.xpose.msra.mxu0 %v976
        %1408 = vmatpush.bf16.xpose.msra.mxu0 %v973
        %1409 = vmatmul.bf16.gmra.mxu0 %v745
        %v1410 = vpop.f32.mrf.mxu0
        %v1411 = vadd.f32 %v686, %v1410
        %v1412 = vpop.f32.mrf.mxu0
        %v1413 = vadd.f32 %v691, %v1412
        %1414 = vmatmul.bf16.gmra.mxu0 %v748
        %v1415 = vpop.f32.mrf.mxu0
        %v1416 = vadd.f32 %v696, %v1415
        %v1417 = vpop.f32.mrf.mxu0
        %v1418 = vadd.f32 %v701, %v1417
        %1419 = vmatmul.bf16.gmra.mxu0 %v751
        %v1420 = vpop.f32.mrf.mxu0
        %v1421 = vadd.f32 %v706, %v1420
        %v1422 = vpop.f32.mrf.mxu0
        %v1423 = vadd.f32 %v711, %v1422
        %1424 = vmatmul.bf16.gmra.mxu0 %v754
        %v1425 = vpop.f32.mrf.mxu0
        %v1426 = vadd.f32 %v716, %v1425
        %v1427 = vpop.f32.mrf.mxu0
        %v1428 = vadd.f32 %v721, %v1427
        %1429 = vdwg.mxu0
        %1430 = vmatpush.bf16.xpose.msra.mxu0 %v1018
        %1431 = vmatpush.bf16.xpose.msra.mxu0 %v1015
        %1432 = vmatpush.bf16.xpose.msra.mxu0 %v1012
        %1433 = vmatpush.bf16.xpose.msra.mxu0 %v1009
        %1434 = vmatpush.bf16.xpose.msra.mxu0 %v1006
        %1435 = vmatpush.bf16.xpose.msra.mxu0 %v1003
        %1436 = vmatpush.bf16.xpose.msra.mxu0 %v1000
        %1437 = vmatpush.bf16.xpose.msra.mxu0 %v997
        %1438 = vmatmul.bf16.gmra.mxu0 %v745
        %v1439 = vpop.f32.mrf.mxu0
        %v1440 = vadd.f32 %v686, %v1439
        %v1441 = vpop.f32.mrf.mxu0
        %v1442 = vadd.f32 %v691, %v1441
        %1443 = vmatmul.bf16.gmra.mxu0 %v748
        %v1444 = vpop.f32.mrf.mxu0
        %v1445 = vadd.f32 %v696, %v1444
        %v1446 = vpop.f32.mrf.mxu0
        %v1447 = vadd.f32 %v701, %v1446
        %1448 = vmatmul.bf16.gmra.mxu0 %v751
        %v1449 = vpop.f32.mrf.mxu0
        %v1450 = vadd.f32 %v706, %v1449
        %v1451 = vpop.f32.mrf.mxu0
        %v1452 = vadd.f32 %v711, %v1451
        %1453 = vmatmul.bf16.gmra.mxu0 %v754
        %v1454 = vpop.f32.mrf.mxu0
        %v1455 = vadd.f32 %v716, %v1454
        %v1456 = vpop.f32.mrf.mxu0
        %v1457 = vadd.f32 %v721, %v1456
        %1458 = vdwg.mxu0
        %1459 = vmatpush.bf16.xpose.msra.mxu0 %v1042
        %1460 = vmatpush.bf16.xpose.msra.mxu0 %v1039
        %1461 = vmatpush.bf16.xpose.msra.mxu0 %v1036
        %1462 = vmatpush.bf16.xpose.msra.mxu0 %v1033
        %1463 = vmatpush.bf16.xpose.msra.mxu0 %v1030
        %1464 = vmatpush.bf16.xpose.msra.mxu0 %v1027
        %1465 = vmatpush.bf16.xpose.msra.mxu0 %v1024
        %1466 = vmatpush.bf16.xpose.msra.mxu0 %v1021
        %1467 = vmatmul.bf16.gmra.mxu0 %v745
        %v1468 = vpop.f32.mrf.mxu0
        %v1469 = vadd.f32 %v686, %v1468
        %v1470 = vpop.f32.mrf.mxu0
        %v1471 = vadd.f32 %v691, %v1470
        %1472 = vmatmul.bf16.gmra.mxu0 %v748
        %v1473 = vpop.f32.mrf.mxu0
        %v1474 = vadd.f32 %v696, %v1473
        %v1475 = vpop.f32.mrf.mxu0
        %v1476 = vadd.f32 %v701, %v1475
        %1477 = vmatmul.bf16.gmra.mxu0 %v751
        %v1478 = vpop.f32.mrf.mxu0
        %v1479 = vadd.f32 %v706, %v1478
        %v1480 = vpop.f32.mrf.mxu0
        %v1481 = vadd.f32 %v711, %v1480
        %1482 = vmatmul.bf16.gmra.mxu0 %v754
        %v1483 = vpop.f32.mrf.mxu0
        %v1484 = vadd.f32 %v716, %v1483
        %v1485 = vpop.f32.mrf.mxu0
        %v1486 = vadd.f32 %v721, %v1485
        %1487 = vdwg.mxu0
        %1488 = vmatpush.bf16.xpose.msra.mxu0 %v1066
        %1489 = vmatpush.bf16.xpose.msra.mxu0 %v1063
        %1490 = vmatpush.bf16.xpose.msra.mxu0 %v1060
        %1491 = vmatpush.bf16.xpose.msra.mxu0 %v1057
        %1492 = vmatpush.bf16.xpose.msra.mxu0 %v1054
        %1493 = vmatpush.bf16.xpose.msra.mxu0 %v1051
        %1494 = vmatpush.bf16.xpose.msra.mxu0 %v1048
        %1495 = vmatpush.bf16.xpose.msra.mxu0 %v1045
        %1496 = vmatmul.bf16.gmra.mxu0 %v745
        %v1497 = vpop.f32.mrf.mxu0
        %v1498 = vadd.f32 %v686, %v1497
        %v1499 = vpop.f32.mrf.mxu0
        %v1500 = vadd.f32 %v691, %v1499
        %1501 = vmatmul.bf16.gmra.mxu0 %v748
        %v1502 = vpop.f32.mrf.mxu0
        %v1503 = vadd.f32 %v696, %v1502
        %v1504 = vpop.f32.mrf.mxu0
        %v1505 = vadd.f32 %v701, %v1504
        %1506 = vmatmul.bf16.gmra.mxu0 %v751
        %v1507 = vpop.f32.mrf.mxu0
        %v1508 = vadd.f32 %v706, %v1507
        %v1509 = vpop.f32.mrf.mxu0
        %v1510 = vadd.f32 %v711, %v1509
        %1511 = vmatmul.bf16.gmra.mxu0 %v754
        %v1512 = vpop.f32.mrf.mxu0
        %v1513 = vadd.f32 %v716, %v1512
        %v1514 = vpop.f32.mrf.mxu0
        %v1515 = vadd.f32 %v721, %v1514
        %1516 = vdwg.mxu0
        %1517 = vmatpush.bf16.xpose.msra.mxu0 %v1090
        %1518 = vmatpush.bf16.xpose.msra.mxu0 %v1087
        %1519 = vmatpush.bf16.xpose.msra.mxu0 %v1084
        %1520 = vmatpush.bf16.xpose.msra.mxu0 %v1081
        %1521 = vmatpush.bf16.xpose.msra.mxu0 %v1078
        %1522 = vmatpush.bf16.xpose.msra.mxu0 %v1075
        %1523 = vmatpush.bf16.xpose.msra.mxu0 %v1072
        %1524 = vmatpush.bf16.xpose.msra.mxu0 %v1069
        %1525 = vmatmul.bf16.gmra.mxu0 %v745
        %v1526 = vpop.f32.mrf.mxu0
        %v1527 = vadd.f32 %v686, %v1526
        %v1528 = vpop.f32.mrf.mxu0
        %v1529 = vadd.f32 %v691, %v1528
        %1530 = vmatmul.bf16.gmra.mxu0 %v748
        %v1531 = vpop.f32.mrf.mxu0
        %v1532 = vadd.f32 %v696, %v1531
        %v1533 = vpop.f32.mrf.mxu0
        %v1534 = vadd.f32 %v701, %v1533
        %1535 = vmatmul.bf16.gmra.mxu0 %v751
        %v1536 = vpop.f32.mrf.mxu0
        %v1537 = vadd.f32 %v706, %v1536
        %v1538 = vpop.f32.mrf.mxu0
        %v1539 = vadd.f32 %v711, %v1538
        %1540 = vmatmul.bf16.gmra.mxu0 %v754
        %v1541 = vpop.f32.mrf.mxu0
        %v1542 = vadd.f32 %v716, %v1541
        %v1543 = vpop.f32.mrf.mxu0
        %v1544 = vadd.f32 %v721, %v1543
        %1545 = vdwg.mxu0
        %1546 = vmatpush.bf16.xpose.msra.mxu0 %v1114
        %1547 = vmatpush.bf16.xpose.msra.mxu0 %v1111
        %1548 = vmatpush.bf16.xpose.msra.mxu0 %v1108
        %1549 = vmatpush.bf16.xpose.msra.mxu0 %v1105
        %1550 = vmatpush.bf16.xpose.msra.mxu0 %v1102
        %1551 = vmatpush.bf16.xpose.msra.mxu0 %v1099
        %1552 = vmatpush.bf16.xpose.msra.mxu0 %v1096
        %1553 = vmatpush.bf16.xpose.msra.mxu0 %v1093
        %1554 = vmatmul.bf16.gmra.mxu0 %v745
        %v1555 = vpop.f32.mrf.mxu0
        %v1556 = vadd.f32 %v686, %v1555
        %v1557 = vpop.f32.mrf.mxu0
        %v1558 = vadd.f32 %v691, %v1557
        %1559 = vmatmul.bf16.gmra.mxu0 %v748
        %v1560 = vpop.f32.mrf.mxu0
        %v1561 = vadd.f32 %v696, %v1560
        %v1562 = vpop.f32.mrf.mxu0
        %v1563 = vadd.f32 %v701, %v1562
        %1564 = vmatmul.bf16.gmra.mxu0 %v751
        %v1565 = vpop.f32.mrf.mxu0
        %v1566 = vadd.f32 %v706, %v1565
        %v1567 = vpop.f32.mrf.mxu0
        %v1568 = vadd.f32 %v711, %v1567
        %1569 = vmatmul.bf16.gmra.mxu0 %v754
        %v1570 = vpop.f32.mrf.mxu0
        %v1571 = vadd.f32 %v716, %v1570
        %v1572 = vpop.f32.mrf.mxu0
        %v1573 = vadd.f32 %v721, %v1572
        %1574 = vdwg.mxu0
        %1575 = vmatpush.bf16.xpose.msra.mxu0 %v1138
        %1576 = vmatpush.bf16.xpose.msra.mxu0 %v1135
        %1577 = vmatpush.bf16.xpose.msra.mxu0 %v1132
        %1578 = vmatpush.bf16.xpose.msra.mxu0 %v1129
        %1579 = vmatpush.bf16.xpose.msra.mxu0 %v1126
        %1580 = vmatpush.bf16.xpose.msra.mxu0 %v1123
        %1581 = vmatpush.bf16.xpose.msra.mxu0 %v1120
        %1582 = vmatpush.bf16.xpose.msra.mxu0 %v1117
        %1583 = vmatmul.bf16.gmra.mxu0 %v745
        %v1584 = vpop.f32.mrf.mxu0
        %v1585 = vadd.f32 %v686, %v1584
        %v1586 = vpop.f32.mrf.mxu0
        %v1587 = vadd.f32 %v691, %v1586
        %1588 = vmatmul.bf16.gmra.mxu0 %v748
        %v1589 = vpop.f32.mrf.mxu0
        %v1590 = vadd.f32 %v696, %v1589
        %v1591 = vpop.f32.mrf.mxu0
        %v1592 = vadd.f32 %v701, %v1591
        %1593 = vmatmul.bf16.gmra.mxu0 %v751
        %v1594 = vpop.f32.mrf.mxu0
        %v1595 = vadd.f32 %v706, %v1594
        %v1596 = vpop.f32.mrf.mxu0
        %v1597 = vadd.f32 %v711, %v1596
        %1598 = vmatmul.bf16.gmra.mxu0 %v754
        %v1599 = vpop.f32.mrf.mxu0
        %v1600 = vadd.f32 %v716, %v1599
        %v1601 = vpop.f32.mrf.mxu0
        %v1602 = vadd.f32 %v721, %v1601
        %1603 = vdwg.mxu0
        %v1604 = vmul.f32 %v1150, 0.5
        %v1605 = vmul.f32 %v1179, 0.5
        %v1606 = vmul.f32 %v1208, 0.5
        %v1607 = vmul.f32 %v1237, 0.5
        %v1608 = vmul.f32 %v1266, 0.5
        %v1609 = vmul.f32 %v1295, 0.5
        %v1610 = vmul.f32 %v1324, 0.5
        %v1611 = vmul.f32 %v1353, 0.5
        %v1612 = vmul.f32 %v1382, 0.5
        %v1613 = vmul.f32 %v1411, 0.5
        %v1614 = vmul.f32 %v1440, 0.5
        %v1615 = vmul.f32 %v1469, 0.5
        %v1616 = vmul.f32 %v1498, 0.5
        %v1617 = vmul.f32 %v1527, 0.5
        %v1618 = vmul.f32 %v1556, 0.5
        %v1619 = vmul.f32 %v1585, 0.5
        %v1620 = vmul.f32 %v1152, 0.5
        %v1621 = vmul.f32 %v1181, 0.5
        %v1622 = vmul.f32 %v1210, 0.5
        %v1623 = vmul.f32 %v1239, 0.5
        %v1624 = vmul.f32 %v1268, 0.5
        %v1625 = vmul.f32 %v1297, 0.5
        %v1626 = vmul.f32 %v1326, 0.5
        %v1627 = vmul.f32 %v1355, 0.5
        %v1628 = vmul.f32 %v1384, 0.5
        %v1629 = vmul.f32 %v1413, 0.5
        %v1630 = vmul.f32 %v1442, 0.5
        %v1631 = vmul.f32 %v1471, 0.5
        %v1632 = vmul.f32 %v1500, 0.5
        %v1633 = vmul.f32 %v1529, 0.5
        %v1634 = vmul.f32 %v1558, 0.5
        %v1635 = vmul.f32 %v1587, 0.5
        %v1636 = vmul.f32 %v1155, 0.5
        %v1637 = vmul.f32 %v1184, 0.5
        %v1638 = vmul.f32 %v1213, 0.5
        %v1639 = vmul.f32 %v1242, 0.5
        %v1640 = vmul.f32 %v1271, 0.5
        %v1641 = vmul.f32 %v1300, 0.5
        %v1642 = vmul.f32 %v1329, 0.5
        %v1643 = vmul.f32 %v1358, 0.5
        %v1644 = vmul.f32 %v1387, 0.5
        %v1645 = vmul.f32 %v1416, 0.5
        %v1646 = vmul.f32 %v1445, 0.5
        %v1647 = vmul.f32 %v1474, 0.5
        %v1648 = vmul.f32 %v1503, 0.5
        %v1649 = vmul.f32 %v1532, 0.5
        %v1650 = vmul.f32 %v1561, 0.5
        %v1651 = vmul.f32 %v1590, 0.5
        %v1652 = vmul.f32 %v1157, 0.5
        %v1653 = vmul.f32 %v1186, 0.5
        %v1654 = vmul.f32 %v1215, 0.5
        %v1655 = vmul.f32 %v1244, 0.5
        %v1656 = vmul.f32 %v1273, 0.5
        %v1657 = vmul.f32 %v1302, 0.5
        %v1658 = vmul.f32 %v1331, 0.5
        %v1659 = vmul.f32 %v1360, 0.5
        %v1660 = vmul.f32 %v1389, 0.5
        %v1661 = vmul.f32 %v1418, 0.5
        %v1662 = vmul.f32 %v1447, 0.5
        %v1663 = vmul.f32 %v1476, 0.5
        %v1664 = vmul.f32 %v1505, 0.5
        %v1665 = vmul.f32 %v1534, 0.5
        %v1666 = vmul.f32 %v1563, 0.5
        %v1667 = vmul.f32 %v1592, 0.5
        %v1668 = vmul.f32 %v1160, 0.5
        %v1669 = vmul.f32 %v1189, 0.5
        %v1670 = vmul.f32 %v1218, 0.5
        %v1671 = vmul.f32 %v1247, 0.5
        %v1672 = vmul.f32 %v1276, 0.5
        %v1673 = vmul.f32 %v1305, 0.5
        %v1674 = vmul.f32 %v1334, 0.5
        %v1675 = vmul.f32 %v1363, 0.5
        %v1676 = vmul.f32 %v1392, 0.5
        %v1677 = vmul.f32 %v1421, 0.5
        %v1678 = vmul.f32 %v1450, 0.5
        %v1679 = vmul.f32 %v1479, 0.5
        %v1680 = vmul.f32 %v1508, 0.5
        %v1681 = vmul.f32 %v1537, 0.5
        %v1682 = vmul.f32 %v1566, 0.5
        %v1683 = vmul.f32 %v1595, 0.5
        %v1684 = vmul.f32 %v1162, 0.5
        %v1685 = vmul.f32 %v1191, 0.5
        %v1686 = vmul.f32 %v1220, 0.5
        %v1687 = vmul.f32 %v1249, 0.5
        %v1688 = vmul.f32 %v1278, 0.5
        %v1689 = vmul.f32 %v1307, 0.5
        %v1690 = vmul.f32 %v1336, 0.5
        %v1691 = vmul.f32 %v1365, 0.5
        %v1692 = vmul.f32 %v1394, 0.5
        %v1693 = vmul.f32 %v1423, 0.5
        %v1694 = vmul.f32 %v1452, 0.5
        %v1695 = vmul.f32 %v1481, 0.5
        %v1696 = vmul.f32 %v1510, 0.5
        %v1697 = vmul.f32 %v1539, 0.5
        %v1698 = vmul.f32 %v1568, 0.5
        %v1699 = vmul.f32 %v1597, 0.5
        %v1700 = vmul.f32 %v1165, 0.5
        %v1701 = vmul.f32 %v1194, 0.5
        %v1702 = vmul.f32 %v1223, 0.5
        %v1703 = vmul.f32 %v1252, 0.5
        %v1704 = vmul.f32 %v1281, 0.5
        %v1705 = vmul.f32 %v1310, 0.5
        %v1706 = vmul.f32 %v1339, 0.5
        %v1707 = vmul.f32 %v1368, 0.5
        %v1708 = vmul.f32 %v1397, 0.5
        %v1709 = vmul.f32 %v1426, 0.5
        %v1710 = vmul.f32 %v1455, 0.5
        %v1711 = vmul.f32 %v1484, 0.5
        %v1712 = vmul.f32 %v1513, 0.5
        %v1713 = vmul.f32 %v1542, 0.5
        %v1714 = vmul.f32 %v1571, 0.5
        %v1715 = vmul.f32 %v1600, 0.5
        %v1716 = vmul.f32 %v1167, 0.5
        %v1717 = vmul.f32 %v1196, 0.5
        %v1718 = vmul.f32 %v1225, 0.5
        %v1719 = vmul.f32 %v1254, 0.5
        %v1720 = vmul.f32 %v1283, 0.5
        %v1721 = vmul.f32 %v1312, 0.5
        %v1722 = vmul.f32 %v1341, 0.5
        %v1723 = vmul.f32 %v1370, 0.5
        %v1724 = vmul.f32 %v1399, 0.5
        %v1725 = vmul.f32 %v1428, 0.5
        %v1726 = vmul.f32 %v1457, 0.5
        %v1727 = vmul.f32 %v1486, 0.5
        %v1728 = vmul.f32 %v1515, 0.5
        %v1729 = vmul.f32 %v1544, 0.5
        %v1730 = vmul.f32 %v1573, 0.5
        %v1731 = vmul.f32 %v1602, 0.5
        %v1732 = vmul.f32 %v1150, 0.044715
        %v1733 = vmul.f32 %v1179, 0.044715
        %v1734 = vmul.f32 %v1208, 0.044715
        %v1735 = vmul.f32 %v1237, 0.044715
        %v1736 = vmul.f32 %v1266, 0.044715
        %v1737 = vmul.f32 %v1295, 0.044715
        %v1738 = vmul.f32 %v1324, 0.044715
        %v1739 = vmul.f32 %v1353, 0.044715
        %v1740 = vmul.f32 %v1382, 0.044715
        %v1741 = vmul.f32 %v1411, 0.044715
        %v1742 = vmul.f32 %v1440, 0.044715
        %v1743 = vmul.f32 %v1469, 0.044715
        %v1744 = vmul.f32 %v1498, 0.044715
        %v1745 = vmul.f32 %v1527, 0.044715
        %v1746 = vmul.f32 %v1556, 0.044715
        %v1747 = vmul.f32 %v1585, 0.044715
        %v1748 = vmul.f32 %v1152, 0.044715
        %v1749 = vmul.f32 %v1181, 0.044715
        %v1750 = vmul.f32 %v1210, 0.044715
        %v1751 = vmul.f32 %v1239, 0.044715
        %v1752 = vmul.f32 %v1268, 0.044715
        %v1753 = vmul.f32 %v1297, 0.044715
        %v1754 = vmul.f32 %v1326, 0.044715
        %v1755 = vmul.f32 %v1355, 0.044715
        %v1756 = vmul.f32 %v1384, 0.044715
        %v1757 = vmul.f32 %v1413, 0.044715
        %v1758 = vmul.f32 %v1442, 0.044715
        %v1759 = vmul.f32 %v1471, 0.044715
        %v1760 = vmul.f32 %v1500, 0.044715
        %v1761 = vmul.f32 %v1529, 0.044715
        %v1762 = vmul.f32 %v1558, 0.044715
        %v1763 = vmul.f32 %v1587, 0.044715
        %v1764 = vmul.f32 %v1155, 0.044715
        %v1765 = vmul.f32 %v1184, 0.044715
        %v1766 = vmul.f32 %v1213, 0.044715
        %v1767 = vmul.f32 %v1242, 0.044715
        %v1768 = vmul.f32 %v1271, 0.044715
        %v1769 = vmul.f32 %v1300, 0.044715
        %v1770 = vmul.f32 %v1329, 0.044715
        %v1771 = vmul.f32 %v1358, 0.044715
        %v1772 = vmul.f32 %v1387, 0.044715
        %v1773 = vmul.f32 %v1416, 0.044715
        %v1774 = vmul.f32 %v1445, 0.044715
        %v1775 = vmul.f32 %v1474, 0.044715
        %v1776 = vmul.f32 %v1503, 0.044715
        %v1777 = vmul.f32 %v1532, 0.044715
        %v1778 = vmul.f32 %v1561, 0.044715
        %v1779 = vmul.f32 %v1590, 0.044715
        %v1780 = vmul.f32 %v1157, 0.044715
        %v1781 = vmul.f32 %v1186, 0.044715
        %v1782 = vmul.f32 %v1215, 0.044715
        %v1783 = vmul.f32 %v1244, 0.044715
        %v1784 = vmul.f32 %v1273, 0.044715
        %v1785 = vmul.f32 %v1302, 0.044715
        %v1786 = vmul.f32 %v1331, 0.044715
        %v1787 = vmul.f32 %v1360, 0.044715
        %v1788 = vmul.f32 %v1389, 0.044715
        %v1789 = vmul.f32 %v1418, 0.044715
        %v1790 = vmul.f32 %v1447, 0.044715
        %v1791 = vmul.f32 %v1476, 0.044715
        %v1792 = vmul.f32 %v1505, 0.044715
        %v1793 = vmul.f32 %v1534, 0.044715
        %v1794 = vmul.f32 %v1563, 0.044715
        %v1795 = vmul.f32 %v1592, 0.044715
        %v1796 = vmul.f32 %v1160, 0.044715
        %v1797 = vmul.f32 %v1189, 0.044715
        %v1798 = vmul.f32 %v1218, 0.044715
        %v1799 = vmul.f32 %v1247, 0.044715
        %v1800 = vmul.f32 %v1276, 0.044715
        %v1801 = vmul.f32 %v1305, 0.044715
        %v1802 = vmul.f32 %v1334, 0.044715
        %v1803 = vmul.f32 %v1363, 0.044715
        %v1804 = vmul.f32 %v1392, 0.044715
        %v1805 = vmul.f32 %v1421, 0.044715
        %v1806 = vmul.f32 %v1450, 0.044715
        %v1807 = vmul.f32 %v1479, 0.044715
        %v1808 = vmul.f32 %v1508, 0.044715
        %v1809 = vmul.f32 %v1537, 0.044715
        %v1810 = vmul.f32 %v1566, 0.044715
        %v1811 = vmul.f32 %v1595, 0.044715
        %v1812 = vmul.f32 %v1162, 0.044715
        %v1813 = vmul.f32 %v1191, 0.044715
        %v1814 = vmul.f32 %v1220, 0.044715
        %v1815 = vmul.f32 %v1249, 0.044715
        %v1816 = vmul.f32 %v1278, 0.044715
        %v1817 = vmul.f32 %v1307, 0.044715
        %v1818 = vmul.f32 %v1336, 0.044715
        %v1819 = vmul.f32 %v1365, 0.044715
        %v1820 = vmul.f32 %v1394, 0.044715
        %v1821 = vmul.f32 %v1423, 0.044715
        %v1822 = vmul.f32 %v1452, 0.044715
        %v1823 = vmul.f32 %v1481, 0.044715
        %v1824 = vmul.f32 %v1510, 0.044715
        %v1825 = vmul.f32 %v1539, 0.044715
        %v1826 = vmul.f32 %v1568, 0.044715
        %v1827 = vmul.f32 %v1597, 0.044715
        %v1828 = vmul.f32 %v1165, 0.044715
        %v1829 = vmul.f32 %v1194, 0.044715
        %v1830 = vmul.f32 %v1223, 0.044715
        %v1831 = vmul.f32 %v1252, 0.044715
        %v1832 = vmul.f32 %v1281, 0.044715
        %v1833 = vmul.f32 %v1310, 0.044715
        %v1834 = vmul.f32 %v1339, 0.044715
        %v1835 = vmul.f32 %v1368, 0.044715
        %v1836 = vmul.f32 %v1397, 0.044715
        %v1837 = vmul.f32 %v1426, 0.044715
        %v1838 = vmul.f32 %v1455, 0.044715
        %v1839 = vmul.f32 %v1484, 0.044715
        %v1840 = vmul.f32 %v1513, 0.044715
        %v1841 = vmul.f32 %v1542, 0.044715
        %v1842 = vmul.f32 %v1571, 0.044715
        %v1843 = vmul.f32 %v1600, 0.044715
        %v1844 = vmul.f32 %v1167, 0.044715
        %v1845 = vmul.f32 %v1196, 0.044715
        %v1846 = vmul.f32 %v1225, 0.044715
        %v1847 = vmul.f32 %v1254, 0.044715
        %v1848 = vmul.f32 %v1283, 0.044715
        %v1849 = vmul.f32 %v1312, 0.044715
        %v1850 = vmul.f32 %v1341, 0.044715
        %v1851 = vmul.f32 %v1370, 0.044715
        %v1852 = vmul.f32 %v1399, 0.044715
        %v1853 = vmul.f32 %v1428, 0.044715
        %v1854 = vmul.f32 %v1457, 0.044715
        %v1855 = vmul.f32 %v1486, 0.044715
        %v1856 = vmul.f32 %v1515, 0.044715
        %v1857 = vmul.f32 %v1544, 0.044715
        %v1858 = vmul.f32 %v1573, 0.044715
        %v1859 = vmul.f32 %v1602, 0.044715
        %v1860 = vmul.f32 %v1732, %v1150
        %v1861 = vmul.f32 %v1733, %v1179
        %v1862 = vmul.f32 %v1734, %v1208
        %v1863 = vmul.f32 %v1735, %v1237
        %v1864 = vmul.f32 %v1736, %v1266
        %v1865 = vmul.f32 %v1737, %v1295
        %v1866 = vmul.f32 %v1738, %v1324
        %v1867 = vmul.f32 %v1739, %v1353
        %v1868 = vmul.f32 %v1740, %v1382
        %v1869 = vmul.f32 %v1741, %v1411
        %v1870 = vmul.f32 %v1742, %v1440
        %v1871 = vmul.f32 %v1743, %v1469
        %v1872 = vmul.f32 %v1744, %v1498
        %v1873 = vmul.f32 %v1745, %v1527
        %v1874 = vmul.f32 %v1746, %v1556
        %v1875 = vmul.f32 %v1747, %v1585
        %v1876 = vmul.f32 %v1748, %v1152
        %v1877 = vmul.f32 %v1749, %v1181
        %v1878 = vmul.f32 %v1750, %v1210
        %v1879 = vmul.f32 %v1751, %v1239
        %v1880 = vmul.f32 %v1752, %v1268
        %v1881 = vmul.f32 %v1753, %v1297
        %v1882 = vmul.f32 %v1754, %v1326
        %v1883 = vmul.f32 %v1755, %v1355
        %v1884 = vmul.f32 %v1756, %v1384
        %v1885 = vmul.f32 %v1757, %v1413
        %v1886 = vmul.f32 %v1758, %v1442
        %v1887 = vmul.f32 %v1759, %v1471
        %v1888 = vmul.f32 %v1760, %v1500
        %v1889 = vmul.f32 %v1761, %v1529
        %v1890 = vmul.f32 %v1762, %v1558
        %v1891 = vmul.f32 %v1763, %v1587
        %v1892 = vmul.f32 %v1764, %v1155
        %v1893 = vmul.f32 %v1765, %v1184
        %v1894 = vmul.f32 %v1766, %v1213
        %v1895 = vmul.f32 %v1767, %v1242
        %v1896 = vmul.f32 %v1768, %v1271
        %v1897 = vmul.f32 %v1769, %v1300
        %v1898 = vmul.f32 %v1770, %v1329
        %v1899 = vmul.f32 %v1771, %v1358
        %v1900 = vmul.f32 %v1772, %v1387
        %v1901 = vmul.f32 %v1773, %v1416
        %v1902 = vmul.f32 %v1774, %v1445
        %v1903 = vmul.f32 %v1775, %v1474
        %v1904 = vmul.f32 %v1776, %v1503
        %v1905 = vmul.f32 %v1777, %v1532
        %v1906 = vmul.f32 %v1778, %v1561
        %v1907 = vmul.f32 %v1779, %v1590
        %v1908 = vmul.f32 %v1780, %v1157
        %v1909 = vmul.f32 %v1781, %v1186
        %v1910 = vmul.f32 %v1782, %v1215
        %v1911 = vmul.f32 %v1783, %v1244
        %v1912 = vmul.f32 %v1784, %v1273
        %v1913 = vmul.f32 %v1785, %v1302
        %v1914 = vmul.f32 %v1786, %v1331
        %v1915 = vmul.f32 %v1787, %v1360
        %v1916 = vmul.f32 %v1788, %v1389
        %v1917 = vmul.f32 %v1789, %v1418
        %v1918 = vmul.f32 %v1790, %v1447
        %v1919 = vmul.f32 %v1791, %v1476
        %v1920 = vmul.f32 %v1792, %v1505
        %v1921 = vmul.f32 %v1793, %v1534
        %v1922 = vmul.f32 %v1794, %v1563
        %v1923 = vmul.f32 %v1795, %v1592
        %v1924 = vmul.f32 %v1796, %v1160
        %v1925 = vmul.f32 %v1797, %v1189
        %v1926 = vmul.f32 %v1798, %v1218
        %v1927 = vmul.f32 %v1799, %v1247
        %v1928 = vmul.f32 %v1800, %v1276
        %v1929 = vmul.f32 %v1801, %v1305
        %v1930 = vmul.f32 %v1802, %v1334
        %v1931 = vmul.f32 %v1803, %v1363
        %v1932 = vmul.f32 %v1804, %v1392
        %v1933 = vmul.f32 %v1805, %v1421
        %v1934 = vmul.f32 %v1806, %v1450
        %v1935 = vmul.f32 %v1807, %v1479
        %v1936 = vmul.f32 %v1808, %v1508
        %v1937 = vmul.f32 %v1809, %v1537
        %v1938 = vmul.f32 %v1810, %v1566
        %v1939 = vmul.f32 %v1811, %v1595
        %v1940 = vmul.f32 %v1812, %v1162
        %v1941 = vmul.f32 %v1813, %v1191
        %v1942 = vmul.f32 %v1814, %v1220
        %v1943 = vmul.f32 %v1815, %v1249
        %v1944 = vmul.f32 %v1816, %v1278
        %v1945 = vmul.f32 %v1817, %v1307
        %v1946 = vmul.f32 %v1818, %v1336
        %v1947 = vmul.f32 %v1819, %v1365
        %v1948 = vmul.f32 %v1820, %v1394
        %v1949 = vmul.f32 %v1821, %v1423
        %v1950 = vmul.f32 %v1822, %v1452
        %v1951 = vmul.f32 %v1823, %v1481
        %v1952 = vmul.f32 %v1824, %v1510
        %v1953 = vmul.f32 %v1825, %v1539
        %v1954 = vmul.f32 %v1826, %v1568
        %v1955 = vmul.f32 %v1827, %v1597
        %v1956 = vmul.f32 %v1828, %v1165
        %v1957 = vmul.f32 %v1829, %v1194
        %v1958 = vmul.f32 %v1830, %v1223
        %v1959 = vmul.f32 %v1831, %v1252
        %v1960 = vmul.f32 %v1832, %v1281
        %v1961 = vmul.f32 %v1833, %v1310
        %v1962 = vmul.f32 %v1834, %v1339
        %v1963 = vmul.f32 %v1835, %v1368
        %v1964 = vmul.f32 %v1836, %v1397
        %v1965 = vmul.f32 %v1837, %v1426
        %v1966 = vmul.f32 %v1838, %v1455
        %v1967 = vmul.f32 %v1839, %v1484
        %v1968 = vmul.f32 %v1840, %v1513
        %v1969 = vmul.f32 %v1841, %v1542
        %v1970 = vmul.f32 %v1842, %v1571
        %v1971 = vmul.f32 %v1843, %v1600
        %v1972 = vmul.f32 %v1844, %v1167
        %v1973 = vmul.f32 %v1845, %v1196
        %v1974 = vmul.f32 %v1846, %v1225
        %v1975 = vmul.f32 %v1847, %v1254
        %v1976 = vmul.f32 %v1848, %v1283
        %v1977 = vmul.f32 %v1849, %v1312
        %v1978 = vmul.f32 %v1850, %v1341
        %v1979 = vmul.f32 %v1851, %v1370
        %v1980 = vmul.f32 %v1852, %v1399
        %v1981 = vmul.f32 %v1853, %v1428
        %v1982 = vmul.f32 %v1854, %v1457
        %v1983 = vmul.f32 %v1855, %v1486
        %v1984 = vmul.f32 %v1856, %v1515
        %v1985 = vmul.f32 %v1857, %v1544
        %v1986 = vmul.f32 %v1858, %v1573
        %v1987 = vmul.f32 %v1859, %v1602
        %v1988 = vmul.f32 %v1860, %v1150
        %v1989 = vmul.f32 %v1861, %v1179
        %v1990 = vmul.f32 %v1862, %v1208
        %v1991 = vmul.f32 %v1863, %v1237
        %v1992 = vmul.f32 %v1864, %v1266
        %v1993 = vmul.f32 %v1865, %v1295
        %v1994 = vmul.f32 %v1866, %v1324
        %v1995 = vmul.f32 %v1867, %v1353
        %v1996 = vmul.f32 %v1868, %v1382
        %v1997 = vmul.f32 %v1869, %v1411
        %v1998 = vmul.f32 %v1870, %v1440
        %v1999 = vmul.f32 %v1871, %v1469
        %v2000 = vmul.f32 %v1872, %v1498
        %v2001 = vmul.f32 %v1873, %v1527
        %v2002 = vmul.f32 %v1874, %v1556
        %v2003 = vmul.f32 %v1875, %v1585
        %v2004 = vmul.f32 %v1876, %v1152
        %v2005 = vmul.f32 %v1877, %v1181
        %v2006 = vmul.f32 %v1878, %v1210
        %v2007 = vmul.f32 %v1879, %v1239
        %v2008 = vmul.f32 %v1880, %v1268
        %v2009 = vmul.f32 %v1881, %v1297
        %v2010 = vmul.f32 %v1882, %v1326
        %v2011 = vmul.f32 %v1883, %v1355
        %v2012 = vmul.f32 %v1884, %v1384
        %v2013 = vmul.f32 %v1885, %v1413
        %v2014 = vmul.f32 %v1886, %v1442
        %v2015 = vmul.f32 %v1887, %v1471
        %v2016 = vmul.f32 %v1888, %v1500
        %v2017 = vmul.f32 %v1889, %v1529
        %v2018 = vmul.f32 %v1890, %v1558
        %v2019 = vmul.f32 %v1891, %v1587
        %v2020 = vmul.f32 %v1892, %v1155
        %v2021 = vmul.f32 %v1893, %v1184
        %v2022 = vmul.f32 %v1894, %v1213
        %v2023 = vmul.f32 %v1895, %v1242
        %v2024 = vmul.f32 %v1896, %v1271
        %v2025 = vmul.f32 %v1897, %v1300
        %v2026 = vmul.f32 %v1898, %v1329
        %v2027 = vmul.f32 %v1899, %v1358
        %v2028 = vmul.f32 %v1900, %v1387
        %v2029 = vmul.f32 %v1901, %v1416
        %v2030 = vmul.f32 %v1902, %v1445
        %v2031 = vmul.f32 %v1903, %v1474
        %v2032 = vmul.f32 %v1904, %v1503
        %v2033 = vmul.f32 %v1905, %v1532
        %v2034 = vmul.f32 %v1906, %v1561
        %v2035 = vmul.f32 %v1907, %v1590
        %v2036 = vmul.f32 %v1908, %v1157
        %v2037 = vmul.f32 %v1909, %v1186
        %v2038 = vmul.f32 %v1910, %v1215
        %v2039 = vmul.f32 %v1911, %v1244
        %v2040 = vmul.f32 %v1912, %v1273
        %v2041 = vmul.f32 %v1913, %v1302
        %v2042 = vmul.f32 %v1914, %v1331
        %v2043 = vmul.f32 %v1915, %v1360
        %v2044 = vmul.f32 %v1916, %v1389
        %v2045 = vmul.f32 %v1917, %v1418
        %v2046 = vmul.f32 %v1918, %v1447
        %v2047 = vmul.f32 %v1919, %v1476
        %v2048 = vmul.f32 %v1920, %v1505
        %v2049 = vmul.f32 %v1921, %v1534
        %v2050 = vmul.f32 %v1922, %v1563
        %v2051 = vmul.f32 %v1923, %v1592
        %v2052 = vmul.f32 %v1924, %v1160
        %v2053 = vmul.f32 %v1925, %v1189
        %v2054 = vmul.f32 %v1926, %v1218
        %v2055 = vmul.f32 %v1927, %v1247
        %v2056 = vmul.f32 %v1928, %v1276
        %v2057 = vmul.f32 %v1929, %v1305
        %v2058 = vmul.f32 %v1930, %v1334
        %v2059 = vmul.f32 %v1931, %v1363
        %v2060 = vmul.f32 %v1932, %v1392
        %v2061 = vmul.f32 %v1933, %v1421
        %v2062 = vmul.f32 %v1934, %v1450
        %v2063 = vmul.f32 %v1935, %v1479
        %v2064 = vmul.f32 %v1936, %v1508
        %v2065 = vmul.f32 %v1937, %v1537
        %v2066 = vmul.f32 %v1938, %v1566
        %v2067 = vmul.f32 %v1939, %v1595
        %v2068 = vmul.f32 %v1940, %v1162
        %v2069 = vmul.f32 %v1941, %v1191
        %v2070 = vmul.f32 %v1942, %v1220
        %v2071 = vmul.f32 %v1943, %v1249
        %v2072 = vmul.f32 %v1944, %v1278
        %v2073 = vmul.f32 %v1945, %v1307
        %v2074 = vmul.f32 %v1946, %v1336
        %v2075 = vmul.f32 %v1947, %v1365
        %v2076 = vmul.f32 %v1948, %v1394
        %v2077 = vmul.f32 %v1949, %v1423
        %v2078 = vmul.f32 %v1950, %v1452
        %v2079 = vmul.f32 %v1951, %v1481
        %v2080 = vmul.f32 %v1952, %v1510
        %v2081 = vmul.f32 %v1953, %v1539
        %v2082 = vmul.f32 %v1954, %v1568
        %v2083 = vmul.f32 %v1955, %v1597
        %v2084 = vmul.f32 %v1956, %v1165
        %v2085 = vmul.f32 %v1957, %v1194
        %v2086 = vmul.f32 %v1958, %v1223
        %v2087 = vmul.f32 %v1959, %v1252
        %v2088 = vmul.f32 %v1960, %v1281
        %v2089 = vmul.f32 %v1961, %v1310
        %v2090 = vmul.f32 %v1962, %v1339
        %v2091 = vmul.f32 %v1963, %v1368
        %v2092 = vmul.f32 %v1964, %v1397
        %v2093 = vmul.f32 %v1965, %v1426
        %v2094 = vmul.f32 %v1966, %v1455
        %v2095 = vmul.f32 %v1967, %v1484
        %v2096 = vmul.f32 %v1968, %v1513
        %v2097 = vmul.f32 %v1969, %v1542
        %v2098 = vmul.f32 %v1970, %v1571
        %v2099 = vmul.f32 %v1971, %v1600
        %v2100 = vmul.f32 %v1972, %v1167
        %v2101 = vmul.f32 %v1973, %v1196
        %v2102 = vmul.f32 %v1974, %v1225
        %v2103 = vmul.f32 %v1975, %v1254
        %v2104 = vmul.f32 %v1976, %v1283
        %v2105 = vmul.f32 %v1977, %v1312
        %v2106 = vmul.f32 %v1978, %v1341
        %v2107 = vmul.f32 %v1979, %v1370
        %v2108 = vmul.f32 %v1980, %v1399
        %v2109 = vmul.f32 %v1981, %v1428
        %v2110 = vmul.f32 %v1982, %v1457
        %v2111 = vmul.f32 %v1983, %v1486
        %v2112 = vmul.f32 %v1984, %v1515
        %v2113 = vmul.f32 %v1985, %v1544
        %v2114 = vmul.f32 %v1986, %v1573
        %v2115 = vmul.f32 %v1987, %v1602
        %v2116 = vadd.f32 %v1150, %v1988
        %v2117 = vadd.f32 %v1179, %v1989
        %v2118 = vadd.f32 %v1208, %v1990
        %v2119 = vadd.f32 %v1237, %v1991
        %v2120 = vadd.f32 %v1266, %v1992
        %v2121 = vadd.f32 %v1295, %v1993
        %v2122 = vadd.f32 %v1324, %v1994
        %v2123 = vadd.f32 %v1353, %v1995
        %v2124 = vadd.f32 %v1382, %v1996
        %v2125 = vadd.f32 %v1411, %v1997
        %v2126 = vadd.f32 %v1440, %v1998
        %v2127 = vadd.f32 %v1469, %v1999
        %v2128 = vadd.f32 %v1498, %v2000
        %v2129 = vadd.f32 %v1527, %v2001
        %v2130 = vadd.f32 %v1556, %v2002
        %v2131 = vadd.f32 %v1585, %v2003
        %v2132 = vadd.f32 %v1152, %v2004
        %v2133 = vadd.f32 %v1181, %v2005
        %v2134 = vadd.f32 %v1210, %v2006
        %v2135 = vadd.f32 %v1239, %v2007
        %v2136 = vadd.f32 %v1268, %v2008
        %v2137 = vadd.f32 %v1297, %v2009
        %v2138 = vadd.f32 %v1326, %v2010
        %v2139 = vadd.f32 %v1355, %v2011
        %v2140 = vadd.f32 %v1384, %v2012
        %v2141 = vadd.f32 %v1413, %v2013
        %v2142 = vadd.f32 %v1442, %v2014
        %v2143 = vadd.f32 %v1471, %v2015
        %v2144 = vadd.f32 %v1500, %v2016
        %v2145 = vadd.f32 %v1529, %v2017
        %v2146 = vadd.f32 %v1558, %v2018
        %v2147 = vadd.f32 %v1587, %v2019
        %v2148 = vadd.f32 %v1155, %v2020
        %v2149 = vadd.f32 %v1184, %v2021
        %v2150 = vadd.f32 %v1213, %v2022
        %v2151 = vadd.f32 %v1242, %v2023
        %v2152 = vadd.f32 %v1271, %v2024
        %v2153 = vadd.f32 %v1300, %v2025
        %v2154 = vadd.f32 %v1329, %v2026
        %v2155 = vadd.f32 %v1358, %v2027
        %v2156 = vadd.f32 %v1387, %v2028
        %v2157 = vadd.f32 %v1416, %v2029
        %v2158 = vadd.f32 %v1445, %v2030
        %v2159 = vadd.f32 %v1474, %v2031
        %v2160 = vadd.f32 %v1503, %v2032
        %v2161 = vadd.f32 %v1532, %v2033
        %v2162 = vadd.f32 %v1561, %v2034
        %v2163 = vadd.f32 %v1590, %v2035
        %v2164 = vadd.f32 %v1157, %v2036
        %v2165 = vadd.f32 %v1186, %v2037
        %v2166 = vadd.f32 %v1215, %v2038
        %v2167 = vadd.f32 %v1244, %v2039
        %v2168 = vadd.f32 %v1273, %v2040
        %v2169 = vadd.f32 %v1302, %v2041
        %v2170 = vadd.f32 %v1331, %v2042
        %v2171 = vadd.f32 %v1360, %v2043
        %v2172 = vadd.f32 %v1389, %v2044
        %v2173 = vadd.f32 %v1418, %v2045
        %v2174 = vadd.f32 %v1447, %v2046
        %v2175 = vadd.f32 %v1476, %v2047
        %v2176 = vadd.f32 %v1505, %v2048
        %v2177 = vadd.f32 %v1534, %v2049
        %v2178 = vadd.f32 %v1563, %v2050
        %v2179 = vadd.f32 %v1592, %v2051
        %v2180 = vadd.f32 %v1160, %v2052
        %v2181 = vadd.f32 %v1189, %v2053
        %v2182 = vadd.f32 %v1218, %v2054
        %v2183 = vadd.f32 %v1247, %v2055
        %v2184 = vadd.f32 %v1276, %v2056
        %v2185 = vadd.f32 %v1305, %v2057
        %v2186 = vadd.f32 %v1334, %v2058
        %v2187 = vadd.f32 %v1363, %v2059
        %v2188 = vadd.f32 %v1392, %v2060
        %v2189 = vadd.f32 %v1421, %v2061
        %v2190 = vadd.f32 %v1450, %v2062
        %v2191 = vadd.f32 %v1479, %v2063
        %v2192 = vadd.f32 %v1508, %v2064
        %v2193 = vadd.f32 %v1537, %v2065
        %v2194 = vadd.f32 %v1566, %v2066
        %v2195 = vadd.f32 %v1595, %v2067
        %v2196 = vadd.f32 %v1162, %v2068
        %v2197 = vadd.f32 %v1191, %v2069
        %v2198 = vadd.f32 %v1220, %v2070
        %v2199 = vadd.f32 %v1249, %v2071
        %v2200 = vadd.f32 %v1278, %v2072
        %v2201 = vadd.f32 %v1307, %v2073
        %v2202 = vadd.f32 %v1336, %v2074
        %v2203 = vadd.f32 %v1365, %v2075
        %v2204 = vadd.f32 %v1394, %v2076
        %v2205 = vadd.f32 %v1423, %v2077
        %v2206 = vadd.f32 %v1452, %v2078
        %v2207 = vadd.f32 %v1481, %v2079
        %v2208 = vadd.f32 %v1510, %v2080
        %v2209 = vadd.f32 %v1539, %v2081
        %v2210 = vadd.f32 %v1568, %v2082
        %v2211 = vadd.f32 %v1597, %v2083
        %v2212 = vadd.f32 %v1165, %v2084
        %v2213 = vadd.f32 %v1194, %v2085
        %v2214 = vadd.f32 %v1223, %v2086
        %v2215 = vadd.f32 %v1252, %v2087
        %v2216 = vadd.f32 %v1281, %v2088
        %v2217 = vadd.f32 %v1310, %v2089
        %v2218 = vadd.f32 %v1339, %v2090
        %v2219 = vadd.f32 %v1368, %v2091
        %v2220 = vadd.f32 %v1397, %v2092
        %v2221 = vadd.f32 %v1426, %v2093
        %v2222 = vadd.f32 %v1455, %v2094
        %v2223 = vadd.f32 %v1484, %v2095
        %v2224 = vadd.f32 %v1513, %v2096
        %v2225 = vadd.f32 %v1542, %v2097
        %v2226 = vadd.f32 %v1571, %v2098
        %v2227 = vadd.f32 %v1600, %v2099
        %v2228 = vadd.f32 %v1167, %v2100
        %v2229 = vadd.f32 %v1196, %v2101
        %v2230 = vadd.f32 %v1225, %v2102
        %v2231 = vadd.f32 %v1254, %v2103
        %v2232 = vadd.f32 %v1283, %v2104
        %v2233 = vadd.f32 %v1312, %v2105
        %v2234 = vadd.f32 %v1341, %v2106
        %v2235 = vadd.f32 %v1370, %v2107
        %v2236 = vadd.f32 %v1399, %v2108
        %v2237 = vadd.f32 %v1428, %v2109
        %v2238 = vadd.f32 %v1457, %v2110
        %v2239 = vadd.f32 %v1486, %v2111
        %v2240 = vadd.f32 %v1515, %v2112
        %v2241 = vadd.f32 %v1544, %v2113
        %v2242 = vadd.f32 %v1573, %v2114
        %v2243 = vadd.f32 %v1602, %v2115
        %v2244 = vmul.f32 %v2116, 0.7978846
        %v2245 = vmul.f32 %v2117, 0.7978846
        %v2246 = vmul.f32 %v2118, 0.7978846
        %v2247 = vmul.f32 %v2119, 0.7978846
        %v2248 = vmul.f32 %v2120, 0.7978846
        %v2249 = vmul.f32 %v2121, 0.7978846
        %v2250 = vmul.f32 %v2122, 0.7978846
        %v2251 = vmul.f32 %v2123, 0.7978846
        %v2252 = vmul.f32 %v2124, 0.7978846
        %v2253 = vmul.f32 %v2125, 0.7978846
        %v2254 = vmul.f32 %v2126, 0.7978846
        %v2255 = vmul.f32 %v2127, 0.7978846
        %v2256 = vmul.f32 %v2128, 0.7978846
        %v2257 = vmul.f32 %v2129, 0.7978846
        %v2258 = vmul.f32 %v2130, 0.7978846
        %v2259 = vmul.f32 %v2131, 0.7978846
        %v2260 = vmul.f32 %v2132, 0.7978846
        %v2261 = vmul.f32 %v2133, 0.7978846
        %v2262 = vmul.f32 %v2134, 0.7978846
        %v2263 = vmul.f32 %v2135, 0.7978846
        %v2264 = vmul.f32 %v2136, 0.7978846
        %v2265 = vmul.f32 %v2137, 0.7978846
        %v2266 = vmul.f32 %v2138, 0.7978846
        %v2267 = vmul.f32 %v2139, 0.7978846
        %v2268 = vmul.f32 %v2140, 0.7978846
        %v2269 = vmul.f32 %v2141, 0.7978846
        %v2270 = vmul.f32 %v2142, 0.7978846
        %v2271 = vmul.f32 %v2143, 0.7978846
        %v2272 = vmul.f32 %v2144, 0.7978846
        %v2273 = vmul.f32 %v2145, 0.7978846
        %v2274 = vmul.f32 %v2146, 0.7978846
        %v2275 = vmul.f32 %v2147, 0.7978846
        %v2276 = vmul.f32 %v2148, 0.7978846
        %v2277 = vmul.f32 %v2149, 0.7978846
        %v2278 = vmul.f32 %v2150, 0.7978846
        %v2279 = vmul.f32 %v2151, 0.7978846
        %v2280 = vmul.f32 %v2152, 0.7978846
        %v2281 = vmul.f32 %v2153, 0.7978846
        %v2282 = vmul.f32 %v2154, 0.7978846
        %v2283 = vmul.f32 %v2155, 0.7978846
        %v2284 = vmul.f32 %v2156, 0.7978846
        %v2285 = vmul.f32 %v2157, 0.7978846
        %v2286 = vmul.f32 %v2158, 0.7978846
        %v2287 = vmul.f32 %v2159, 0.7978846
        %v2288 = vmul.f32 %v2160, 0.7978846
        %v2289 = vmul.f32 %v2161, 0.7978846
        %v2290 = vmul.f32 %v2162, 0.7978846
        %v2291 = vmul.f32 %v2163, 0.7978846
        %v2292 = vmul.f32 %v2164, 0.7978846
        %v2293 = vmul.f32 %v2165, 0.7978846
        %v2294 = vmul.f32 %v2166, 0.7978846
        %v2295 = vmul.f32 %v2167, 0.7978846
        %v2296 = vmul.f32 %v2168, 0.7978846
        %v2297 = vmul.f32 %v2169, 0.7978846
        %v2298 = vmul.f32 %v2170, 0.7978846
        %v2299 = vmul.f32 %v2171, 0.7978846
        %v2300 = vmul.f32 %v2172, 0.7978846
        %v2301 = vmul.f32 %v2173, 0.7978846
        %v2302 = vmul.f32 %v2174, 0.7978846
        %v2303 = vmul.f32 %v2175, 0.7978846
        %v2304 = vmul.f32 %v2176, 0.7978846
        %v2305 = vmul.f32 %v2177, 0.7978846
        %v2306 = vmul.f32 %v2178, 0.7978846
        %v2307 = vmul.f32 %v2179, 0.7978846
        %v2308 = vmul.f32 %v2180, 0.7978846
        %v2309 = vmul.f32 %v2181, 0.7978846
        %v2310 = vmul.f32 %v2182, 0.7978846
        %v2311 = vmul.f32 %v2183, 0.7978846
        %v2312 = vmul.f32 %v2184, 0.7978846
        %v2313 = vmul.f32 %v2185, 0.7978846
        %v2314 = vmul.f32 %v2186, 0.7978846
        %v2315 = vmul.f32 %v2187, 0.7978846
        %v2316 = vmul.f32 %v2188, 0.7978846
        %v2317 = vmul.f32 %v2189, 0.7978846
        %v2318 = vmul.f32 %v2190, 0.7978846
        %v2319 = vmul.f32 %v2191, 0.7978846
        %v2320 = vmul.f32 %v2192, 0.7978846
        %v2321 = vmul.f32 %v2193, 0.7978846
        %v2322 = vmul.f32 %v2194, 0.7978846
        %v2323 = vmul.f32 %v2195, 0.7978846
        %v2324 = vmul.f32 %v2196, 0.7978846
        %v2325 = vmul.f32 %v2197, 0.7978846
        %v2326 = vmul.f32 %v2198, 0.7978846
        %v2327 = vmul.f32 %v2199, 0.7978846
        %v2328 = vmul.f32 %v2200, 0.7978846
        %v2329 = vmul.f32 %v2201, 0.7978846
        %v2330 = vmul.f32 %v2202, 0.7978846
        %v2331 = vmul.f32 %v2203, 0.7978846
        %v2332 = vmul.f32 %v2204, 0.7978846
        %v2333 = vmul.f32 %v2205, 0.7978846
        %v2334 = vmul.f32 %v2206, 0.7978846
        %v2335 = vmul.f32 %v2207, 0.7978846
        %v2336 = vmul.f32 %v2208, 0.7978846
        %v2337 = vmul.f32 %v2209, 0.7978846
        %v2338 = vmul.f32 %v2210, 0.7978846
        %v2339 = vmul.f32 %v2211, 0.7978846
        %v2340 = vmul.f32 %v2212, 0.7978846
        %v2341 = vmul.f32 %v2213, 0.7978846
        %v2342 = vmul.f32 %v2214, 0.7978846
        %v2343 = vmul.f32 %v2215, 0.7978846
        %v2344 = vmul.f32 %v2216, 0.7978846
        %v2345 = vmul.f32 %v2217, 0.7978846
        %v2346 = vmul.f32 %v2218, 0.7978846
        %v2347 = vmul.f32 %v2219, 0.7978846
        %v2348 = vmul.f32 %v2220, 0.7978846
        %v2349 = vmul.f32 %v2221, 0.7978846
        %v2350 = vmul.f32 %v2222, 0.7978846
        %v2351 = vmul.f32 %v2223, 0.7978846
        %v2352 = vmul.f32 %v2224, 0.7978846
        %v2353 = vmul.f32 %v2225, 0.7978846
        %v2354 = vmul.f32 %v2226, 0.7978846
        %v2355 = vmul.f32 %v2227, 0.7978846
        %v2356 = vmul.f32 %v2228, 0.7978846
        %v2357 = vmul.f32 %v2229, 0.7978846
        %v2358 = vmul.f32 %v2230, 0.7978846
        %v2359 = vmul.f32 %v2231, 0.7978846
        %v2360 = vmul.f32 %v2232, 0.7978846
        %v2361 = vmul.f32 %v2233, 0.7978846
        %v2362 = vmul.f32 %v2234, 0.7978846
        %v2363 = vmul.f32 %v2235, 0.7978846
        %v2364 = vmul.f32 %v2236, 0.7978846
        %v2365 = vmul.f32 %v2237, 0.7978846
        %v2366 = vmul.f32 %v2238, 0.7978846
        %v2367 = vmul.f32 %v2239, 0.7978846
        %v2368 = vmul.f32 %v2240, 0.7978846
        %v2369 = vmul.f32 %v2241, 0.7978846
        %v2370 = vmul.f32 %v2242, 0.7978846
        %v2371 = vmul.f32 %v2243, 0.7978846
        %v2372 = vtanh.pop %v2244
        %v2373 = vtanh.pop %v2245
        %v2374 = vtanh.pop %v2246
        %v2375 = vtanh.pop %v2247
        %v2376 = vtanh.pop %v2248
        %v2377 = vtanh.pop %v2249
        %v2378 = vtanh.pop %v2250
        %v2379 = vtanh.pop %v2251
        %v2380 = vtanh.pop %v2252
        %v2381 = vtanh.pop %v2253
        %v2382 = vtanh.pop %v2254
        %v2383 = vtanh.pop %v2255
        %v2384 = vtanh.pop %v2256
        %v2385 = vtanh.pop %v2257
        %v2386 = vtanh.pop %v2258
        %v2387 = vtanh.pop %v2259
        %v2388 = vtanh.pop %v2260
        %v2389 = vtanh.pop %v2261
        %v2390 = vtanh.pop %v2262
        %v2391 = vtanh.pop %v2263
        %v2392 = vtanh.pop %v2264
        %v2393 = vtanh.pop %v2265
        %v2394 = vtanh.pop %v2266
        %v2395 = vtanh.pop %v2267
        %v2396 = vtanh.pop %v2268
        %v2397 = vtanh.pop %v2269
        %v2398 = vtanh.pop %v2270
        %v2399 = vtanh.pop %v2271
        %v2400 = vtanh.pop %v2272
        %v2401 = vtanh.pop %v2273
        %v2402 = vtanh.pop %v2274
        %v2403 = vtanh.pop %v2275
        %v2404 = vtanh.pop %v2276
        %v2405 = vtanh.pop %v2277
        %v2406 = vtanh.pop %v2278
        %v2407 = vtanh.pop %v2279
        %v2408 = vtanh.pop %v2280
        %v2409 = vtanh.pop %v2281
        %v2410 = vtanh.pop %v2282
        %v2411 = vtanh.pop %v2283
        %v2412 = vtanh.pop %v2284
        %v2413 = vtanh.pop %v2285
        %v2414 = vtanh.pop %v2286
        %v2415 = vtanh.pop %v2287
        %v2416 = vtanh.pop %v2288
        %v2417 = vtanh.pop %v2289
        %v2418 = vtanh.pop %v2290
        %v2419 = vtanh.pop %v2291
        %v2420 = vtanh.pop %v2292
        %v2421 = vtanh.pop %v2293
        %v2422 = vtanh.pop %v2294
        %v2423 = vtanh.pop %v2295
        %v2424 = vtanh.pop %v2296
        %v2425 = vtanh.pop %v2297
        %v2426 = vtanh.pop %v2298
        %v2427 = vtanh.pop %v2299
        %v2428 = vtanh.pop %v2300
        %v2429 = vtanh.pop %v2301
        %v2430 = vtanh.pop %v2302
        %v2431 = vtanh.pop %v2303
        %v2432 = vtanh.pop %v2304
        %v2433 = vtanh.pop %v2305
        %v2434 = vtanh.pop %v2306
        %v2435 = vtanh.pop %v2307
        %v2436 = vtanh.pop %v2308
        %v2437 = vtanh.pop %v2309
        %v2438 = vtanh.pop %v2310
        %v2439 = vtanh.pop %v2311
        %v2440 = vtanh.pop %v2312
        %v2441 = vtanh.pop %v2313
        %v2442 = vtanh.pop %v2314
        %v2443 = vtanh.pop %v2315
        %v2444 = vtanh.pop %v2316
        %v2445 = vtanh.pop %v2317
        %v2446 = vtanh.pop %v2318
        %v2447 = vtanh.pop %v2319
        %v2448 = vtanh.pop %v2320
        %v2449 = vtanh.pop %v2321
        %v2450 = vtanh.pop %v2322
        %v2451 = vtanh.pop %v2323
        %v2452 = vtanh.pop %v2324
        %v2453 = vtanh.pop %v2325
        %v2454 = vtanh.pop %v2326
        %v2455 = vtanh.pop %v2327
        %v2456 = vtanh.pop %v2328
        %v2457 = vtanh.pop %v2329
        %v2458 = vtanh.pop %v2330
        %v2459 = vtanh.pop %v2331
        %v2460 = vtanh.pop %v2332
        %v2461 = vtanh.pop %v2333
        %v2462 = vtanh.pop %v2334
        %v2463 = vtanh.pop %v2335
        %v2464 = vtanh.pop %v2336
        %v2465 = vtanh.pop %v2337
        %v2466 = vtanh.pop %v2338
        %v2467 = vtanh.pop %v2339
        %v2468 = vtanh.pop %v2340
        %v2469 = vtanh.pop %v2341
        %v2470 = vtanh.pop %v2342
        %v2471 = vtanh.pop %v2343
        %v2472 = vtanh.pop %v2344
        %v2473 = vtanh.pop %v2345
        %v2474 = vtanh.pop %v2346
        %v2475 = vtanh.pop %v2347
        %v2476 = vtanh.pop %v2348
        %v2477 = vtanh.pop %v2349
        %v2478 = vtanh.pop %v2350
        %v2479 = vtanh.pop %v2351
        %v2480 = vtanh.pop %v2352
        %v2481 = vtanh.pop %v2353
        %v2482 = vtanh.pop %v2354
        %v2483 = vtanh.pop %v2355
        %v2484 = vtanh.pop %v2356
        %v2485 = vtanh.pop %v2357
        %v2486 = vtanh.pop %v2358
        %v2487 = vtanh.pop %v2359
        %v2488 = vtanh.pop %v2360
        %v2489 = vtanh.pop %v2361
        %v2490 = vtanh.pop %v2362
        %v2491 = vtanh.pop %v2363
        %v2492 = vtanh.pop %v2364
        %v2493 = vtanh.pop %v2365
        %v2494 = vtanh.pop %v2366
        %v2495 = vtanh.pop %v2367
        %v2496 = vtanh.pop %v2368
        %v2497 = vtanh.pop %v2369
        %v2498 = vtanh.pop %v2370
        %v2499 = vtanh.pop %v2371
        %v2500 = vadd.f32 %v2372, 1.0
        %v2501 = vadd.f32 %v2373, 1.0
        %v2502 = vadd.f32 %v2374, 1.0
        %v2503 = vadd.f32 %v2375, 1.0
        %v2504 = vadd.f32 %v2376, 1.0
        %v2505 = vadd.f32 %v2377, 1.0
        %v2506 = vadd.f32 %v2378, 1.0
        %v2507 = vadd.f32 %v2379, 1.0
        %v2508 = vadd.f32 %v2380, 1.0
        %v2509 = vadd.f32 %v2381, 1.0
        %v2510 = vadd.f32 %v2382, 1.0
        %v2511 = vadd.f32 %v2383, 1.0
        %v2512 = vadd.f32 %v2384, 1.0
        %v2513 = vadd.f32 %v2385, 1.0
        %v2514 = vadd.f32 %v2386, 1.0
        %v2515 = vadd.f32 %v2387, 1.0
        %v2516 = vadd.f32 %v2388, 1.0
        %v2517 = vadd.f32 %v2389, 1.0
        %v2518 = vadd.f32 %v2390, 1.0
        %v2519 = vadd.f32 %v2391, 1.0
        %v2520 = vadd.f32 %v2392, 1.0
        %v2521 = vadd.f32 %v2393, 1.0
        %v2522 = vadd.f32 %v2394, 1.0
        %v2523 = vadd.f32 %v2395, 1.0
        %v2524 = vadd.f32 %v2396, 1.0
        %v2525 = vadd.f32 %v2397, 1.0
        %v2526 = vadd.f32 %v2398, 1.0
        %v2527 = vadd.f32 %v2399, 1.0
        %v2528 = vadd.f32 %v2400, 1.0
        %v2529 = vadd.f32 %v2401, 1.0
        %v2530 = vadd.f32 %v2402, 1.0
        %v2531 = vadd.f32 %v2403, 1.0
        %v2532 = vadd.f32 %v2404, 1.0
        %v2533 = vadd.f32 %v2405, 1.0
        %v2534 = vadd.f32 %v2406, 1.0
        %v2535 = vadd.f32 %v2407, 1.0
        %v2536 = vadd.f32 %v2408, 1.0
        %v2537 = vadd.f32 %v2409, 1.0
        %v2538 = vadd.f32 %v2410, 1.0
        %v2539 = vadd.f32 %v2411, 1.0
        %v2540 = vadd.f32 %v2412, 1.0
        %v2541 = vadd.f32 %v2413, 1.0
        %v2542 = vadd.f32 %v2414, 1.0
        %v2543 = vadd.f32 %v2415, 1.0
        %v2544 = vadd.f32 %v2416, 1.0
        %v2545 = vadd.f32 %v2417, 1.0
        %v2546 = vadd.f32 %v2418, 1.0
        %v2547 = vadd.f32 %v2419, 1.0
        %v2548 = vadd.f32 %v2420, 1.0
        %v2549 = vadd.f32 %v2421, 1.0
        %v2550 = vadd.f32 %v2422, 1.0
        %v2551 = vadd.f32 %v2423, 1.0
        %v2552 = vadd.f32 %v2424, 1.0
        %v2553 = vadd.f32 %v2425, 1.0
        %v2554 = vadd.f32 %v2426, 1.0
        %v2555 = vadd.f32 %v2427, 1.0
        %v2556 = vadd.f32 %v2428, 1.0
        %v2557 = vadd.f32 %v2429, 1.0
        %v2558 = vadd.f32 %v2430, 1.0
        %v2559 = vadd.f32 %v2431, 1.0
        %v2560 = vadd.f32 %v2432, 1.0
        %v2561 = vadd.f32 %v2433, 1.0
        %v2562 = vadd.f32 %v2434, 1.0
        %v2563 = vadd.f32 %v2435, 1.0
        %v2564 = vadd.f32 %v2436, 1.0
        %v2565 = vadd.f32 %v2437, 1.0
        %v2566 = vadd.f32 %v2438, 1.0
        %v2567 = vadd.f32 %v2439, 1.0
        %v2568 = vadd.f32 %v2440, 1.0
        %v2569 = vadd.f32 %v2441, 1.0
        %v2570 = vadd.f32 %v2442, 1.0
        %v2571 = vadd.f32 %v2443, 1.0
        %v2572 = vadd.f32 %v2444, 1.0
        %v2573 = vadd.f32 %v2445, 1.0
        %v2574 = vadd.f32 %v2446, 1.0
        %v2575 = vadd.f32 %v2447, 1.0
        %v2576 = vadd.f32 %v2448, 1.0
        %v2577 = vadd.f32 %v2449, 1.0
        %v2578 = vadd.f32 %v2450, 1.0
        %v2579 = vadd.f32 %v2451, 1.0
        %v2580 = vadd.f32 %v2452, 1.0
        %v2581 = vadd.f32 %v2453, 1.0
        %v2582 = vadd.f32 %v2454, 1.0
        %v2583 = vadd.f32 %v2455, 1.0
        %v2584 = vadd.f32 %v2456, 1.0
        %v2585 = vadd.f32 %v2457, 1.0
        %v2586 = vadd.f32 %v2458, 1.0
        %v2587 = vadd.f32 %v2459, 1.0
        %v2588 = vadd.f32 %v2460, 1.0
        %v2589 = vadd.f32 %v2461, 1.0
        %v2590 = vadd.f32 %v2462, 1.0
        %v2591 = vadd.f32 %v2463, 1.0
        %v2592 = vadd.f32 %v2464, 1.0
        %v2593 = vadd.f32 %v2465, 1.0
        %v2594 = vadd.f32 %v2466, 1.0
        %v2595 = vadd.f32 %v2467, 1.0
        %v2596 = vadd.f32 %v2468, 1.0
        %v2597 = vadd.f32 %v2469, 1.0
        %v2598 = vadd.f32 %v2470, 1.0
        %v2599 = vadd.f32 %v2471, 1.0
        %v2600 = vadd.f32 %v2472, 1.0
        %v2601 = vadd.f32 %v2473, 1.0
        %v2602 = vadd.f32 %v2474, 1.0
        %v2603 = vadd.f32 %v2475, 1.0
        %v2604 = vadd.f32 %v2476, 1.0
        %v2605 = vadd.f32 %v2477, 1.0
        %v2606 = vadd.f32 %v2478, 1.0
        %v2607 = vadd.f32 %v2479, 1.0
        %v2608 = vadd.f32 %v2480, 1.0
        %v2609 = vadd.f32 %v2481, 1.0
        %v2610 = vadd.f32 %v2482, 1.0
        %v2611 = vadd.f32 %v2483, 1.0
        %v2612 = vadd.f32 %v2484, 1.0
        %v2613 = vadd.f32 %v2485, 1.0
        %v2614 = vadd.f32 %v2486, 1.0
        %v2615 = vadd.f32 %v2487, 1.0
        %v2616 = vadd.f32 %v2488, 1.0
        %v2617 = vadd.f32 %v2489, 1.0
        %v2618 = vadd.f32 %v2490, 1.0
        %v2619 = vadd.f32 %v2491, 1.0
        %v2620 = vadd.f32 %v2492, 1.0
        %v2621 = vadd.f32 %v2493, 1.0
        %v2622 = vadd.f32 %v2494, 1.0
        %v2623 = vadd.f32 %v2495, 1.0
        %v2624 = vadd.f32 %v2496, 1.0
        %v2625 = vadd.f32 %v2497, 1.0
        %v2626 = vadd.f32 %v2498, 1.0
        %v2627 = vadd.f32 %v2499, 1.0
        %v2628 = vmul.f32 %v1604, %v2500
        %v2629 = vmul.f32 %v1605, %v2501
        %v2630 = vmul.f32 %v1606, %v2502
        %v2631 = vmul.f32 %v1607, %v2503
        %v2632 = vmul.f32 %v1608, %v2504
        %v2633 = vmul.f32 %v1609, %v2505
        %v2634 = vmul.f32 %v1610, %v2506
        %v2635 = vmul.f32 %v1611, %v2507
        %v2636 = vmul.f32 %v1612, %v2508
        %v2637 = vmul.f32 %v1613, %v2509
        %v2638 = vmul.f32 %v1614, %v2510
        %v2639 = vmul.f32 %v1615, %v2511
        %v2640 = vmul.f32 %v1616, %v2512
        %v2641 = vmul.f32 %v1617, %v2513
        %v2642 = vmul.f32 %v1618, %v2514
        %v2643 = vmul.f32 %v1619, %v2515
        %v2644 = vmul.f32 %v1620, %v2516
        %v2645 = vmul.f32 %v1621, %v2517
        %v2646 = vmul.f32 %v1622, %v2518
        %v2647 = vmul.f32 %v1623, %v2519
        %v2648 = vmul.f32 %v1624, %v2520
        %v2649 = vmul.f32 %v1625, %v2521
        %v2650 = vmul.f32 %v1626, %v2522
        %v2651 = vmul.f32 %v1627, %v2523
        %v2652 = vmul.f32 %v1628, %v2524
        %v2653 = vmul.f32 %v1629, %v2525
        %v2654 = vmul.f32 %v1630, %v2526
        %v2655 = vmul.f32 %v1631, %v2527
        %v2656 = vmul.f32 %v1632, %v2528
        %v2657 = vmul.f32 %v1633, %v2529
        %v2658 = vmul.f32 %v1634, %v2530
        %v2659 = vmul.f32 %v1635, %v2531
        %v2660 = vmul.f32 %v1636, %v2532
        %v2661 = vmul.f32 %v1637, %v2533
        %v2662 = vmul.f32 %v1638, %v2534
        %v2663 = vmul.f32 %v1639, %v2535
        %v2664 = vmul.f32 %v1640, %v2536
        %v2665 = vmul.f32 %v1641, %v2537
        %v2666 = vmul.f32 %v1642, %v2538
        %v2667 = vmul.f32 %v1643, %v2539
        %v2668 = vmul.f32 %v1644, %v2540
        %v2669 = vmul.f32 %v1645, %v2541
        %v2670 = vmul.f32 %v1646, %v2542
        %v2671 = vmul.f32 %v1647, %v2543
        %v2672 = vmul.f32 %v1648, %v2544
        %v2673 = vmul.f32 %v1649, %v2545
        %v2674 = vmul.f32 %v1650, %v2546
        %v2675 = vmul.f32 %v1651, %v2547
        %v2676 = vmul.f32 %v1652, %v2548
        %v2677 = vmul.f32 %v1653, %v2549
        %v2678 = vmul.f32 %v1654, %v2550
        %v2679 = vmul.f32 %v1655, %v2551
        %v2680 = vmul.f32 %v1656, %v2552
        %v2681 = vmul.f32 %v1657, %v2553
        %v2682 = vmul.f32 %v1658, %v2554
        %v2683 = vmul.f32 %v1659, %v2555
        %v2684 = vmul.f32 %v1660, %v2556
        %v2685 = vmul.f32 %v1661, %v2557
        %v2686 = vmul.f32 %v1662, %v2558
        %v2687 = vmul.f32 %v1663, %v2559
        %v2688 = vmul.f32 %v1664, %v2560
        %v2689 = vmul.f32 %v1665, %v2561
        %v2690 = vmul.f32 %v1666, %v2562
        %v2691 = vmul.f32 %v1667, %v2563
        %v2692 = vmul.f32 %v1668, %v2564
        %v2693 = vmul.f32 %v1669, %v2565
        %v2694 = vmul.f32 %v1670, %v2566
        %v2695 = vmul.f32 %v1671, %v2567
        %v2696 = vmul.f32 %v1672, %v2568
        %v2697 = vmul.f32 %v1673, %v2569
        %v2698 = vmul.f32 %v1674, %v2570
        %v2699 = vmul.f32 %v1675, %v2571
        %v2700 = vmul.f32 %v1676, %v2572
        %v2701 = vmul.f32 %v1677, %v2573
        %v2702 = vmul.f32 %v1678, %v2574
        %v2703 = vmul.f32 %v1679, %v2575
        %v2704 = vmul.f32 %v1680, %v2576
        %v2705 = vmul.f32 %v1681, %v2577
        %v2706 = vmul.f32 %v1682, %v2578
        %v2707 = vmul.f32 %v1683, %v2579
        %v2708 = vmul.f32 %v1684, %v2580
        %v2709 = vmul.f32 %v1685, %v2581
        %v2710 = vmul.f32 %v1686, %v2582
        %v2711 = vmul.f32 %v1687, %v2583
        %v2712 = vmul.f32 %v1688, %v2584
        %v2713 = vmul.f32 %v1689, %v2585
        %v2714 = vmul.f32 %v1690, %v2586
        %v2715 = vmul.f32 %v1691, %v2587
        %v2716 = vmul.f32 %v1692, %v2588
        %v2717 = vmul.f32 %v1693, %v2589
        %v2718 = vmul.f32 %v1694, %v2590
        %v2719 = vmul.f32 %v1695, %v2591
        %v2720 = vmul.f32 %v1696, %v2592
        %v2721 = vmul.f32 %v1697, %v2593
        %v2722 = vmul.f32 %v1698, %v2594
        %v2723 = vmul.f32 %v1699, %v2595
        %v2724 = vmul.f32 %v1700, %v2596
        %v2725 = vmul.f32 %v1701, %v2597
        %v2726 = vmul.f32 %v1702, %v2598
        %v2727 = vmul.f32 %v1703, %v2599
        %v2728 = vmul.f32 %v1704, %v2600
        %v2729 = vmul.f32 %v1705, %v2601
        %v2730 = vmul.f32 %v1706, %v2602
        %v2731 = vmul.f32 %v1707, %v2603
        %v2732 = vmul.f32 %v1708, %v2604
        %v2733 = vmul.f32 %v1709, %v2605
        %v2734 = vmul.f32 %v1710, %v2606
        %v2735 = vmul.f32 %v1711, %v2607
        %v2736 = vmul.f32 %v1712, %v2608
        %v2737 = vmul.f32 %v1713, %v2609
        %v2738 = vmul.f32 %v1714, %v2610
        %v2739 = vmul.f32 %v1715, %v2611
        %v2740 = vmul.f32 %v1716, %v2612
        %v2741 = vmul.f32 %v1717, %v2613
        %v2742 = vmul.f32 %v1718, %v2614
        %v2743 = vmul.f32 %v1719, %v2615
        %v2744 = vmul.f32 %v1720, %v2616
        %v2745 = vmul.f32 %v1721, %v2617
        %v2746 = vmul.f32 %v1722, %v2618
        %v2747 = vmul.f32 %v1723, %v2619
        %v2748 = vmul.f32 %v1724, %v2620
        %v2749 = vmul.f32 %v1725, %v2621
        %v2750 = vmul.f32 %v1726, %v2622
        %v2751 = vmul.f32 %v1727, %v2623
        %v2752 = vmul.f32 %v1728, %v2624
        %v2753 = vmul.f32 %v1729, %v2625
        %v2754 = vmul.f32 %v1730, %v2626
        %v2755 = vmul.f32 %v1731, %v2627
        %v2756 = vld [vmem:[%s3] sm:$0xf]
        %v2757 = vld [vmem:[%s3 + $0x4] sm:$0xf]
        %v2758 = vld [vmem:[%s3 + $0x8] sm:$0xf]
        %v2759 = vld [vmem:[%s3 + $0xc] sm:$0xf]
        %v2760 = vld [vmem:[%s4] sm:$0xff]
        %v2761 = vld [vmem:[%s4 + $0x8] sm:$0xff]
        %v2762 = vld [vmem:[%s4 + $0x10] sm:$0xff]
        %v2763 = vld [vmem:[%s4 + $0x18] sm:$0xff]
        %v2764 = vpack.c.bf16 %v2644, %v2628
        %v2765 = vpack.c.bf16 %v2645, %v2629
        %v2766 = vpack.c.bf16 %v2646, %v2630
        %v2767 = vpack.c.bf16 %v2647, %v2631
        %v2768 = vpack.c.bf16 %v2648, %v2632
        %v2769 = vpack.c.bf16 %v2649, %v2633
        %v2770 = vpack.c.bf16 %v2650, %v2634
        %v2771 = vpack.c.bf16 %v2651, %v2635
        %v2772 = vpack.c.bf16 %v2652, %v2636
        %v2773 = vpack.c.bf16 %v2653, %v2637
        %v2774 = vpack.c.bf16 %v2654, %v2638
        %v2775 = vpack.c.bf16 %v2655, %v2639
        %v2776 = vpack.c.bf16 %v2656, %v2640
        %v2777 = vpack.c.bf16 %v2657, %v2641
        %v2778 = vpack.c.bf16 %v2658, %v2642
        %v2779 = vpack.c.bf16 %v2659, %v2643
        %v2780 = vpack.c.bf16 %v2676, %v2660
        %v2781 = vpack.c.bf16 %v2677, %v2661
        %v2782 = vpack.c.bf16 %v2678, %v2662
        %v2783 = vpack.c.bf16 %v2679, %v2663
        %v2784 = vpack.c.bf16 %v2680, %v2664
        %v2785 = vpack.c.bf16 %v2681, %v2665
        %v2786 = vpack.c.bf16 %v2682, %v2666
        %v2787 = vpack.c.bf16 %v2683, %v2667
        %v2788 = vpack.c.bf16 %v2684, %v2668
        %v2789 = vpack.c.bf16 %v2685, %v2669
        %v2790 = vpack.c.bf16 %v2686, %v2670
        %v2791 = vpack.c.bf16 %v2687, %v2671
        %v2792 = vpack.c.bf16 %v2688, %v2672
        %v2793 = vpack.c.bf16 %v2689, %v2673
        %v2794 = vpack.c.bf16 %v2690, %v2674
        %v2795 = vpack.c.bf16 %v2691, %v2675
        %v2796 = vpack.c.bf16 %v2708, %v2692
        %v2797 = vpack.c.bf16 %v2709, %v2693
        %v2798 = vpack.c.bf16 %v2710, %v2694
        %v2799 = vpack.c.bf16 %v2711, %v2695
        %v2800 = vpack.c.bf16 %v2712, %v2696
        %v2801 = vpack.c.bf16 %v2713, %v2697
        %v2802 = vpack.c.bf16 %v2714, %v2698
        %v2803 = vpack.c.bf16 %v2715, %v2699
        %v2804 = vpack.c.bf16 %v2716, %v2700
        %v2805 = vpack.c.bf16 %v2717, %v2701
        %v2806 = vpack.c.bf16 %v2718, %v2702
        %v2807 = vpack.c.bf16 %v2719, %v2703
        %v2808 = vpack.c.bf16 %v2720, %v2704
        %v2809 = vpack.c.bf16 %v2721, %v2705
        %v2810 = vpack.c.bf16 %v2722, %v2706
        %v2811 = vpack.c.bf16 %v2723, %v2707
        %v2812 = vpack.c.bf16 %v2740, %v2724
        %v2813 = vpack.c.bf16 %v2741, %v2725
        %v2814 = vpack.c.bf16 %v2742, %v2726
        %v2815 = vpack.c.bf16 %v2743, %v2727
        %v2816 = vpack.c.bf16 %v2744, %v2728
        %v2817 = vpack.c.bf16 %v2745, %v2729
        %v2818 = vpack.c.bf16 %v2746, %v2730
        %v2819 = vpack.c.bf16 %v2747, %v2731
        %v2820 = vpack.c.bf16 %v2748, %v2732
        %v2821 = vpack.c.bf16 %v2749, %v2733
        %v2822 = vpack.c.bf16 %v2750, %v2734
        %v2823 = vpack.c.bf16 %v2751, %v2735
        %v2824 = vpack.c.bf16 %v2752, %v2736
        %v2825 = vpack.c.bf16 %v2753, %v2737
        %v2826 = vpack.c.bf16 %v2754, %v2738
        %v2827 = vpack.c.bf16 %v2755, %v2739
        %2829 = vset.pattern.permute.xlu0 0
        %2830 = vperm.xlu0 %2829, %v2760
        %v2831 = vpop.permute.xlu0 %2830
        %2834 = vset.pattern.permute.xlu0 0
        %2835 = vperm.xlu0 %2834, %v2761
        %v2836 = vpop.permute.xlu0 %2835
        %2839 = vset.pattern.permute.xlu0 0
        %2840 = vperm.xlu0 %2839, %v2762
        %v2841 = vpop.permute.xlu0 %2840
        %2844 = vset.pattern.permute.xlu0 0
        %2845 = vperm.xlu0 %2844, %v2763
        %v2846 = vpop.permute.xlu0 %2845
        %v2852 = vunpack.c.l.b16 %v2756
        %v2853 = vunpack.c.l.b16 %v2757
        %v2854 = vunpack.c.l.b16 %v2758
        %v2855 = vunpack.c.l.b16 %v2759
        %v2856 = vpack.c.b16 %v2853, %v2852
        %v2857 = vpack.c.b16 %v2855, %v2854
        %vm2858 = vcmask 523264
        %v2860 = vsel %vm2858, %v2856, 0
        %v2863 = vsel %vm2858, %v2857, 0
        %2865 = vmatpush.bf16.msra.mxu0 0
        %2866 = vmatpush.bf16.msra.mxu0 0
        %2867 = vmatpush.bf16.msra.mxu0 0
        %2868 = vmatpush.bf16.msra.mxu0 0
        %2869 = vmatpush.bf16.msra.mxu0 %v2812
        %2870 = vmatpush.bf16.msra.mxu0 %v2796
        %2871 = vmatpush.bf16.msra.mxu0 %v2780
        %2872 = vmatpush.bf16.msra.mxu0 %v2764
        %2873 = vmatmul.bf16.gmra.mxu0 %v2860
        %v2874 = vpop.f32.mrf.mxu0
        %v2875 = vadd.f32 %v2831, %v2874
        %v2876 = vpop.f32.mrf.mxu0
        %v2877 = vadd.f32 %v2836, %v2876
        %2878 = vmatmul.bf16.gmra.mxu0 %v2863
        %v2879 = vpop.f32.mrf.mxu0
        %v2880 = vadd.f32 %v2841, %v2879
        %v2881 = vpop.f32.mrf.mxu0
        %v2882 = vadd.f32 %v2846, %v2881
        %2883 = vdwg.mxu0
        %2884 = vmatpush.bf16.msra.mxu0 0
        %2885 = vmatpush.bf16.msra.mxu0 0
        %2886 = vmatpush.bf16.msra.mxu0 0
        %2887 = vmatpush.bf16.msra.mxu0 0
        %2888 = vmatpush.bf16.msra.mxu0 %v2813
        %2889 = vmatpush.bf16.msra.mxu0 %v2797
        %2890 = vmatpush.bf16.msra.mxu0 %v2781
        %2891 = vmatpush.bf16.msra.mxu0 %v2765
        %2892 = vmatmul.bf16.gmra.mxu0 %v2860
        %v2893 = vpop.f32.mrf.mxu0
        %v2894 = vadd.f32 %v2831, %v2893
        %v2895 = vpop.f32.mrf.mxu0
        %v2896 = vadd.f32 %v2836, %v2895
        %2897 = vmatmul.bf16.gmra.mxu0 %v2863
        %v2898 = vpop.f32.mrf.mxu0
        %v2899 = vadd.f32 %v2841, %v2898
        %v2900 = vpop.f32.mrf.mxu0
        %v2901 = vadd.f32 %v2846, %v2900
        %2902 = vdwg.mxu0
        %2903 = vmatpush.bf16.msra.mxu0 0
        %2904 = vmatpush.bf16.msra.mxu0 0
        %2905 = vmatpush.bf16.msra.mxu0 0
        %2906 = vmatpush.bf16.msra.mxu0 0
        %2907 = vmatpush.bf16.msra.mxu0 %v2814
        %2908 = vmatpush.bf16.msra.mxu0 %v2798
        %2909 = vmatpush.bf16.msra.mxu0 %v2782
        %2910 = vmatpush.bf16.msra.mxu0 %v2766
        %2911 = vmatmul.bf16.gmra.mxu0 %v2860
        %v2912 = vpop.f32.mrf.mxu0
        %v2913 = vadd.f32 %v2831, %v2912
        %v2914 = vpop.f32.mrf.mxu0
        %v2915 = vadd.f32 %v2836, %v2914
        %2916 = vmatmul.bf16.gmra.mxu0 %v2863
        %v2917 = vpop.f32.mrf.mxu0
        %v2918 = vadd.f32 %v2841, %v2917
        %v2919 = vpop.f32.mrf.mxu0
        %v2920 = vadd.f32 %v2846, %v2919
        %2921 = vdwg.mxu0
        %2922 = vmatpush.bf16.msra.mxu0 0
        %2923 = vmatpush.bf16.msra.mxu0 0
        %2924 = vmatpush.bf16.msra.mxu0 0
        %2925 = vmatpush.bf16.msra.mxu0 0
        %2926 = vmatpush.bf16.msra.mxu0 %v2815
        %2927 = vmatpush.bf16.msra.mxu0 %v2799
        %2928 = vmatpush.bf16.msra.mxu0 %v2783
        %2929 = vmatpush.bf16.msra.mxu0 %v2767
        %2930 = vmatmul.bf16.gmra.mxu0 %v2860
        %v2931 = vpop.f32.mrf.mxu0
        %v2932 = vadd.f32 %v2831, %v2931
        %v2933 = vpop.f32.mrf.mxu0
        %v2934 = vadd.f32 %v2836, %v2933
        %2935 = vmatmul.bf16.gmra.mxu0 %v2863
        %v2936 = vpop.f32.mrf.mxu0
        %v2937 = vadd.f32 %v2841, %v2936
        %v2938 = vpop.f32.mrf.mxu0
        %v2939 = vadd.f32 %v2846, %v2938
        %2940 = vdwg.mxu0
        %2941 = vmatpush.bf16.msra.mxu0 0
        %2942 = vmatpush.bf16.msra.mxu0 0
        %2943 = vmatpush.bf16.msra.mxu0 0
        %2944 = vmatpush.bf16.msra.mxu0 0
        %2945 = vmatpush.bf16.msra.mxu0 %v2816
        %2946 = vmatpush.bf16.msra.mxu0 %v2800
        %2947 = vmatpush.bf16.msra.mxu0 %v2784
        %2948 = vmatpush.bf16.msra.mxu0 %v2768
        %2949 = vmatmul.bf16.gmra.mxu0 %v2860
        %v2950 = vpop.f32.mrf.mxu0
        %v2951 = vadd.f32 %v2831, %v2950
        %v2952 = vpop.f32.mrf.mxu0
        %v2953 = vadd.f32 %v2836, %v2952
        %2954 = vmatmul.bf16.gmra.mxu0 %v2863
        %v2955 = vpop.f32.mrf.mxu0
        %v2956 = vadd.f32 %v2841, %v2955
        %v2957 = vpop.f32.mrf.mxu0
        %v2958 = vadd.f32 %v2846, %v2957
        %2959 = vdwg.mxu0
        %2960 = vmatpush.bf16.msra.mxu0 0
        %2961 = vmatpush.bf16.msra.mxu0 0
        %2962 = vmatpush.bf16.msra.mxu0 0
        %2963 = vmatpush.bf16.msra.mxu0 0
        %2964 = vmatpush.bf16.msra.mxu0 %v2817
        %2965 = vmatpush.bf16.msra.mxu0 %v2801
        %2966 = vmatpush.bf16.msra.mxu0 %v2785
        %2967 = vmatpush.bf16.msra.mxu0 %v2769
        %2968 = vmatmul.bf16.gmra.mxu0 %v2860
        %v2969 = vpop.f32.mrf.mxu0
        %v2970 = vadd.f32 %v2831, %v2969
        %v2971 = vpop.f32.mrf.mxu0
        %v2972 = vadd.f32 %v2836, %v2971
        %2973 = vmatmul.bf16.gmra.mxu0 %v2863
        %v2974 = vpop.f32.mrf.mxu0
        %v2975 = vadd.f32 %v2841, %v2974
        %v2976 = vpop.f32.mrf.mxu0
        %v2977 = vadd.f32 %v2846, %v2976
        %2978 = vdwg.mxu0
        %2979 = vmatpush.bf16.msra.mxu0 0
        %2980 = vmatpush.bf16.msra.mxu0 0
        %2981 = vmatpush.bf16.msra.mxu0 0
        %2982 = vmatpush.bf16.msra.mxu0 0
        %2983 = vmatpush.bf16.msra.mxu0 %v2818
        %2984 = vmatpush.bf16.msra.mxu0 %v2802
        %2985 = vmatpush.bf16.msra.mxu0 %v2786
        %2986 = vmatpush.bf16.msra.mxu0 %v2770
        %2987 = vmatmul.bf16.gmra.mxu0 %v2860
        %v2988 = vpop.f32.mrf.mxu0
        %v2989 = vadd.f32 %v2831, %v2988
        %v2990 = vpop.f32.mrf.mxu0
        %v2991 = vadd.f32 %v2836, %v2990
        %2992 = vmatmul.bf16.gmra.mxu0 %v2863
        %v2993 = vpop.f32.mrf.mxu0
        %v2994 = vadd.f32 %v2841, %v2993
        %v2995 = vpop.f32.mrf.mxu0
        %v2996 = vadd.f32 %v2846, %v2995
        %2997 = vdwg.mxu0
        %2998 = vmatpush.bf16.msra.mxu0 0
        %2999 = vmatpush.bf16.msra.mxu0 0
        %3000 = vmatpush.bf16.msra.mxu0 0
        %3001 = vmatpush.bf16.msra.mxu0 0
        %3002 = vmatpush.bf16.msra.mxu0 %v2819
        %3003 = vmatpush.bf16.msra.mxu0 %v2803
        %3004 = vmatpush.bf16.msra.mxu0 %v2787
        %3005 = vmatpush.bf16.msra.mxu0 %v2771
        %3006 = vmatmul.bf16.gmra.mxu0 %v2860
        %v3007 = vpop.f32.mrf.mxu0
        %v3008 = vadd.f32 %v2831, %v3007
        %v3009 = vpop.f32.mrf.mxu0
        %v3010 = vadd.f32 %v2836, %v3009
        %3011 = vmatmul.bf16.gmra.mxu0 %v2863
        %v3012 = vpop.f32.mrf.mxu0
        %v3013 = vadd.f32 %v2841, %v3012
        %v3014 = vpop.f32.mrf.mxu0
        %v3015 = vadd.f32 %v2846, %v3014
        %3016 = vdwg.mxu0
        %3017 = vmatpush.bf16.msra.mxu0 0
        %3018 = vmatpush.bf16.msra.mxu0 0
        %3019 = vmatpush.bf16.msra.mxu0 0
        %3020 = vmatpush.bf16.msra.mxu0 0
        %3021 = vmatpush.bf16.msra.mxu0 %v2820
        %3022 = vmatpush.bf16.msra.mxu0 %v2804
        %3023 = vmatpush.bf16.msra.mxu0 %v2788
        %3024 = vmatpush.bf16.msra.mxu0 %v2772
        %3025 = vmatmul.bf16.gmra.mxu0 %v2860
        %v3026 = vpop.f32.mrf.mxu0
        %v3027 = vadd.f32 %v2831, %v3026
        %v3028 = vpop.f32.mrf.mxu0
        %v3029 = vadd.f32 %v2836, %v3028
        %3030 = vmatmul.bf16.gmra.mxu0 %v2863
        %v3031 = vpop.f32.mrf.mxu0
        %v3032 = vadd.f32 %v2841, %v3031
        %v3033 = vpop.f32.mrf.mxu0
        %v3034 = vadd.f32 %v2846, %v3033
        %3035 = vdwg.mxu0
        %3036 = vmatpush.bf16.msra.mxu0 0
        %3037 = vmatpush.bf16.msra.mxu0 0
        %3038 = vmatpush.bf16.msra.mxu0 0
        %3039 = vmatpush.bf16.msra.mxu0 0
        %3040 = vmatpush.bf16.msra.mxu0 %v2821
        %3041 = vmatpush.bf16.msra.mxu0 %v2805
        %3042 = vmatpush.bf16.msra.mxu0 %v2789
        %3043 = vmatpush.bf16.msra.mxu0 %v2773
        %3044 = vmatmul.bf16.gmra.mxu0 %v2860
        %v3045 = vpop.f32.mrf.mxu0
        %v3046 = vadd.f32 %v2831, %v3045
        %v3047 = vpop.f32.mrf.mxu0
        %v3048 = vadd.f32 %v2836, %v3047
        %3049 = vmatmul.bf16.gmra.mxu0 %v2863
        %v3050 = vpop.f32.mrf.mxu0
        %v3051 = vadd.f32 %v2841, %v3050
        %v3052 = vpop.f32.mrf.mxu0
        %v3053 = vadd.f32 %v2846, %v3052
        %3054 = vdwg.mxu0
        %3055 = vmatpush.bf16.msra.mxu0 0
        %3056 = vmatpush.bf16.msra.mxu0 0
        %3057 = vmatpush.bf16.msra.mxu0 0
        %3058 = vmatpush.bf16.msra.mxu0 0
        %3059 = vmatpush.bf16.msra.mxu0 %v2822
        %3060 = vmatpush.bf16.msra.mxu0 %v2806
        %3061 = vmatpush.bf16.msra.mxu0 %v2790
        %3062 = vmatpush.bf16.msra.mxu0 %v2774
        %3063 = vmatmul.bf16.gmra.mxu0 %v2860
        %v3064 = vpop.f32.mrf.mxu0
        %v3065 = vadd.f32 %v2831, %v3064
        %v3066 = vpop.f32.mrf.mxu0
        %v3067 = vadd.f32 %v2836, %v3066
        %3068 = vmatmul.bf16.gmra.mxu0 %v2863
        %v3069 = vpop.f32.mrf.mxu0
        %v3070 = vadd.f32 %v2841, %v3069
        %v3071 = vpop.f32.mrf.mxu0
        %v3072 = vadd.f32 %v2846, %v3071
        %3073 = vdwg.mxu0
        %3074 = vmatpush.bf16.msra.mxu0 0
        %3075 = vmatpush.bf16.msra.mxu0 0
        %3076 = vmatpush.bf16.msra.mxu0 0
        %3077 = vmatpush.bf16.msra.mxu0 0
        %3078 = vmatpush.bf16.msra.mxu0 %v2823
        %3079 = vmatpush.bf16.msra.mxu0 %v2807
        %3080 = vmatpush.bf16.msra.mxu0 %v2791
        %3081 = vmatpush.bf16.msra.mxu0 %v2775
        %3082 = vmatmul.bf16.gmra.mxu0 %v2860
        %v3083 = vpop.f32.mrf.mxu0
        %v3084 = vadd.f32 %v2831, %v3083
        %v3085 = vpop.f32.mrf.mxu0
        %v3086 = vadd.f32 %v2836, %v3085
        %3087 = vmatmul.bf16.gmra.mxu0 %v2863
        %v3088 = vpop.f32.mrf.mxu0
        %v3089 = vadd.f32 %v2841, %v3088
        %v3090 = vpop.f32.mrf.mxu0
        %v3091 = vadd.f32 %v2846, %v3090
        %3092 = vdwg.mxu0
        %3093 = vmatpush.bf16.msra.mxu0 0
        %3094 = vmatpush.bf16.msra.mxu0 0
        %3095 = vmatpush.bf16.msra.mxu0 0
        %3096 = vmatpush.bf16.msra.mxu0 0
        %3097 = vmatpush.bf16.msra.mxu0 %v2824
        %3098 = vmatpush.bf16.msra.mxu0 %v2808
        %3099 = vmatpush.bf16.msra.mxu0 %v2792
        %3100 = vmatpush.bf16.msra.mxu0 %v2776
        %3101 = vmatmul.bf16.gmra.mxu0 %v2860
        %v3102 = vpop.f32.mrf.mxu0
        %v3103 = vadd.f32 %v2831, %v3102
        %v3104 = vpop.f32.mrf.mxu0
        %v3105 = vadd.f32 %v2836, %v3104
        %3106 = vmatmul.bf16.gmra.mxu0 %v2863
        %v3107 = vpop.f32.mrf.mxu0
        %v3108 = vadd.f32 %v2841, %v3107
        %v3109 = vpop.f32.mrf.mxu0
        %v3110 = vadd.f32 %v2846, %v3109
        %3111 = vdwg.mxu0
        %3112 = vmatpush.bf16.msra.mxu0 0
        %3113 = vmatpush.bf16.msra.mxu0 0
        %3114 = vmatpush.bf16.msra.mxu0 0
        %3115 = vmatpush.bf16.msra.mxu0 0
        %3116 = vmatpush.bf16.msra.mxu0 %v2825
        %3117 = vmatpush.bf16.msra.mxu0 %v2809
        %3118 = vmatpush.bf16.msra.mxu0 %v2793
        %3119 = vmatpush.bf16.msra.mxu0 %v2777
        %3120 = vmatmul.bf16.gmra.mxu0 %v2860
        %v3121 = vpop.f32.mrf.mxu0
        %v3122 = vadd.f32 %v2831, %v3121
        %v3123 = vpop.f32.mrf.mxu0
        %v3124 = vadd.f32 %v2836, %v3123
        %3125 = vmatmul.bf16.gmra.mxu0 %v2863
        %v3126 = vpop.f32.mrf.mxu0
        %v3127 = vadd.f32 %v2841, %v3126
        %v3128 = vpop.f32.mrf.mxu0
        %v3129 = vadd.f32 %v2846, %v3128
        %3130 = vdwg.mxu0
        %3131 = vmatpush.bf16.msra.mxu0 0
        %3132 = vmatpush.bf16.msra.mxu0 0
        %3133 = vmatpush.bf16.msra.mxu0 0
        %3134 = vmatpush.bf16.msra.mxu0 0
        %3135 = vmatpush.bf16.msra.mxu0 %v2826
        %3136 = vmatpush.bf16.msra.mxu0 %v2810
        %3137 = vmatpush.bf16.msra.mxu0 %v2794
        %3138 = vmatpush.bf16.msra.mxu0 %v2778
        %3139 = vmatmul.bf16.gmra.mxu0 %v2860
        %v3140 = vpop.f32.mrf.mxu0
        %v3141 = vadd.f32 %v2831, %v3140
        %v3142 = vpop.f32.mrf.mxu0
        %v3143 = vadd.f32 %v2836, %v3142
        %3144 = vmatmul.bf16.gmra.mxu0 %v2863
        %v3145 = vpop.f32.mrf.mxu0
        %v3146 = vadd.f32 %v2841, %v3145
        %v3147 = vpop.f32.mrf.mxu0
        %v3148 = vadd.f32 %v2846, %v3147
        %3149 = vdwg.mxu0
        %3150 = vmatpush.bf16.msra.mxu0 0
        %3151 = vmatpush.bf16.msra.mxu0 0
        %3152 = vmatpush.bf16.msra.mxu0 0
        %3153 = vmatpush.bf16.msra.mxu0 0
        %3154 = vmatpush.bf16.msra.mxu0 %v2827
        %3155 = vmatpush.bf16.msra.mxu0 %v2811
        %3156 = vmatpush.bf16.msra.mxu0 %v2795
        %3157 = vmatpush.bf16.msra.mxu0 %v2779
        %3158 = vmatmul.bf16.gmra.mxu0 %v2860
        %v3159 = vpop.f32.mrf.mxu0
        %v3160 = vadd.f32 %v2831, %v3159
        %v3161 = vpop.f32.mrf.mxu0
        %v3162 = vadd.f32 %v2836, %v3161
        %3163 = vmatmul.bf16.gmra.mxu0 %v2863
        %v3164 = vpop.f32.mrf.mxu0
        %v3165 = vadd.f32 %v2841, %v3164
        %v3166 = vpop.f32.mrf.mxu0
        %v3167 = vadd.f32 %v2846, %v3166
        %3168 = vdwg.mxu0
        %v3169 = vmul.f32 %v2875, 0.5
        %v3170 = vmul.f32 %v2894, 0.5
        %v3171 = vmul.f32 %v2913, 0.5
        %v3172 = vmul.f32 %v2932, 0.5
        %v3173 = vmul.f32 %v2951, 0.5
        %v3174 = vmul.f32 %v2970, 0.5
        %v3175 = vmul.f32 %v2989, 0.5
        %v3176 = vmul.f32 %v3008, 0.5
        %v3177 = vmul.f32 %v3027, 0.5
        %v3178 = vmul.f32 %v3046, 0.5
        %v3179 = vmul.f32 %v3065, 0.5
        %v3180 = vmul.f32 %v3084, 0.5
        %v3181 = vmul.f32 %v3103, 0.5
        %v3182 = vmul.f32 %v3122, 0.5
        %v3183 = vmul.f32 %v3141, 0.5
        %v3184 = vmul.f32 %v3160, 0.5
        %v3185 = vmul.f32 %v2877, 0.5
        %v3186 = vmul.f32 %v2896, 0.5
        %v3187 = vmul.f32 %v2915, 0.5
        %v3188 = vmul.f32 %v2934, 0.5
        %v3189 = vmul.f32 %v2953, 0.5
        %v3190 = vmul.f32 %v2972, 0.5
        %v3191 = vmul.f32 %v2991, 0.5
        %v3192 = vmul.f32 %v3010, 0.5
        %v3193 = vmul.f32 %v3029, 0.5
        %v3194 = vmul.f32 %v3048, 0.5
        %v3195 = vmul.f32 %v3067, 0.5
        %v3196 = vmul.f32 %v3086, 0.5
        %v3197 = vmul.f32 %v3105, 0.5
        %v3198 = vmul.f32 %v3124, 0.5
        %v3199 = vmul.f32 %v3143, 0.5
        %v3200 = vmul.f32 %v3162, 0.5
        %v3201 = vmul.f32 %v2880, 0.5
        %v3202 = vmul.f32 %v2899, 0.5
        %v3203 = vmul.f32 %v2918, 0.5
        %v3204 = vmul.f32 %v2937, 0.5
        %v3205 = vmul.f32 %v2956, 0.5
        %v3206 = vmul.f32 %v2975, 0.5
        %v3207 = vmul.f32 %v2994, 0.5
        %v3208 = vmul.f32 %v3013, 0.5
        %v3209 = vmul.f32 %v3032, 0.5
        %v3210 = vmul.f32 %v3051, 0.5
        %v3211 = vmul.f32 %v3070, 0.5
        %v3212 = vmul.f32 %v3089, 0.5
        %v3213 = vmul.f32 %v3108, 0.5
        %v3214 = vmul.f32 %v3127, 0.5
        %v3215 = vmul.f32 %v3146, 0.5
        %v3216 = vmul.f32 %v3165, 0.5
        %v3217 = vmul.f32 %v2882, 0.5
        %v3218 = vmul.f32 %v2901, 0.5
        %v3219 = vmul.f32 %v2920, 0.5
        %v3220 = vmul.f32 %v2939, 0.5
        %v3221 = vmul.f32 %v2958, 0.5
        %v3222 = vmul.f32 %v2977, 0.5
        %v3223 = vmul.f32 %v2996, 0.5
        %v3224 = vmul.f32 %v3015, 0.5
        %v3225 = vmul.f32 %v3034, 0.5
        %v3226 = vmul.f32 %v3053, 0.5
        %v3227 = vmul.f32 %v3072, 0.5
        %v3228 = vmul.f32 %v3091, 0.5
        %v3229 = vmul.f32 %v3110, 0.5
        %v3230 = vmul.f32 %v3129, 0.5
        %v3231 = vmul.f32 %v3148, 0.5
        %v3232 = vmul.f32 %v3167, 0.5
        %v3233 = vmul.f32 %v2875, 0.044715
        %v3234 = vmul.f32 %v2894, 0.044715
        %v3235 = vmul.f32 %v2913, 0.044715
        %v3236 = vmul.f32 %v2932, 0.044715
        %v3237 = vmul.f32 %v2951, 0.044715
        %v3238 = vmul.f32 %v2970, 0.044715
        %v3239 = vmul.f32 %v2989, 0.044715
        %v3240 = vmul.f32 %v3008, 0.044715
        %v3241 = vmul.f32 %v3027, 0.044715
        %v3242 = vmul.f32 %v3046, 0.044715
        %v3243 = vmul.f32 %v3065, 0.044715
        %v3244 = vmul.f32 %v3084, 0.044715
        %v3245 = vmul.f32 %v3103, 0.044715
        %v3246 = vmul.f32 %v3122, 0.044715
        %v3247 = vmul.f32 %v3141, 0.044715
        %v3248 = vmul.f32 %v3160, 0.044715
        %v3249 = vmul.f32 %v2877, 0.044715
        %v3250 = vmul.f32 %v2896, 0.044715
        %v3251 = vmul.f32 %v2915, 0.044715
        %v3252 = vmul.f32 %v2934, 0.044715
        %v3253 = vmul.f32 %v2953, 0.044715
        %v3254 = vmul.f32 %v2972, 0.044715
        %v3255 = vmul.f32 %v2991, 0.044715
        %v3256 = vmul.f32 %v3010, 0.044715
        %v3257 = vmul.f32 %v3029, 0.044715
        %v3258 = vmul.f32 %v3048, 0.044715
        %v3259 = vmul.f32 %v3067, 0.044715
        %v3260 = vmul.f32 %v3086, 0.044715
        %v3261 = vmul.f32 %v3105, 0.044715
        %v3262 = vmul.f32 %v3124, 0.044715
        %v3263 = vmul.f32 %v3143, 0.044715
        %v3264 = vmul.f32 %v3162, 0.044715
        %v3265 = vmul.f32 %v2880, 0.044715
        %v3266 = vmul.f32 %v2899, 0.044715
        %v3267 = vmul.f32 %v2918, 0.044715
        %v3268 = vmul.f32 %v2937, 0.044715
        %v3269 = vmul.f32 %v2956, 0.044715
        %v3270 = vmul.f32 %v2975, 0.044715
        %v3271 = vmul.f32 %v2994, 0.044715
        %v3272 = vmul.f32 %v3013, 0.044715
        %v3273 = vmul.f32 %v3032, 0.044715
        %v3274 = vmul.f32 %v3051, 0.044715
        %v3275 = vmul.f32 %v3070, 0.044715
        %v3276 = vmul.f32 %v3089, 0.044715
        %v3277 = vmul.f32 %v3108, 0.044715
        %v3278 = vmul.f32 %v3127, 0.044715
        %v3279 = vmul.f32 %v3146, 0.044715
        %v3280 = vmul.f32 %v3165, 0.044715
        %v3281 = vmul.f32 %v2882, 0.044715
        %v3282 = vmul.f32 %v2901, 0.044715
        %v3283 = vmul.f32 %v2920, 0.044715
        %v3284 = vmul.f32 %v2939, 0.044715
        %v3285 = vmul.f32 %v2958, 0.044715
        %v3286 = vmul.f32 %v2977, 0.044715
        %v3287 = vmul.f32 %v2996, 0.044715
        %v3288 = vmul.f32 %v3015, 0.044715
        %v3289 = vmul.f32 %v3034, 0.044715
        %v3290 = vmul.f32 %v3053, 0.044715
        %v3291 = vmul.f32 %v3072, 0.044715
        %v3292 = vmul.f32 %v3091, 0.044715
        %v3293 = vmul.f32 %v3110, 0.044715
        %v3294 = vmul.f32 %v3129, 0.044715
        %v3295 = vmul.f32 %v3148, 0.044715
        %v3296 = vmul.f32 %v3167, 0.044715
        %v3297 = vmul.f32 %v3233, %v2875
        %v3298 = vmul.f32 %v3234, %v2894
        %v3299 = vmul.f32 %v3235, %v2913
        %v3300 = vmul.f32 %v3236, %v2932
        %v3301 = vmul.f32 %v3237, %v2951
        %v3302 = vmul.f32 %v3238, %v2970
        %v3303 = vmul.f32 %v3239, %v2989
        %v3304 = vmul.f32 %v3240, %v3008
        %v3305 = vmul.f32 %v3241, %v3027
        %v3306 = vmul.f32 %v3242, %v3046
        %v3307 = vmul.f32 %v3243, %v3065
        %v3308 = vmul.f32 %v3244, %v3084
        %v3309 = vmul.f32 %v3245, %v3103
        %v3310 = vmul.f32 %v3246, %v3122
        %v3311 = vmul.f32 %v3247, %v3141
        %v3312 = vmul.f32 %v3248, %v3160
        %v3313 = vmul.f32 %v3249, %v2877
        %v3314 = vmul.f32 %v3250, %v2896
        %v3315 = vmul.f32 %v3251, %v2915
        %v3316 = vmul.f32 %v3252, %v2934
        %v3317 = vmul.f32 %v3253, %v2953
        %v3318 = vmul.f32 %v3254, %v2972
        %v3319 = vmul.f32 %v3255, %v2991
        %v3320 = vmul.f32 %v3256, %v3010
        %v3321 = vmul.f32 %v3257, %v3029
        %v3322 = vmul.f32 %v3258, %v3048
        %v3323 = vmul.f32 %v3259, %v3067
        %v3324 = vmul.f32 %v3260, %v3086
        %v3325 = vmul.f32 %v3261, %v3105
        %v3326 = vmul.f32 %v3262, %v3124
        %v3327 = vmul.f32 %v3263, %v3143
        %v3328 = vmul.f32 %v3264, %v3162
        %v3329 = vmul.f32 %v3265, %v2880
        %v3330 = vmul.f32 %v3266, %v2899
        %v3331 = vmul.f32 %v3267, %v2918
        %v3332 = vmul.f32 %v3268, %v2937
        %v3333 = vmul.f32 %v3269, %v2956
        %v3334 = vmul.f32 %v3270, %v2975
        %v3335 = vmul.f32 %v3271, %v2994
        %v3336 = vmul.f32 %v3272, %v3013
        %v3337 = vmul.f32 %v3273, %v3032
        %v3338 = vmul.f32 %v3274, %v3051
        %v3339 = vmul.f32 %v3275, %v3070
        %v3340 = vmul.f32 %v3276, %v3089
        %v3341 = vmul.f32 %v3277, %v3108
        %v3342 = vmul.f32 %v3278, %v3127
        %v3343 = vmul.f32 %v3279, %v3146
        %v3344 = vmul.f32 %v3280, %v3165
        %v3345 = vmul.f32 %v3281, %v2882
        %v3346 = vmul.f32 %v3282, %v2901
        %v3347 = vmul.f32 %v3283, %v2920
        %v3348 = vmul.f32 %v3284, %v2939
        %v3349 = vmul.f32 %v3285, %v2958
        %v3350 = vmul.f32 %v3286, %v2977
        %v3351 = vmul.f32 %v3287, %v2996
        %v3352 = vmul.f32 %v3288, %v3015
        %v3353 = vmul.f32 %v3289, %v3034
        %v3354 = vmul.f32 %v3290, %v3053
        %v3355 = vmul.f32 %v3291, %v3072
        %v3356 = vmul.f32 %v3292, %v3091
        %v3357 = vmul.f32 %v3293, %v3110
        %v3358 = vmul.f32 %v3294, %v3129
        %v3359 = vmul.f32 %v3295, %v3148
        %v3360 = vmul.f32 %v3296, %v3167
        %v3361 = vmul.f32 %v3297, %v2875
        %v3362 = vmul.f32 %v3298, %v2894
        %v3363 = vmul.f32 %v3299, %v2913
        %v3364 = vmul.f32 %v3300, %v2932
        %v3365 = vmul.f32 %v3301, %v2951
        %v3366 = vmul.f32 %v3302, %v2970
        %v3367 = vmul.f32 %v3303, %v2989
        %v3368 = vmul.f32 %v3304, %v3008
        %v3369 = vmul.f32 %v3305, %v3027
        %v3370 = vmul.f32 %v3306, %v3046
        %v3371 = vmul.f32 %v3307, %v3065
        %v3372 = vmul.f32 %v3308, %v3084
        %v3373 = vmul.f32 %v3309, %v3103
        %v3374 = vmul.f32 %v3310, %v3122
        %v3375 = vmul.f32 %v3311, %v3141
        %v3376 = vmul.f32 %v3312, %v3160
        %v3377 = vmul.f32 %v3313, %v2877
        %v3378 = vmul.f32 %v3314, %v2896
        %v3379 = vmul.f32 %v3315, %v2915
        %v3380 = vmul.f32 %v3316, %v2934
        %v3381 = vmul.f32 %v3317, %v2953
        %v3382 = vmul.f32 %v3318, %v2972
        %v3383 = vmul.f32 %v3319, %v2991
        %v3384 = vmul.f32 %v3320, %v3010
        %v3385 = vmul.f32 %v3321, %v3029
        %v3386 = vmul.f32 %v3322, %v3048
        %v3387 = vmul.f32 %v3323, %v3067
        %v3388 = vmul.f32 %v3324, %v3086
        %v3389 = vmul.f32 %v3325, %v3105
        %v3390 = vmul.f32 %v3326, %v3124
        %v3391 = vmul.f32 %v3327, %v3143
        %v3392 = vmul.f32 %v3328, %v3162
        %v3393 = vmul.f32 %v3329, %v2880
        %v3394 = vmul.f32 %v3330, %v2899
        %v3395 = vmul.f32 %v3331, %v2918
        %v3396 = vmul.f32 %v3332, %v2937
        %v3397 = vmul.f32 %v3333, %v2956
        %v3398 = vmul.f32 %v3334, %v2975
        %v3399 = vmul.f32 %v3335, %v2994
        %v3400 = vmul.f32 %v3336, %v3013
        %v3401 = vmul.f32 %v3337, %v3032
        %v3402 = vmul.f32 %v3338, %v3051
        %v3403 = vmul.f32 %v3339, %v3070
        %v3404 = vmul.f32 %v3340, %v3089
        %v3405 = vmul.f32 %v3341, %v3108
        %v3406 = vmul.f32 %v3342, %v3127
        %v3407 = vmul.f32 %v3343, %v3146
        %v3408 = vmul.f32 %v3344, %v3165
        %v3409 = vmul.f32 %v3345, %v2882
        %v3410 = vmul.f32 %v3346, %v2901
        %v3411 = vmul.f32 %v3347, %v2920
        %v3412 = vmul.f32 %v3348, %v2939
        %v3413 = vmul.f32 %v3349, %v2958
        %v3414 = vmul.f32 %v3350, %v2977
        %v3415 = vmul.f32 %v3351, %v2996
        %v3416 = vmul.f32 %v3352, %v3015
        %v3417 = vmul.f32 %v3353, %v3034
        %v3418 = vmul.f32 %v3354, %v3053
        %v3419 = vmul.f32 %v3355, %v3072
        %v3420 = vmul.f32 %v3356, %v3091
        %v3421 = vmul.f32 %v3357, %v3110
        %v3422 = vmul.f32 %v3358, %v3129
        %v3423 = vmul.f32 %v3359, %v3148
        %v3424 = vmul.f32 %v3360, %v3167
        %v3425 = vadd.f32 %v2875, %v3361
        %v3426 = vadd.f32 %v2894, %v3362
        %v3427 = vadd.f32 %v2913, %v3363
        %v3428 = vadd.f32 %v2932, %v3364
        %v3429 = vadd.f32 %v2951, %v3365
        %v3430 = vadd.f32 %v2970, %v3366
        %v3431 = vadd.f32 %v2989, %v3367
        %v3432 = vadd.f32 %v3008, %v3368
        %v3433 = vadd.f32 %v3027, %v3369
        %v3434 = vadd.f32 %v3046, %v3370
        %v3435 = vadd.f32 %v3065, %v3371
        %v3436 = vadd.f32 %v3084, %v3372
        %v3437 = vadd.f32 %v3103, %v3373
        %v3438 = vadd.f32 %v3122, %v3374
        %v3439 = vadd.f32 %v3141, %v3375
        %v3440 = vadd.f32 %v3160, %v3376
        %v3441 = vadd.f32 %v2877, %v3377
        %v3442 = vadd.f32 %v2896, %v3378
        %v3443 = vadd.f32 %v2915, %v3379
        %v3444 = vadd.f32 %v2934, %v3380
        %v3445 = vadd.f32 %v2953, %v3381
        %v3446 = vadd.f32 %v2972, %v3382
        %v3447 = vadd.f32 %v2991, %v3383
        %v3448 = vadd.f32 %v3010, %v3384
        %v3449 = vadd.f32 %v3029, %v3385
        %v3450 = vadd.f32 %v3048, %v3386
        %v3451 = vadd.f32 %v3067, %v3387
        %v3452 = vadd.f32 %v3086, %v3388
        %v3453 = vadd.f32 %v3105, %v3389
        %v3454 = vadd.f32 %v3124, %v3390
        %v3455 = vadd.f32 %v3143, %v3391
        %v3456 = vadd.f32 %v3162, %v3392
        %v3457 = vadd.f32 %v2880, %v3393
        %v3458 = vadd.f32 %v2899, %v3394
        %v3459 = vadd.f32 %v2918, %v3395
        %v3460 = vadd.f32 %v2937, %v3396
        %v3461 = vadd.f32 %v2956, %v3397
        %v3462 = vadd.f32 %v2975, %v3398
        %v3463 = vadd.f32 %v2994, %v3399
        %v3464 = vadd.f32 %v3013, %v3400
        %v3465 = vadd.f32 %v3032, %v3401
        %v3466 = vadd.f32 %v3051, %v3402
        %v3467 = vadd.f32 %v3070, %v3403
        %v3468 = vadd.f32 %v3089, %v3404
        %v3469 = vadd.f32 %v3108, %v3405
        %v3470 = vadd.f32 %v3127, %v3406
        %v3471 = vadd.f32 %v3146, %v3407
        %v3472 = vadd.f32 %v3165, %v3408
        %v3473 = vadd.f32 %v2882, %v3409
        %v3474 = vadd.f32 %v2901, %v3410
        %v3475 = vadd.f32 %v2920, %v3411
        %v3476 = vadd.f32 %v2939, %v3412
        %v3477 = vadd.f32 %v2958, %v3413
        %v3478 = vadd.f32 %v2977, %v3414
        %v3479 = vadd.f32 %v2996, %v3415
        %v3480 = vadd.f32 %v3015, %v3416
        %v3481 = vadd.f32 %v3034, %v3417
        %v3482 = vadd.f32 %v3053, %v3418
        %v3483 = vadd.f32 %v3072, %v3419
        %v3484 = vadd.f32 %v3091, %v3420
        %v3485 = vadd.f32 %v3110, %v3421
        %v3486 = vadd.f32 %v3129, %v3422
        %v3487 = vadd.f32 %v3148, %v3423
        %v3488 = vadd.f32 %v3167, %v3424
        %v3489 = vmul.f32 %v3425, 0.7978846
        %v3490 = vmul.f32 %v3426, 0.7978846
        %v3491 = vmul.f32 %v3427, 0.7978846
        %v3492 = vmul.f32 %v3428, 0.7978846
        %v3493 = vmul.f32 %v3429, 0.7978846
        %v3494 = vmul.f32 %v3430, 0.7978846
        %v3495 = vmul.f32 %v3431, 0.7978846
        %v3496 = vmul.f32 %v3432, 0.7978846
        %v3497 = vmul.f32 %v3433, 0.7978846
        %v3498 = vmul.f32 %v3434, 0.7978846
        %v3499 = vmul.f32 %v3435, 0.7978846
        %v3500 = vmul.f32 %v3436, 0.7978846
        %v3501 = vmul.f32 %v3437, 0.7978846
        %v3502 = vmul.f32 %v3438, 0.7978846
        %v3503 = vmul.f32 %v3439, 0.7978846
        %v3504 = vmul.f32 %v3440, 0.7978846
        %v3505 = vmul.f32 %v3441, 0.7978846
        %v3506 = vmul.f32 %v3442, 0.7978846
        %v3507 = vmul.f32 %v3443, 0.7978846
        %v3508 = vmul.f32 %v3444, 0.7978846
        %v3509 = vmul.f32 %v3445, 0.7978846
        %v3510 = vmul.f32 %v3446, 0.7978846
        %v3511 = vmul.f32 %v3447, 0.7978846
        %v3512 = vmul.f32 %v3448, 0.7978846
        %v3513 = vmul.f32 %v3449, 0.7978846
        %v3514 = vmul.f32 %v3450, 0.7978846
        %v3515 = vmul.f32 %v3451, 0.7978846
        %v3516 = vmul.f32 %v3452, 0.7978846
        %v3517 = vmul.f32 %v3453, 0.7978846
        %v3518 = vmul.f32 %v3454, 0.7978846
        %v3519 = vmul.f32 %v3455, 0.7978846
        %v3520 = vmul.f32 %v3456, 0.7978846
        %v3521 = vmul.f32 %v3457, 0.7978846
        %v3522 = vmul.f32 %v3458, 0.7978846
        %v3523 = vmul.f32 %v3459, 0.7978846
        %v3524 = vmul.f32 %v3460, 0.7978846
        %v3525 = vmul.f32 %v3461, 0.7978846
        %v3526 = vmul.f32 %v3462, 0.7978846
        %v3527 = vmul.f32 %v3463, 0.7978846
        %v3528 = vmul.f32 %v3464, 0.7978846
        %v3529 = vmul.f32 %v3465, 0.7978846
        %v3530 = vmul.f32 %v3466, 0.7978846
        %v3531 = vmul.f32 %v3467, 0.7978846
        %v3532 = vmul.f32 %v3468, 0.7978846
        %v3533 = vmul.f32 %v3469, 0.7978846
        %v3534 = vmul.f32 %v3470, 0.7978846
        %v3535 = vmul.f32 %v3471, 0.7978846
        %v3536 = vmul.f32 %v3472, 0.7978846
        %v3537 = vmul.f32 %v3473, 0.7978846
        %v3538 = vmul.f32 %v3474, 0.7978846
        %v3539 = vmul.f32 %v3475, 0.7978846
        %v3540 = vmul.f32 %v3476, 0.7978846
        %v3541 = vmul.f32 %v3477, 0.7978846
        %v3542 = vmul.f32 %v3478, 0.7978846
        %v3543 = vmul.f32 %v3479, 0.7978846
        %v3544 = vmul.f32 %v3480, 0.7978846
        %v3545 = vmul.f32 %v3481, 0.7978846
        %v3546 = vmul.f32 %v3482, 0.7978846
        %v3547 = vmul.f32 %v3483, 0.7978846
        %v3548 = vmul.f32 %v3484, 0.7978846
        %v3549 = vmul.f32 %v3485, 0.7978846
        %v3550 = vmul.f32 %v3486, 0.7978846
        %v3551 = vmul.f32 %v3487, 0.7978846
        %v3552 = vmul.f32 %v3488, 0.7978846
        %v3553 = vtanh.pop %v3489
        %v3554 = vtanh.pop %v3490
        %v3555 = vtanh.pop %v3491
        %v3556 = vtanh.pop %v3492
        %v3557 = vtanh.pop %v3493
        %v3558 = vtanh.pop %v3494
        %v3559 = vtanh.pop %v3495
        %v3560 = vtanh.pop %v3496
        %v3561 = vtanh.pop %v3497
        %v3562 = vtanh.pop %v3498
        %v3563 = vtanh.pop %v3499
        %v3564 = vtanh.pop %v3500
        %v3565 = vtanh.pop %v3501
        %v3566 = vtanh.pop %v3502
        %v3567 = vtanh.pop %v3503
        %v3568 = vtanh.pop %v3504
        %v3569 = vtanh.pop %v3505
        %v3570 = vtanh.pop %v3506
        %v3571 = vtanh.pop %v3507
        %v3572 = vtanh.pop %v3508
        %v3573 = vtanh.pop %v3509
        %v3574 = vtanh.pop %v3510
        %v3575 = vtanh.pop %v3511
        %v3576 = vtanh.pop %v3512
        %v3577 = vtanh.pop %v3513
        %v3578 = vtanh.pop %v3514
        %v3579 = vtanh.pop %v3515
        %v3580 = vtanh.pop %v3516
        %v3581 = vtanh.pop %v3517
        %v3582 = vtanh.pop %v3518
        %v3583 = vtanh.pop %v3519
        %v3584 = vtanh.pop %v3520
        %v3585 = vtanh.pop %v3521
        %v3586 = vtanh.pop %v3522
        %v3587 = vtanh.pop %v3523
        %v3588 = vtanh.pop %v3524
        %v3589 = vtanh.pop %v3525
        %v3590 = vtanh.pop %v3526
        %v3591 = vtanh.pop %v3527
        %v3592 = vtanh.pop %v3528
        %v3593 = vtanh.pop %v3529
        %v3594 = vtanh.pop %v3530
        %v3595 = vtanh.pop %v3531
        %v3596 = vtanh.pop %v3532
        %v3597 = vtanh.pop %v3533
        %v3598 = vtanh.pop %v3534
        %v3599 = vtanh.pop %v3535
        %v3600 = vtanh.pop %v3536
        %v3601 = vtanh.pop %v3537
        %v3602 = vtanh.pop %v3538
        %v3603 = vtanh.pop %v3539
        %v3604 = vtanh.pop %v3540
        %v3605 = vtanh.pop %v3541
        %v3606 = vtanh.pop %v3542
        %v3607 = vtanh.pop %v3543
        %v3608 = vtanh.pop %v3544
        %v3609 = vtanh.pop %v3545
        %v3610 = vtanh.pop %v3546
        %v3611 = vtanh.pop %v3547
        %v3612 = vtanh.pop %v3548
        %v3613 = vtanh.pop %v3549
        %v3614 = vtanh.pop %v3550
        %v3615 = vtanh.pop %v3551
        %v3616 = vtanh.pop %v3552
        %v3617 = vadd.f32 %v3553, 1.0
        %v3618 = vadd.f32 %v3554, 1.0
        %v3619 = vadd.f32 %v3555, 1.0
        %v3620 = vadd.f32 %v3556, 1.0
        %v3621 = vadd.f32 %v3557, 1.0
        %v3622 = vadd.f32 %v3558, 1.0
        %v3623 = vadd.f32 %v3559, 1.0
        %v3624 = vadd.f32 %v3560, 1.0
        %v3625 = vadd.f32 %v3561, 1.0
        %v3626 = vadd.f32 %v3562, 1.0
        %v3627 = vadd.f32 %v3563, 1.0
        %v3628 = vadd.f32 %v3564, 1.0
        %v3629 = vadd.f32 %v3565, 1.0
        %v3630 = vadd.f32 %v3566, 1.0
        %v3631 = vadd.f32 %v3567, 1.0
        %v3632 = vadd.f32 %v3568, 1.0
        %v3633 = vadd.f32 %v3569, 1.0
        %v3634 = vadd.f32 %v3570, 1.0
        %v3635 = vadd.f32 %v3571, 1.0
        %v3636 = vadd.f32 %v3572, 1.0
        %v3637 = vadd.f32 %v3573, 1.0
        %v3638 = vadd.f32 %v3574, 1.0
        %v3639 = vadd.f32 %v3575, 1.0
        %v3640 = vadd.f32 %v3576, 1.0
        %v3641 = vadd.f32 %v3577, 1.0
        %v3642 = vadd.f32 %v3578, 1.0
        %v3643 = vadd.f32 %v3579, 1.0
        %v3644 = vadd.f32 %v3580, 1.0
        %v3645 = vadd.f32 %v3581, 1.0
        %v3646 = vadd.f32 %v3582, 1.0
        %v3647 = vadd.f32 %v3583, 1.0
        %v3648 = vadd.f32 %v3584, 1.0
        %v3649 = vadd.f32 %v3585, 1.0
        %v3650 = vadd.f32 %v3586, 1.0
        %v3651 = vadd.f32 %v3587, 1.0
        %v3652 = vadd.f32 %v3588, 1.0
        %v3653 = vadd.f32 %v3589, 1.0
        %v3654 = vadd.f32 %v3590, 1.0
        %v3655 = vadd.f32 %v3591, 1.0
        %v3656 = vadd.f32 %v3592, 1.0
        %v3657 = vadd.f32 %v3593, 1.0
        %v3658 = vadd.f32 %v3594, 1.0
        %v3659 = vadd.f32 %v3595, 1.0
        %v3660 = vadd.f32 %v3596, 1.0
        %v3661 = vadd.f32 %v3597, 1.0
        %v3662 = vadd.f32 %v3598, 1.0
        %v3663 = vadd.f32 %v3599, 1.0
        %v3664 = vadd.f32 %v3600, 1.0
        %v3665 = vadd.f32 %v3601, 1.0
        %v3666 = vadd.f32 %v3602, 1.0
        %v3667 = vadd.f32 %v3603, 1.0
        %v3668 = vadd.f32 %v3604, 1.0
        %v3669 = vadd.f32 %v3605, 1.0
        %v3670 = vadd.f32 %v3606, 1.0
        %v3671 = vadd.f32 %v3607, 1.0
        %v3672 = vadd.f32 %v3608, 1.0
        %v3673 = vadd.f32 %v3609, 1.0
        %v3674 = vadd.f32 %v3610, 1.0
        %v3675 = vadd.f32 %v3611, 1.0
        %v3676 = vadd.f32 %v3612, 1.0
        %v3677 = vadd.f32 %v3613, 1.0
        %v3678 = vadd.f32 %v3614, 1.0
        %v3679 = vadd.f32 %v3615, 1.0
        %v3680 = vadd.f32 %v3616, 1.0
        %v3681 = vmul.f32 %v3169, %v3617
        %v3682 = vmul.f32 %v3170, %v3618
        %v3683 = vmul.f32 %v3171, %v3619
        %v3684 = vmul.f32 %v3172, %v3620
        %v3685 = vmul.f32 %v3173, %v3621
        %v3686 = vmul.f32 %v3174, %v3622
        %v3687 = vmul.f32 %v3175, %v3623
        %v3688 = vmul.f32 %v3176, %v3624
        %v3689 = vmul.f32 %v3177, %v3625
        %v3690 = vmul.f32 %v3178, %v3626
        %v3691 = vmul.f32 %v3179, %v3627
        %v3692 = vmul.f32 %v3180, %v3628
        %v3693 = vmul.f32 %v3181, %v3629
        %v3694 = vmul.f32 %v3182, %v3630
        %v3695 = vmul.f32 %v3183, %v3631
        %v3696 = vmul.f32 %v3184, %v3632
        %v3697 = vmul.f32 %v3185, %v3633
        %v3698 = vmul.f32 %v3186, %v3634
        %v3699 = vmul.f32 %v3187, %v3635
        %v3700 = vmul.f32 %v3188, %v3636
        %v3701 = vmul.f32 %v3189, %v3637
        %v3702 = vmul.f32 %v3190, %v3638
        %v3703 = vmul.f32 %v3191, %v3639
        %v3704 = vmul.f32 %v3192, %v3640
        %v3705 = vmul.f32 %v3193, %v3641
        %v3706 = vmul.f32 %v3194, %v3642
        %v3707 = vmul.f32 %v3195, %v3643
        %v3708 = vmul.f32 %v3196, %v3644
        %v3709 = vmul.f32 %v3197, %v3645
        %v3710 = vmul.f32 %v3198, %v3646
        %v3711 = vmul.f32 %v3199, %v3647
        %v3712 = vmul.f32 %v3200, %v3648
        %v3713 = vmul.f32 %v3201, %v3649
        %v3714 = vmul.f32 %v3202, %v3650
        %v3715 = vmul.f32 %v3203, %v3651
        %v3716 = vmul.f32 %v3204, %v3652
        %v3717 = vmul.f32 %v3205, %v3653
        %v3718 = vmul.f32 %v3206, %v3654
        %v3719 = vmul.f32 %v3207, %v3655
        %v3720 = vmul.f32 %v3208, %v3656
        %v3721 = vmul.f32 %v3209, %v3657
        %v3722 = vmul.f32 %v3210, %v3658
        %v3723 = vmul.f32 %v3211, %v3659
        %v3724 = vmul.f32 %v3212, %v3660
        %v3725 = vmul.f32 %v3213, %v3661
        %v3726 = vmul.f32 %v3214, %v3662
        %v3727 = vmul.f32 %v3215, %v3663
        %v3728 = vmul.f32 %v3216, %v3664
        %v3729 = vmul.f32 %v3217, %v3665
        %v3730 = vmul.f32 %v3218, %v3666
        %v3731 = vmul.f32 %v3219, %v3667
        %v3732 = vmul.f32 %v3220, %v3668
        %v3733 = vmul.f32 %v3221, %v3669
        %v3734 = vmul.f32 %v3222, %v3670
        %v3735 = vmul.f32 %v3223, %v3671
        %v3736 = vmul.f32 %v3224, %v3672
        %v3737 = vmul.f32 %v3225, %v3673
        %v3738 = vmul.f32 %v3226, %v3674
        %v3739 = vmul.f32 %v3227, %v3675
        %v3740 = vmul.f32 %v3228, %v3676
        %v3741 = vmul.f32 %v3229, %v3677
        %v3742 = vmul.f32 %v3230, %v3678
        %v3743 = vmul.f32 %v3231, %v3679
        %v3744 = vmul.f32 %v3232, %v3680
        %v3745 = vld [vmem:[%s5] sm:$0x1]
        %v3746 = vld [vmem:[#allocation2] sm:$0x1]
        %v3747 = vpack.c.bf16 %v3682, %v3681
        %v3748 = vpack.c.bf16 %v3684, %v3683
        %v3749 = vpack.c.bf16 %v3686, %v3685
        %v3750 = vpack.c.bf16 %v3688, %v3687
        %v3751 = vpack.c.bf16 %v3690, %v3689
        %v3752 = vpack.c.bf16 %v3692, %v3691
        %v3753 = vpack.c.bf16 %v3694, %v3693
        %v3754 = vpack.c.bf16 %v3696, %v3695
        %v3755 = vpack.c.bf16 %v3698, %v3697
        %v3756 = vpack.c.bf16 %v3700, %v3699
        %v3757 = vpack.c.bf16 %v3702, %v3701
        %v3758 = vpack.c.bf16 %v3704, %v3703
        %v3759 = vpack.c.bf16 %v3706, %v3705
        %v3760 = vpack.c.bf16 %v3708, %v3707
        %v3761 = vpack.c.bf16 %v3710, %v3709
        %v3762 = vpack.c.bf16 %v3712, %v3711
        %v3763 = vpack.c.bf16 %v3714, %v3713
        %v3764 = vpack.c.bf16 %v3716, %v3715
        %v3765 = vpack.c.bf16 %v3718, %v3717
        %v3766 = vpack.c.bf16 %v3720, %v3719
        %v3767 = vpack.c.bf16 %v3722, %v3721
        %v3768 = vpack.c.bf16 %v3724, %v3723
        %v3769 = vpack.c.bf16 %v3726, %v3725
        %v3770 = vpack.c.bf16 %v3728, %v3727
        %v3771 = vpack.c.bf16 %v3730, %v3729
        %v3772 = vpack.c.bf16 %v3732, %v3731
        %v3773 = vpack.c.bf16 %v3734, %v3733
        %v3774 = vpack.c.bf16 %v3736, %v3735
        %v3775 = vpack.c.bf16 %v3738, %v3737
        %v3776 = vpack.c.bf16 %v3740, %v3739
        %v3777 = vpack.c.bf16 %v3742, %v3741
        %v3778 = vpack.c.bf16 %v3744, %v3743
        %v3779 = vunpack.c.l.bf16 %v3747
        %v3780 = vunpack.c.h.bf16 %v3747
        %v3781 = vunpack.c.l.bf16 %v3748
        %v3782 = vunpack.c.h.bf16 %v3748
        %v3783 = vunpack.c.l.bf16 %v3749
        %v3784 = vunpack.c.h.bf16 %v3749
        %v3785 = vunpack.c.l.bf16 %v3750
        %v3786 = vunpack.c.h.bf16 %v3750
        %v3787 = vunpack.c.l.bf16 %v3751
        %v3788 = vunpack.c.h.bf16 %v3751
        %v3789 = vunpack.c.l.bf16 %v3752
        %v3790 = vunpack.c.h.bf16 %v3752
        %v3791 = vunpack.c.l.bf16 %v3753
        %v3792 = vunpack.c.h.bf16 %v3753
        %v3793 = vunpack.c.l.bf16 %v3754
        %v3794 = vunpack.c.h.bf16 %v3754
        %v3795 = vunpack.c.l.bf16 %v3755
        %v3796 = vunpack.c.h.bf16 %v3755
        %v3797 = vunpack.c.l.bf16 %v3756
        %v3798 = vunpack.c.h.bf16 %v3756
        %v3799 = vunpack.c.l.bf16 %v3757
        %v3800 = vunpack.c.h.bf16 %v3757
        %v3801 = vunpack.c.l.bf16 %v3758
        %v3802 = vunpack.c.h.bf16 %v3758
        %v3803 = vunpack.c.l.bf16 %v3759
        %v3804 = vunpack.c.h.bf16 %v3759
        %v3805 = vunpack.c.l.bf16 %v3760
        %v3806 = vunpack.c.h.bf16 %v3760
        %v3807 = vunpack.c.l.bf16 %v3761
        %v3808 = vunpack.c.h.bf16 %v3761
        %v3809 = vunpack.c.l.bf16 %v3762
        %v3810 = vunpack.c.h.bf16 %v3762
        %v3811 = vunpack.c.l.bf16 %v3763
        %v3812 = vunpack.c.h.bf16 %v3763
        %v3813 = vunpack.c.l.bf16 %v3764
        %v3814 = vunpack.c.h.bf16 %v3764
        %v3815 = vunpack.c.l.bf16 %v3765
        %v3816 = vunpack.c.h.bf16 %v3765
        %v3817 = vunpack.c.l.bf16 %v3766
        %v3818 = vunpack.c.h.bf16 %v3766
        %v3819 = vunpack.c.l.bf16 %v3767
        %v3820 = vunpack.c.h.bf16 %v3767
        %v3821 = vunpack.c.l.bf16 %v3768
        %v3822 = vunpack.c.h.bf16 %v3768
        %v3823 = vunpack.c.l.bf16 %v3769
        %v3824 = vunpack.c.h.bf16 %v3769
        %v3825 = vunpack.c.l.bf16 %v3770
        %v3826 = vunpack.c.h.bf16 %v3770
        %v3827 = vunpack.c.l.bf16 %v3771
        %v3828 = vunpack.c.h.bf16 %v3771
        %v3829 = vunpack.c.l.bf16 %v3772
        %v3830 = vunpack.c.h.bf16 %v3772
        %v3831 = vunpack.c.l.bf16 %v3773
        %v3832 = vunpack.c.h.bf16 %v3773
        %v3833 = vunpack.c.l.bf16 %v3774
        %v3834 = vunpack.c.h.bf16 %v3774
        %v3835 = vunpack.c.l.bf16 %v3775
        %v3836 = vunpack.c.h.bf16 %v3775
        %v3837 = vunpack.c.l.bf16 %v3776
        %v3838 = vunpack.c.h.bf16 %v3776
        %v3839 = vunpack.c.l.bf16 %v3777
        %v3840 = vunpack.c.h.bf16 %v3777
        %v3841 = vunpack.c.l.bf16 %v3778
        %v3842 = vunpack.c.h.bf16 %v3778
        %v3843 = vunpack.c.l.bf16 %v3745
        %3844 = vxpose.xlu0.b32.start [1/16] %v3843, 128
        %3845 = vxpose.xlu0.b32.cont [2/16] 0.0, 128
        %3846 = vxpose.xlu0.b32.cont [3/16] 0.0, 128
        %3847 = vxpose.xlu0.b32.cont [4/16] 0.0, 128
        %3848 = vxpose.xlu0.b32.cont [5/16] 0.0, 128
        %3849 = vxpose.xlu0.b32.cont [6/16] 0.0, 128
        %3850 = vxpose.xlu0.b32.cont [7/16] 0.0, 128
        %3851 = vxpose.xlu0.b32.cont [8/16] 0.0, 128
        %3852 = vxpose.xlu0.b32.cont [9/16] 0.0, 128
        %3853 = vxpose.xlu0.b32.cont [10/16] 0.0, 128
        %3854 = vxpose.xlu0.b32.cont [11/16] 0.0, 128
        %3855 = vxpose.xlu0.b32.cont [12/16] 0.0, 128
        %3856 = vxpose.xlu0.b32.cont [13/16] 0.0, 128
        %3857 = vxpose.xlu0.b32.cont [14/16] 0.0, 128
        %3858 = vxpose.xlu0.b32.cont [15/16] 0.0, 128
        %3859 = vxpose.xlu0.b32.end [16/16] 0.0, 128
        %v3860 = vpop.trf.xlu0
        %v3861 = vpop.trf.xlu0
        %v3862 = vpop.trf.xlu0
        %v3863 = vpop.trf.xlu0
        %v3864 = vpop.trf.xlu0
        %v3865 = vpop.trf.xlu0
        %v3866 = vpop.trf.xlu0
        %v3867 = vpop.trf.xlu0
        %v3868 = vpop.trf.xlu0
        %v3869 = vpop.trf.xlu0
        %v3870 = vpop.trf.xlu0
        %v3871 = vpop.trf.xlu0
        %v3872 = vpop.trf.xlu0
        %v3873 = vpop.trf.xlu0
        %v3874 = vpop.trf.xlu0
        %v3875 = vpop.trf.xlu0
        %3877 = vset.pattern.permute.xlu0 0
        %3878 = vperm.xlu0 %3877, %v3860
        %v3879 = vpop.permute.xlu0 %3878
        %3882 = vset.pattern.permute.xlu0 0
        %3883 = vperm.xlu0 %3882, %v3861
        %v3884 = vpop.permute.xlu0 %3883
        %3887 = vset.pattern.permute.xlu0 0
        %3888 = vperm.xlu0 %3887, %v3862
        %v3889 = vpop.permute.xlu0 %3888
        %3892 = vset.pattern.permute.xlu0 0
        %3893 = vperm.xlu0 %3892, %v3863
        %v3894 = vpop.permute.xlu0 %3893
        %v3896 = vmul.f32 %v3879, %v3779
        %v3897 = vmul.f32 %v3879, %v3780
        %v3898 = vmul.f32 %v3879, %v3781
        %v3899 = vmul.f32 %v3879, %v3782
        %v3900 = vmul.f32 %v3879, %v3783
        %v3901 = vmul.f32 %v3879, %v3784
        %v3902 = vmul.f32 %v3879, %v3785
        %v3903 = vmul.f32 %v3879, %v3786
        %v3904 = vmul.f32 %v3879, %v3787
        %v3905 = vmul.f32 %v3879, %v3788
        %v3906 = vmul.f32 %v3879, %v3789
        %v3907 = vmul.f32 %v3879, %v3790
        %v3908 = vmul.f32 %v3879, %v3791
        %v3909 = vmul.f32 %v3879, %v3792
        %v3910 = vmul.f32 %v3879, %v3793
        %v3911 = vmul.f32 %v3879, %v3794
        %v3912 = vmul.f32 %v3884, %v3795
        %v3913 = vmul.f32 %v3884, %v3796
        %v3914 = vmul.f32 %v3884, %v3797
        %v3915 = vmul.f32 %v3884, %v3798
        %v3916 = vmul.f32 %v3884, %v3799
        %v3917 = vmul.f32 %v3884, %v3800
        %v3918 = vmul.f32 %v3884, %v3801
        %v3919 = vmul.f32 %v3884, %v3802
        %v3920 = vmul.f32 %v3884, %v3803
        %v3921 = vmul.f32 %v3884, %v3804
        %v3922 = vmul.f32 %v3884, %v3805
        %v3923 = vmul.f32 %v3884, %v3806
        %v3924 = vmul.f32 %v3884, %v3807
        %v3925 = vmul.f32 %v3884, %v3808
        %v3926 = vmul.f32 %v3884, %v3809
        %v3927 = vmul.f32 %v3884, %v3810
        %v3928 = vmul.f32 %v3889, %v3811
        %v3929 = vmul.f32 %v3889, %v3812
        %v3930 = vmul.f32 %v3889, %v3813
        %v3931 = vmul.f32 %v3889, %v3814
        %v3932 = vmul.f32 %v3889, %v3815
        %v3933 = vmul.f32 %v3889, %v3816
        %v3934 = vmul.f32 %v3889, %v3817
        %v3935 = vmul.f32 %v3889, %v3818
        %v3936 = vmul.f32 %v3889, %v3819
        %v3937 = vmul.f32 %v3889, %v3820
        %v3938 = vmul.f32 %v3889, %v3821
        %v3939 = vmul.f32 %v3889, %v3822
        %v3940 = vmul.f32 %v3889, %v3823
        %v3941 = vmul.f32 %v3889, %v3824
        %v3942 = vmul.f32 %v3889, %v3825
        %v3943 = vmul.f32 %v3889, %v3826
        %v3944 = vmul.f32 %v3894, %v3827
        %v3945 = vmul.f32 %v3894, %v3828
        %v3946 = vmul.f32 %v3894, %v3829
        %v3947 = vmul.f32 %v3894, %v3830
        %v3948 = vmul.f32 %v3894, %v3831
        %v3949 = vmul.f32 %v3894, %v3832
        %v3950 = vmul.f32 %v3894, %v3833
        %v3951 = vmul.f32 %v3894, %v3834
        %v3952 = vmul.f32 %v3894, %v3835
        %v3953 = vmul.f32 %v3894, %v3836
        %v3954 = vmul.f32 %v3894, %v3837
        %v3955 = vmul.f32 %v3894, %v3838
        %v3956 = vmul.f32 %v3894, %v3839
        %v3957 = vmul.f32 %v3894, %v3840
        %v3958 = vmul.f32 %v3894, %v3841
        %v3959 = vmul.f32 %v3894, %v3842
        %v3960 = vadd.f32 %v3896, %v3912
        %v3961 = vadd.f32 %v3960, %v3928
        %v3962 = vadd.f32 %v3961, %v3944
        %v3963 = vrot.slane %v3962, 4
        %v3964 = vadd.f32 %v3962, %v3963
        %v3965 = vrot.slane %v3964, 2
        %v3966 = vadd.f32 %v3964, %v3965
        %v3967 = vrot.slane %v3966, 1
        %v3968 = vadd.f32 %v3966, %v3967
        %v3969 = vadd.f32 %v3897, %v3913
        %v3970 = vadd.f32 %v3969, %v3929
        %v3971 = vadd.f32 %v3970, %v3945
        %v3972 = vrot.slane %v3971, 4
        %v3973 = vadd.f32 %v3971, %v3972
        %v3974 = vrot.slane %v3973, 2
        %v3975 = vadd.f32 %v3973, %v3974
        %v3976 = vrot.slane %v3975, 1
        %v3977 = vadd.f32 %v3975, %v3976
        %v3978 = vadd.f32 %v3898, %v3914
        %v3979 = vadd.f32 %v3978, %v3930
        %v3980 = vadd.f32 %v3979, %v3946
        %v3981 = vrot.slane %v3980, 4
        %v3982 = vadd.f32 %v3980, %v3981
        %v3983 = vrot.slane %v3982, 2
        %v3984 = vadd.f32 %v3982, %v3983
        %v3985 = vrot.slane %v3984, 1
        %v3986 = vadd.f32 %v3984, %v3985
        %v3987 = vadd.f32 %v3899, %v3915
        %v3988 = vadd.f32 %v3987, %v3931
        %v3989 = vadd.f32 %v3988, %v3947
        %v3990 = vrot.slane %v3989, 4
        %v3991 = vadd.f32 %v3989, %v3990
        %v3992 = vrot.slane %v3991, 2
        %v3993 = vadd.f32 %v3991, %v3992
        %v3994 = vrot.slane %v3993, 1
        %v3995 = vadd.f32 %v3993, %v3994
        %v3996 = vadd.f32 %v3900, %v3916
        %v3997 = vadd.f32 %v3996, %v3932
        %v3998 = vadd.f32 %v3997, %v3948
        %v3999 = vrot.slane %v3998, 4
        %v4000 = vadd.f32 %v3998, %v3999
        %v4001 = vrot.slane %v4000, 2
        %v4002 = vadd.f32 %v4000, %v4001
        %v4003 = vrot.slane %v4002, 1
        %v4004 = vadd.f32 %v4002, %v4003
        %v4005 = vadd.f32 %v3901, %v3917
        %v4006 = vadd.f32 %v4005, %v3933
        %v4007 = vadd.f32 %v4006, %v3949
        %v4008 = vrot.slane %v4007, 4
        %v4009 = vadd.f32 %v4007, %v4008
        %v4010 = vrot.slane %v4009, 2
        %v4011 = vadd.f32 %v4009, %v4010
        %v4012 = vrot.slane %v4011, 1
        %v4013 = vadd.f32 %v4011, %v4012
        %v4014 = vadd.f32 %v3902, %v3918
        %v4015 = vadd.f32 %v4014, %v3934
        %v4016 = vadd.f32 %v4015, %v3950
        %v4017 = vrot.slane %v4016, 4
        %v4018 = vadd.f32 %v4016, %v4017
        %v4019 = vrot.slane %v4018, 2
        %v4020 = vadd.f32 %v4018, %v4019
        %v4021 = vrot.slane %v4020, 1
        %v4022 = vadd.f32 %v4020, %v4021
        %v4023 = vadd.f32 %v3903, %v3919
        %v4024 = vadd.f32 %v4023, %v3935
        %v4025 = vadd.f32 %v4024, %v3951
        %v4026 = vrot.slane %v4025, 4
        %v4027 = vadd.f32 %v4025, %v4026
        %v4028 = vrot.slane %v4027, 2
        %v4029 = vadd.f32 %v4027, %v4028
        %v4030 = vrot.slane %v4029, 1
        %v4031 = vadd.f32 %v4029, %v4030
        %v4032 = vadd.f32 %v3904, %v3920
        %v4033 = vadd.f32 %v4032, %v3936
        %v4034 = vadd.f32 %v4033, %v3952
        %v4035 = vrot.slane %v4034, 4
        %v4036 = vadd.f32 %v4034, %v4035
        %v4037 = vrot.slane %v4036, 2
        %v4038 = vadd.f32 %v4036, %v4037
        %v4039 = vrot.slane %v4038, 1
        %v4040 = vadd.f32 %v4038, %v4039
        %v4041 = vadd.f32 %v3905, %v3921
        %v4042 = vadd.f32 %v4041, %v3937
        %v4043 = vadd.f32 %v4042, %v3953
        %v4044 = vrot.slane %v4043, 4
        %v4045 = vadd.f32 %v4043, %v4044
        %v4046 = vrot.slane %v4045, 2
        %v4047 = vadd.f32 %v4045, %v4046
        %v4048 = vrot.slane %v4047, 1
        %v4049 = vadd.f32 %v4047, %v4048
        %v4050 = vadd.f32 %v3906, %v3922
        %v4051 = vadd.f32 %v4050, %v3938
        %v4052 = vadd.f32 %v4051, %v3954
        %v4053 = vrot.slane %v4052, 4
        %v4054 = vadd.f32 %v4052, %v4053
        %v4055 = vrot.slane %v4054, 2
        %v4056 = vadd.f32 %v4054, %v4055
        %v4057 = vrot.slane %v4056, 1
        %v4058 = vadd.f32 %v4056, %v4057
        %v4059 = vadd.f32 %v3907, %v3923
        %v4060 = vadd.f32 %v4059, %v3939
        %v4061 = vadd.f32 %v4060, %v3955
        %v4062 = vrot.slane %v4061, 4
        %v4063 = vadd.f32 %v4061, %v4062
        %v4064 = vrot.slane %v4063, 2
        %v4065 = vadd.f32 %v4063, %v4064
        %v4066 = vrot.slane %v4065, 1
        %v4067 = vadd.f32 %v4065, %v4066
        %v4068 = vadd.f32 %v3908, %v3924
        %v4069 = vadd.f32 %v4068, %v3940
        %v4070 = vadd.f32 %v4069, %v3956
        %v4071 = vrot.slane %v4070, 4
        %v4072 = vadd.f32 %v4070, %v4071
        %v4073 = vrot.slane %v4072, 2
        %v4074 = vadd.f32 %v4072, %v4073
        %v4075 = vrot.slane %v4074, 1
        %v4076 = vadd.f32 %v4074, %v4075
        %v4077 = vadd.f32 %v3909, %v3925
        %v4078 = vadd.f32 %v4077, %v3941
        %v4079 = vadd.f32 %v4078, %v3957
        %v4080 = vrot.slane %v4079, 4
        %v4081 = vadd.f32 %v4079, %v4080
        %v4082 = vrot.slane %v4081, 2
        %v4083 = vadd.f32 %v4081, %v4082
        %v4084 = vrot.slane %v4083, 1
        %v4085 = vadd.f32 %v4083, %v4084
        %v4086 = vadd.f32 %v3910, %v3926
        %v4087 = vadd.f32 %v4086, %v3942
        %v4088 = vadd.f32 %v4087, %v3958
        %v4089 = vrot.slane %v4088, 4
        %v4090 = vadd.f32 %v4088, %v4089
        %v4091 = vrot.slane %v4090, 2
        %v4092 = vadd.f32 %v4090, %v4091
        %v4093 = vrot.slane %v4092, 1
        %v4094 = vadd.f32 %v4092, %v4093
        %v4095 = vadd.f32 %v3911, %v3927
        %v4096 = vadd.f32 %v4095, %v3943
        %v4097 = vadd.f32 %v4096, %v3959
        %v4098 = vrot.slane %v4097, 4
        %v4099 = vadd.f32 %v4097, %v4098
        %v4100 = vrot.slane %v4099, 2
        %v4101 = vadd.f32 %v4099, %v4100
        %v4102 = vrot.slane %v4101, 1
        %v4103 = vadd.f32 %v4101, %v4102
        %4105 = vset.pattern.permute.xlu0 0
        %4106 = vperm.xlu0 %4105, %v3746
        %v4107 = vpop.permute.xlu0 %4106
        %v4109 = vperm.slane %v4107, 0
        %v4110 = vadd.f32 %v3968, %v4109
        %v4111 = vadd.f32 %v3977, %v4109
        %v4112 = vadd.f32 %v3986, %v4109
        %v4113 = vadd.f32 %v3995, %v4109
        %v4114 = vadd.f32 %v4004, %v4109
        %v4115 = vadd.f32 %v4013, %v4109
        %v4116 = vadd.f32 %v4022, %v4109
        %v4117 = vadd.f32 %v4031, %v4109
        %v4118 = vadd.f32 %v4040, %v4109
        %v4119 = vadd.f32 %v4049, %v4109
        %v4120 = vadd.f32 %v4058, %v4109
        %v4121 = vadd.f32 %v4067, %v4109
        %v4122 = vadd.f32 %v4076, %v4109
        %v4123 = vadd.f32 %v4085, %v4109
        %v4124 = vadd.f32 %v4094, %v4109
        %v4125 = vadd.f32 %v4103, %v4109
        %v4126 = vxor.u32 %v4110, 2147483648
        %v4127 = vxor.u32 %v4111, 2147483648
        %v4128 = vxor.u32 %v4112, 2147483648
        %v4129 = vxor.u32 %v4113, 2147483648
        %v4130 = vxor.u32 %v4114, 2147483648
        %v4131 = vxor.u32 %v4115, 2147483648
        %v4132 = vxor.u32 %v4116, 2147483648
        %v4133 = vxor.u32 %v4117, 2147483648
        %v4134 = vxor.u32 %v4118, 2147483648
        %v4135 = vxor.u32 %v4119, 2147483648
        %v4136 = vxor.u32 %v4120, 2147483648
        %v4137 = vxor.u32 %v4121, 2147483648
        %v4138 = vxor.u32 %v4122, 2147483648
        %v4139 = vxor.u32 %v4123, 2147483648
        %v4140 = vxor.u32 %v4124, 2147483648
        %v4141 = vxor.u32 %v4125, 2147483648
        %v4142 = vmul.f32 %v4126, 1.442695
        %v4143 = vpow.pop %v4142
        %v4144 = vmul.f32 %v4127, 1.442695
        %v4145 = vpow.pop %v4144
        %v4146 = vmul.f32 %v4128, 1.442695
        %v4147 = vpow.pop %v4146
        %v4148 = vmul.f32 %v4129, 1.442695
        %v4149 = vpow.pop %v4148
        %v4150 = vmul.f32 %v4130, 1.442695
        %v4151 = vpow.pop %v4150
        %v4152 = vmul.f32 %v4131, 1.442695
        %v4153 = vpow.pop %v4152
        %v4154 = vmul.f32 %v4132, 1.442695
        %v4155 = vpow.pop %v4154
        %v4156 = vmul.f32 %v4133, 1.442695
        %v4157 = vpow.pop %v4156
        %v4158 = vmul.f32 %v4134, 1.442695
        %v4159 = vpow.pop %v4158
        %v4160 = vmul.f32 %v4135, 1.442695
        %v4161 = vpow.pop %v4160
        %v4162 = vmul.f32 %v4136, 1.442695
        %v4163 = vpow.pop %v4162
        %v4164 = vmul.f32 %v4137, 1.442695
        %v4165 = vpow.pop %v4164
        %v4166 = vmul.f32 %v4138, 1.442695
        %v4167 = vpow.pop %v4166
        %v4168 = vmul.f32 %v4139, 1.442695
        %v4169 = vpow.pop %v4168
        %v4170 = vmul.f32 %v4140, 1.442695
        %v4171 = vpow.pop %v4170
        %v4172 = vmul.f32 %v4141, 1.442695
        %v4173 = vpow.pop %v4172
        %v4174 = vadd.f32 %v4143, 1.0
        %v4175 = vadd.f32 %v4145, 1.0
        %v4176 = vadd.f32 %v4147, 1.0
        %v4177 = vadd.f32 %v4149, 1.0
        %v4178 = vadd.f32 %v4151, 1.0
        %v4179 = vadd.f32 %v4153, 1.0
        %v4180 = vadd.f32 %v4155, 1.0
        %v4181 = vadd.f32 %v4157, 1.0
        %v4182 = vadd.f32 %v4159, 1.0
        %v4183 = vadd.f32 %v4161, 1.0
        %v4184 = vadd.f32 %v4163, 1.0
        %v4185 = vadd.f32 %v4165, 1.0
        %v4186 = vadd.f32 %v4167, 1.0
        %v4187 = vadd.f32 %v4169, 1.0
        %v4188 = vadd.f32 %v4171, 1.0
        %v4189 = vadd.f32 %v4173, 1.0
        %v4190 = vrcp.pop %v4174
        %v4191 = vmul.f32 %v4174, %v4190
        %v4192 = vsub.f32 1.0, %v4191
        %v4193 = vmul.f32 %v4190, %v4192
        %v4194 = vadd.f32 %v4190, %v4193
        %vm4195 = vweird.f32 %v4174
        %vm4196 = vweird.f32 %v4190
        %vm4197 = vmor %vm4195, %vm4196
        %v4198 = vsel %vm4197, %v4190, %v4194
        %v4199 = vand.u32 2147483647, %v4174
        %vm4200 = vcmp.eq.f32.partialorder %v4199, 8.507059e+37
        %v4201 = vand.u32 %v4174, 2147483648
        %v4202 = vor.u32 1.1754944e-38, %v4201
        %v4203 = vsel %vm4200, %v4202, %v4198
        %v4204 = vmul.f32 1.0, %v4203
        %v4205 = vrcp.pop %v4175
        %v4206 = vmul.f32 %v4175, %v4205
        %v4207 = vsub.f32 1.0, %v4206
        %v4208 = vmul.f32 %v4205, %v4207
        %v4209 = vadd.f32 %v4205, %v4208
        %vm4210 = vweird.f32 %v4175
        %vm4211 = vweird.f32 %v4205
        %vm4212 = vmor %vm4210, %vm4211
        %v4213 = vsel %vm4212, %v4205, %v4209
        %v4214 = vand.u32 2147483647, %v4175
        %vm4215 = vcmp.eq.f32.partialorder %v4214, 8.507059e+37
        %v4216 = vand.u32 %v4175, 2147483648
        %v4217 = vor.u32 1.1754944e-38, %v4216
        %v4218 = vsel %vm4215, %v4217, %v4213
        %v4219 = vmul.f32 1.0, %v4218
        %v4220 = vrcp.pop %v4176
        %v4221 = vmul.f32 %v4176, %v4220
        %v4222 = vsub.f32 1.0, %v4221
        %v4223 = vmul.f32 %v4220, %v4222
        %v4224 = vadd.f32 %v4220, %v4223
        %vm4225 = vweird.f32 %v4176
        %vm4226 = vweird.f32 %v4220
        %vm4227 = vmor %vm4225, %vm4226
        %v4228 = vsel %vm4227, %v4220, %v4224
        %v4229 = vand.u32 2147483647, %v4176
        %vm4230 = vcmp.eq.f32.partialorder %v4229, 8.507059e+37
        %v4231 = vand.u32 %v4176, 2147483648
        %v4232 = vor.u32 1.1754944e-38, %v4231
        %v4233 = vsel %vm4230, %v4232, %v4228
        %v4234 = vmul.f32 1.0, %v4233
        %v4235 = vrcp.pop %v4177
        %v4236 = vmul.f32 %v4177, %v4235
        %v4237 = vsub.f32 1.0, %v4236
        %v4238 = vmul.f32 %v4235, %v4237
        %v4239 = vadd.f32 %v4235, %v4238
        %vm4240 = vweird.f32 %v4177
        %vm4241 = vweird.f32 %v4235
        %vm4242 = vmor %vm4240, %vm4241
        %v4243 = vsel %vm4242, %v4235, %v4239
        %v4244 = vand.u32 2147483647, %v4177
        %vm4245 = vcmp.eq.f32.partialorder %v4244, 8.507059e+37
        %v4246 = vand.u32 %v4177, 2147483648
        %v4247 = vor.u32 1.1754944e-38, %v4246
        %v4248 = vsel %vm4245, %v4247, %v4243
        %v4249 = vmul.f32 1.0, %v4248
        %v4250 = vrcp.pop %v4178
        %v4251 = vmul.f32 %v4178, %v4250
        %v4252 = vsub.f32 1.0, %v4251
        %v4253 = vmul.f32 %v4250, %v4252
        %v4254 = vadd.f32 %v4250, %v4253
        %vm4255 = vweird.f32 %v4178
        %vm4256 = vweird.f32 %v4250
        %vm4257 = vmor %vm4255, %vm4256
        %v4258 = vsel %vm4257, %v4250, %v4254
        %v4259 = vand.u32 2147483647, %v4178
        %vm4260 = vcmp.eq.f32.partialorder %v4259, 8.507059e+37
        %v4261 = vand.u32 %v4178, 2147483648
        %v4262 = vor.u32 1.1754944e-38, %v4261
        %v4263 = vsel %vm4260, %v4262, %v4258
        %v4264 = vmul.f32 1.0, %v4263
        %v4265 = vrcp.pop %v4179
        %v4266 = vmul.f32 %v4179, %v4265
        %v4267 = vsub.f32 1.0, %v4266
        %v4268 = vmul.f32 %v4265, %v4267
        %v4269 = vadd.f32 %v4265, %v4268
        %vm4270 = vweird.f32 %v4179
        %vm4271 = vweird.f32 %v4265
        %vm4272 = vmor %vm4270, %vm4271
        %v4273 = vsel %vm4272, %v4265, %v4269
        %v4274 = vand.u32 2147483647, %v4179
        %vm4275 = vcmp.eq.f32.partialorder %v4274, 8.507059e+37
        %v4276 = vand.u32 %v4179, 2147483648
        %v4277 = vor.u32 1.1754944e-38, %v4276
        %v4278 = vsel %vm4275, %v4277, %v4273
        %v4279 = vmul.f32 1.0, %v4278
        %v4280 = vrcp.pop %v4180
        %v4281 = vmul.f32 %v4180, %v4280
        %v4282 = vsub.f32 1.0, %v4281
        %v4283 = vmul.f32 %v4280, %v4282
        %v4284 = vadd.f32 %v4280, %v4283
        %vm4285 = vweird.f32 %v4180
        %vm4286 = vweird.f32 %v4280
        %vm4287 = vmor %vm4285, %vm4286
        %v4288 = vsel %vm4287, %v4280, %v4284
        %v4289 = vand.u32 2147483647, %v4180
        %vm4290 = vcmp.eq.f32.partialorder %v4289, 8.507059e+37
        %v4291 = vand.u32 %v4180, 2147483648
        %v4292 = vor.u32 1.1754944e-38, %v4291
        %v4293 = vsel %vm4290, %v4292, %v4288
        %v4294 = vmul.f32 1.0, %v4293
        %v4295 = vrcp.pop %v4181
        %v4296 = vmul.f32 %v4181, %v4295
        %v4297 = vsub.f32 1.0, %v4296
        %v4298 = vmul.f32 %v4295, %v4297
        %v4299 = vadd.f32 %v4295, %v4298
        %vm4300 = vweird.f32 %v4181
        %vm4301 = vweird.f32 %v4295
        %vm4302 = vmor %vm4300, %vm4301
        %v4303 = vsel %vm4302, %v4295, %v4299
        %v4304 = vand.u32 2147483647, %v4181
        %vm4305 = vcmp.eq.f32.partialorder %v4304, 8.507059e+37
        %v4306 = vand.u32 %v4181, 2147483648
        %v4307 = vor.u32 1.1754944e-38, %v4306
        %v4308 = vsel %vm4305, %v4307, %v4303
        %v4309 = vmul.f32 1.0, %v4308
        %v4310 = vrcp.pop %v4182
        %v4311 = vmul.f32 %v4182, %v4310
        %v4312 = vsub.f32 1.0, %v4311
        %v4313 = vmul.f32 %v4310, %v4312
        %v4314 = vadd.f32 %v4310, %v4313
        %vm4315 = vweird.f32 %v4182
        %vm4316 = vweird.f32 %v4310
        %vm4317 = vmor %vm4315, %vm4316
        %v4318 = vsel %vm4317, %v4310, %v4314
        %v4319 = vand.u32 2147483647, %v4182
        %vm4320 = vcmp.eq.f32.partialorder %v4319, 8.507059e+37
        %v4321 = vand.u32 %v4182, 2147483648
        %v4322 = vor.u32 1.1754944e-38, %v4321
        %v4323 = vsel %vm4320, %v4322, %v4318
        %v4324 = vmul.f32 1.0, %v4323
        %v4325 = vrcp.pop %v4183
        %v4326 = vmul.f32 %v4183, %v4325
        %v4327 = vsub.f32 1.0, %v4326
        %v4328 = vmul.f32 %v4325, %v4327
        %v4329 = vadd.f32 %v4325, %v4328
        %vm4330 = vweird.f32 %v4183
        %vm4331 = vweird.f32 %v4325
        %vm4332 = vmor %vm4330, %vm4331
        %v4333 = vsel %vm4332, %v4325, %v4329
        %v4334 = vand.u32 2147483647, %v4183
        %vm4335 = vcmp.eq.f32.partialorder %v4334, 8.507059e+37
        %v4336 = vand.u32 %v4183, 2147483648
        %v4337 = vor.u32 1.1754944e-38, %v4336
        %v4338 = vsel %vm4335, %v4337, %v4333
        %v4339 = vmul.f32 1.0, %v4338
        %v4340 = vrcp.pop %v4184
        %v4341 = vmul.f32 %v4184, %v4340
        %v4342 = vsub.f32 1.0, %v4341
        %v4343 = vmul.f32 %v4340, %v4342
        %v4344 = vadd.f32 %v4340, %v4343
        %vm4345 = vweird.f32 %v4184
        %vm4346 = vweird.f32 %v4340
        %vm4347 = vmor %vm4345, %vm4346
        %v4348 = vsel %vm4347, %v4340, %v4344
        %v4349 = vand.u32 2147483647, %v4184
        %vm4350 = vcmp.eq.f32.partialorder %v4349, 8.507059e+37
        %v4351 = vand.u32 %v4184, 2147483648
        %v4352 = vor.u32 1.1754944e-38, %v4351
        %v4353 = vsel %vm4350, %v4352, %v4348
        %v4354 = vmul.f32 1.0, %v4353
        %v4355 = vrcp.pop %v4185
        %v4356 = vmul.f32 %v4185, %v4355
        %v4357 = vsub.f32 1.0, %v4356
        %v4358 = vmul.f32 %v4355, %v4357
        %v4359 = vadd.f32 %v4355, %v4358
        %vm4360 = vweird.f32 %v4185
        %vm4361 = vweird.f32 %v4355
        %vm4362 = vmor %vm4360, %vm4361
        %v4363 = vsel %vm4362, %v4355, %v4359
        %v4364 = vand.u32 2147483647, %v4185
        %vm4365 = vcmp.eq.f32.partialorder %v4364, 8.507059e+37
        %v4366 = vand.u32 %v4185, 2147483648
        %v4367 = vor.u32 1.1754944e-38, %v4366
        %v4368 = vsel %vm4365, %v4367, %v4363
        %v4369 = vmul.f32 1.0, %v4368
        %v4370 = vrcp.pop %v4186
        %v4371 = vmul.f32 %v4186, %v4370
        %v4372 = vsub.f32 1.0, %v4371
        %v4373 = vmul.f32 %v4370, %v4372
        %v4374 = vadd.f32 %v4370, %v4373
        %vm4375 = vweird.f32 %v4186
        %vm4376 = vweird.f32 %v4370
        %vm4377 = vmor %vm4375, %vm4376
        %v4378 = vsel %vm4377, %v4370, %v4374
        %v4379 = vand.u32 2147483647, %v4186
        %vm4380 = vcmp.eq.f32.partialorder %v4379, 8.507059e+37
        %v4381 = vand.u32 %v4186, 2147483648
        %v4382 = vor.u32 1.1754944e-38, %v4381
        %v4383 = vsel %vm4380, %v4382, %v4378
        %v4384 = vmul.f32 1.0, %v4383
        %v4385 = vrcp.pop %v4187
        %v4386 = vmul.f32 %v4187, %v4385
        %v4387 = vsub.f32 1.0, %v4386
        %v4388 = vmul.f32 %v4385, %v4387
        %v4389 = vadd.f32 %v4385, %v4388
        %vm4390 = vweird.f32 %v4187
        %vm4391 = vweird.f32 %v4385
        %vm4392 = vmor %vm4390, %vm4391
        %v4393 = vsel %vm4392, %v4385, %v4389
        %v4394 = vand.u32 2147483647, %v4187
        %vm4395 = vcmp.eq.f32.partialorder %v4394, 8.507059e+37
        %v4396 = vand.u32 %v4187, 2147483648
        %v4397 = vor.u32 1.1754944e-38, %v4396
        %v4398 = vsel %vm4395, %v4397, %v4393
        %v4399 = vmul.f32 1.0, %v4398
        %v4400 = vrcp.pop %v4188
        %v4401 = vmul.f32 %v4188, %v4400
        %v4402 = vsub.f32 1.0, %v4401
        %v4403 = vmul.f32 %v4400, %v4402
        %v4404 = vadd.f32 %v4400, %v4403
        %vm4405 = vweird.f32 %v4188
        %vm4406 = vweird.f32 %v4400
        %vm4407 = vmor %vm4405, %vm4406
        %v4408 = vsel %vm4407, %v4400, %v4404
        %v4409 = vand.u32 2147483647, %v4188
        %vm4410 = vcmp.eq.f32.partialorder %v4409, 8.507059e+37
        %v4411 = vand.u32 %v4188, 2147483648
        %v4412 = vor.u32 1.1754944e-38, %v4411
        %v4413 = vsel %vm4410, %v4412, %v4408
        %v4414 = vmul.f32 1.0, %v4413
        %v4415 = vrcp.pop %v4189
        %v4416 = vmul.f32 %v4189, %v4415
        %v4417 = vsub.f32 1.0, %v4416
        %v4418 = vmul.f32 %v4415, %v4417
        %v4419 = vadd.f32 %v4415, %v4418
        %vm4420 = vweird.f32 %v4189
        %vm4421 = vweird.f32 %v4415
        %vm4422 = vmor %vm4420, %vm4421
        %v4423 = vsel %vm4422, %v4415, %v4419
        %v4424 = vand.u32 2147483647, %v4189
        %vm4425 = vcmp.eq.f32.partialorder %v4424, 8.507059e+37
        %v4426 = vand.u32 %v4189, 2147483648
        %v4427 = vor.u32 1.1754944e-38, %v4426
        %v4428 = vsel %vm4425, %v4427, %v4423
        %v4429 = vmul.f32 1.0, %v4428
        %v4446 = vrot.slane %v4219, 7
        %v4447 = vrot.slane %v4234, 6
        %v4448 = vrot.slane %v4249, 5
        %v4449 = vrot.slane %v4264, 4
        %v4450 = vrot.slane %v4279, 3
        %v4451 = vrot.slane %v4294, 2
        %v4452 = vrot.slane %v4309, 1
        %v4453 = vrot.slane %v4339, 7
        %v4454 = vrot.slane %v4354, 6
        %v4455 = vrot.slane %v4369, 5
        %v4456 = vrot.slane %v4384, 4
        %v4457 = vrot.slane %v4399, 3
        %v4458 = vrot.slane %v4414, 2
        %v4459 = vrot.slane %v4429, 1
        %vm4460 = vcmask 1040384
        %v4461 = vsel %vm4460, %v4204, %v4446
        %vm4462 = vcmask 1042434
        %v4463 = vsel %vm4462, %v4447, %v4448
        %vm4464 = vcmask 1041408
        %v4465 = vsel %vm4464, %v4461, %v4463
        %vm4466 = vcmask 1044484
        %v4467 = vsel %vm4466, %v4449, %v4450
        %vm4468 = vcmask 1046534
        %v4469 = vsel %vm4468, %v4451, %v4452
        %vm4470 = vcmask 1045508
        %v4471 = vsel %vm4470, %v4467, %v4469
        %vm4472 = vcmask 1043456
        %v4473 = vsel %vm4472, %v4465, %v4471
        %v4474 = vsel %vm4460, %v4324, %v4453
        %v4475 = vsel %vm4462, %v4454, %v4455
        %v4476 = vsel %vm4464, %v4474, %v4475
        %v4477 = vsel %vm4466, %v4456, %v4457
        %v4478 = vsel %vm4468, %v4458, %v4459
        %v4479 = vsel %vm4470, %v4477, %v4478
        %v4480 = vsel %vm4472, %v4476, %v4479
        %4483 = vst [vmem:[%s274] sm:$0xff] %v4473
        %4484 = vst [vmem:[%s274 + $0x8] sm:$0xff] %v4480
        %s4485 = sand.u32 %s183, 1
        %s4486 = scalar_lea.sflag [#allocation4], %s4485
        %s4487 = sand.u32 %s183, 1
        %s4488 = smul.addr %s4487, 16
        %s4489 = scalar_lea.vmem [#allocation3], %s4488
        // Predicated region
        $region49: #{tpu_custom_call.1} parent=47 // pred_check
          %p4490 = pneg %p193
        $region50: #{tpu_custom_call.1} parent=47 // pred_check_branch
          %4492 = sbr.rel (%p4490) target = $region52
        $region51: #{tpu_custom_call.1} parent=47 // pred_region
          %s4493 = smul.u32 16, %s23
          %4495 = vsyncadd %s4486, 0
          %s4496 = scalar_lea.hbm %s7, %s4493
          %s4498 = sshll.u32 %s4489, 4
          %s4499 = int_to_ptr.vmem [resolvable:$true] %s4498
          %s4500 = sshll.u32 %s4496, 4
          %s4501 = int_to_ptr.hbm [resolvable:$true] %s4500
          %4503 = dma.vmem_to_hbm [thread:$0]  %s4499, 256, %s4501, %s4486
        $region52: #{tpu_custom_call.1} parent=47 // pred_fallthru
          _
      $region48: #{tpu_custom_call.1} parent=5 // pred_fallthru
        _
      %p4504 = scmp.le.s32.totalorder 2, %s18
      // Predicated region
      $region53: #{tpu_custom_call.1} parent=5 // pred_check
        %p4505 = pneg %p4504
      $region54: #{tpu_custom_call.1} parent=5 // pred_check_branch
        %4507 = sbr.rel (%p4505) target = $region56
      $region55: #{tpu_custom_call.1} parent=5 // pred_region
        %s4508 = ssub.s32 %s18, 2
        // Predicated region
        $region57: #{tpu_custom_call.1} parent=55 // pred_check
          %p4509 = pneg %p199
        $region58: #{tpu_custom_call.1} parent=55 // pred_check_branch
          %4511 = sbr.rel (%p4509) target = $region60
        $region59: #{tpu_custom_call.1} parent=55 // pred_region
          %s4512 = sand.u32 %s184, 1
          %s4513 = scalar_lea.sflag [#allocation4], %s4512
          %s4514 = sand.u32 %s184, 1
          %s4515 = smul.addr %s4514, 16
          %s4516 = scalar_lea.vmem [#allocation3], %s4515
          %4518 = dma.done %s4513, 256
        $region60: #{tpu_custom_call.1} parent=55 // pred_fallthru
          _
      $region56: #{tpu_custom_call.1} parent=5 // pred_fallthru
        _
    $region6: #{tpu_custom_call.1} parent=1 // loop_footer
      %s22 = sadd.s32 1, %s18
    $region7: #{tpu_custom_call.1} parent=1 // loop_footer_branch
      %17 = sbr.rel target = $region3
    $region8: #{tpu_custom_call.1} parent=1 // loop_exit
      _
    %4519 = vsyncpa [#allocation4], 1
    %s4520 = scalar_lea.sflag [#allocation4], 1
    %4521 = vsyncpa %s4520, 1

</llo_original>
